<compile_context>
chip_gen: v5e
topology: v5e:2x2
jax: 0.10.0
libtpu: 0.0.40
codegen_flags: <defaults>
</compile_context>

<pallas_src>
import jax
import jax.numpy as jnp
from jax import lax
from jax.experimental import pallas as pl
from jax.experimental.pallas import tpu as pltpu


def crp_kernel(x_ref, w_ref, out_ref, pad_ref):
    # x_ref   : (1, H, W, Cp)      one batch element, channel-padded to Cp lanes
    # w_ref   : (S, Cp, Cp)        stacked 1x1-conv weights, (c_in, c_out)
    # out_ref : (1, H, W, Cp)
    # pad_ref : VMEM scratch (H+4, W+4, Cp) with a -inf halo for the 5x5 pool
    H, W, Cp = out_ref.shape[1], out_ref.shape[2], out_ref.shape[3]
    S = w_ref.shape[0]

    # ---- -inf halo strips only (interior is fully overwritten each stage) ----
    pad_ref[0:2, :, :] = jnp.full((2, W + 4, Cp), -jnp.inf, jnp.float32)
    pad_ref[H + 2:H + 4, :, :] = jnp.full((2, W + 4, Cp), -jnp.inf, jnp.float32)
    pad_ref[:, 0:2, :] = jnp.full((H + 4, 2, Cp), -jnp.inf, jnp.float32)
    pad_ref[:, W + 2:W + 4, :] = jnp.full((H + 4, 2, Cp), -jnp.inf, jnp.float32)

    x0 = x_ref[0]                       # read the identity exactly once
    acc = x0.reshape(H * W, Cp)         # running residual ("x" in the module)
    top = x0

    for i in range(S):                  # n_stages is small & static -> unrolled
        # ---- 5x5 max-pool, stride 1, padding 2 (-inf), separable ----
        pad_ref[2:H + 2, 2:W + 2, :] = top
        cmax = pad_ref[0:H, :, :]                       # max along H window
        for ky in range(1, 5):
            cmax = jnp.maximum(cmax, pad_ref[ky:ky + H, :, :])
        pooled = cmax[:, 0:W, :]                        # max along W window
        for kx in range(1, 5):
            pooled = jnp.maximum(pooled, cmax[:, kx:kx + W, :])

        # ---- 1x1 conv: single lane-dense MXU matmul ----
        top2 = jnp.dot(pooled.reshape(H * W, Cp), w_ref[i],
                       preferred_element_type=jnp.float32)

        acc = acc + top2                # x = top + x
        top = top2.reshape(H, W, Cp)    # next stage pools the conv output

    out_ref[0] = acc.reshape(H, W, Cp)


def crp_block(x_nchw, weights):
    """CRPBlock forward.

    x_nchw  : (N, C, H, W) float32  (PyTorch NCHW convention)
    weights : list of n_stages matrices of shape (C_in, C_out), i.e. the
              PyTorch 1x1 conv weight `w[:, :, 0, 0].T`.
    """
    N, C, H, W = x_nchw.shape
    S = len(weights)
    for w in weights:
        assert w.shape == (C, C), "CRP residual add requires in_planes == out_planes"

    # Lane-dense channel dim (multiple of 128).  For real CRP widths (>=128)
    # this is a no-op.
    Cp = max(128, ((C + 127) // 128) * 128)

    x_nhwc = jnp.transpose(x_nchw, (0, 2, 3, 1)).astype(jnp.float32)
    x_p = jnp.pad(x_nhwc, ((0, 0), (0, 0), (0, 0), (0, Cp - C)))

    w_stack = jnp.zeros((S, Cp, Cp), jnp.float32)
    w_stack = w_stack.at[:, :C, :C].set(
        jnp.stack([w.astype(jnp.float32) for w in weights]))

    out = pl.pallas_call(
        crp_kernel,
        out_shape=jax.ShapeDtypeStruct((N, H, W, Cp), jnp.float32),
        grid_spec=pltpu.PrefetchScalarGridSpec(
            num_scalar_prefetch=0,
            grid=(N,),
            in_specs=[
                pl.BlockSpec((1, H, W, Cp), lambda n: (n, 0, 0, 0)),
                pl.BlockSpec((S, Cp, Cp), lambda n: (0, 0, 0)),
            ],
            out_specs=pl.BlockSpec((1, H, W, Cp), lambda n: (n, 0, 0, 0)),
            scratch_shapes=[pltpu.VMEM((H + 4, W + 4, Cp), jnp.float32)],
        ),
        compiler_params=pltpu.CompilerParams(
            dimension_semantics=("parallel",)),
    )(x_p, w_stack)

    return jnp.transpose(out[..., :C], (0, 3, 1, 2))


def _ref_crp_block(x_nchw, weights):
    """Pure-JAX reference (reduce_window + 1x1 conv) for correctness checking."""
    x = jnp.transpose(x_nchw, (0, 2, 3, 1))
    dn = ("NHWC", "HWIO", "NHWC")
    top = x
    acc = x
    for w in weights:
        top = lax.reduce_window(top, -jnp.inf, lax.max,
                                (1, 5, 5, 1), (1, 1, 1, 1),
                                ((0, 0), (2, 2), (2, 2), (0, 0)))
        top = lax.conv_general_dilated(top, w.reshape(1, 1, *w.shape),
                                       (1, 1), "VALID", dimension_numbers=dn)
        acc = acc + top
    return jnp.transpose(acc, (0, 3, 1, 2))


if __name__ == "__main__":
    key = jax.random.PRNGKey(0)
    N, C, H, W, S = 2, 4, 16, 16, 4   # in_planes == out_planes == 4, n_stages=4

    ks = jax.random.split(key, S + 1)
    x = jax.random.normal(ks[0], (N, C, H, W), jnp.float32)
    weights = [jax.random.normal(ks[i + 1], (C, C), jnp.float32) * 0.1
               for i in range(S)]

    out = crp_block(x, weights)
    out = jax.block_until_ready(out)

    ref = _ref_crp_block(x, weights)
    assert out.shape == (N, C, H, W)
    assert jnp.allclose(out, ref, atol=1e-3, rtol=1e-3), "mismatch vs reference"

    print("KERNEL_OK")
</pallas_src>

<mosaic_0001>
module attributes {stable_mosaic.version = 11 : i64} {
  func.func @crp_kernel(%arg0: i32, %arg1: memref<1x16x16x128xf32, #tpu.memory_space<vmem>>, %arg2: memref<4x128x128xf32, #tpu.memory_space<vmem>>, %arg3: memref<1x16x16x128xf32, #tpu.memory_space<vmem>>, %arg4: memref<20x20x128xf32, #tpu.memory_space<vmem>>) attributes {dimension_semantics = [#tpu.dimension_semantics<parallel>], iteration_bounds = array<i64: 2>, scalar_prefetch = 0 : i64, scratch_operands = 1 : i64, tpu.core_type = #tpu.core_type<tc>, window_params = [{transform_indices = @transform_0, window_bounds = array<i64: 1, 16, 16, 128>}, {pipeline_mode = #tpu.pipeline_mode<synchronous>, transform_indices = @transform_1, window_bounds = array<i64: 4, 128, 128>}, {transform_indices = @transform_2, window_bounds = array<i64: 1, 16, 16, 128>}]} {
    %cst = arith.constant 0xFF800000 : f32
    %0 = vector.broadcast %cst : f32 to vector<2x20x128xf32>
    %c0 = arith.constant 0 : index
    %c0_0 = arith.constant 0 : index
    %c0_1 = arith.constant 0 : index
    %1 = vector.load %arg4[%c0, %c0_0, %c0_1] : memref<20x20x128xf32, #tpu.memory_space<vmem>>, vector<2x20x128xf32>
    tpu.vector_store %arg4[%c0, %c0_0, %c0_1], %0 {strides = array<i32>} : memref<20x20x128xf32, #tpu.memory_space<vmem>>, vector<2x20x128xf32>,
    %cst_2 = arith.constant 0xFF800000 : f32
    %2 = vector.broadcast %cst_2 : f32 to vector<2x20x128xf32>
    %c18 = arith.constant 18 : index
    %c0_3 = arith.constant 0 : index
    %c0_4 = arith.constant 0 : index
    %3 = vector.load %arg4[%c18, %c0_3, %c0_4] : memref<20x20x128xf32, #tpu.memory_space<vmem>>, vector<2x20x128xf32>
    tpu.vector_store %arg4[%c18, %c0_3, %c0_4], %2 {strides = array<i32>} : memref<20x20x128xf32, #tpu.memory_space<vmem>>, vector<2x20x128xf32>,
    %cst_5 = arith.constant 0xFF800000 : f32
    %4 = vector.broadcast %cst_5 : f32 to vector<20x2x128xf32>
    %c0_6 = arith.constant 0 : index
    %c0_7 = arith.constant 0 : index
    %c0_8 = arith.constant 0 : index
    %5 = vector.load %arg4[%c0_6, %c0_7, %c0_8] : memref<20x20x128xf32, #tpu.memory_space<vmem>>, vector<20x2x128xf32>
    tpu.vector_store %arg4[%c0_6, %c0_7, %c0_8], %4 {strides = array<i32>} : memref<20x20x128xf32, #tpu.memory_space<vmem>>, vector<20x2x128xf32>,
    %cst_9 = arith.constant 0xFF800000 : f32
    %6 = vector.broadcast %cst_9 : f32 to vector<20x2x128xf32>
    %c0_10 = arith.constant 0 : index
    %c18_11 = arith.constant 18 : index
    %c0_12 = arith.constant 0 : index
    %7 = vector.load %arg4[%c0_10, %c18_11, %c0_12] : memref<20x20x128xf32, #tpu.memory_space<vmem>>, vector<20x2x128xf32>
    tpu.vector_store %arg4[%c0_10, %c18_11, %c0_12], %6 {strides = array<i32>} : memref<20x20x128xf32, #tpu.memory_space<vmem>>, vector<20x2x128xf32>,
    %c0_13 = arith.constant 0 : index
    %c0_14 = arith.constant 0 : index
    %c0_15 = arith.constant 0 : index
    %c0_16 = arith.constant 0 : index
    %8 = vector.load %arg1[%c0_13, %c0_14, %c0_15, %c0_16] : memref<1x16x16x128xf32, #tpu.memory_space<vmem>>, vector<1x16x16x128xf32>
    %9 = vector.shape_cast %8 : vector<1x16x16x128xf32> to vector<16x16x128xf32>
    %10 = vector.shape_cast %9 : vector<16x16x128xf32> to vector<256x128xf32>
    %c2 = arith.constant 2 : index
    %c2_17 = arith.constant 2 : index
    %c0_18 = arith.constant 0 : index
    %11 = vector.load %arg4[%c2, %c2_17, %c0_18] : memref<20x20x128xf32, #tpu.memory_space<vmem>>, vector<16x16x128xf32>
    tpu.vector_store %arg4[%c2, %c2_17, %c0_18], %9 {strides = array<i32>} : memref<20x20x128xf32, #tpu.memory_space<vmem>>, vector<16x16x128xf32>,
    %c0_19 = arith.constant 0 : index
    %c0_20 = arith.constant 0 : index
    %c0_21 = arith.constant 0 : index
    %12 = vector.load %arg4[%c0_19, %c0_20, %c0_21] : memref<20x20x128xf32, #tpu.memory_space<vmem>>, vector<16x20x128xf32>
    %c1 = arith.constant 1 : index
    %c0_22 = arith.constant 0 : index
    %c0_23 = arith.constant 0 : index
    %13 = vector.load %arg4[%c1, %c0_22, %c0_23] : memref<20x20x128xf32, #tpu.memory_space<vmem>>, vector<16x20x128xf32>
    %14 = arith.maximumf %12, %13 : vector<16x20x128xf32>
    %c2_24 = arith.constant 2 : index
    %c0_25 = arith.constant 0 : index
    %c0_26 = arith.constant 0 : index
    %15 = vector.load %arg4[%c2_24, %c0_25, %c0_26] : memref<20x20x128xf32, #tpu.memory_space<vmem>>, vector<16x20x128xf32>
    %16 = arith.maximumf %14, %15 : vector<16x20x128xf32>
    %c3 = arith.constant 3 : index
    %c0_27 = arith.constant 0 : index
    %c0_28 = arith.constant 0 : index
    %17 = vector.load %arg4[%c3, %c0_27, %c0_28] : memref<20x20x128xf32, #tpu.memory_space<vmem>>, vector<16x20x128xf32>
    %18 = arith.maximumf %16, %17 : vector<16x20x128xf32>
    %c4 = arith.constant 4 : index
    %c0_29 = arith.constant 0 : index
    %c0_30 = arith.constant 0 : index
    %19 = vector.load %arg4[%c4, %c0_29, %c0_30] : memref<20x20x128xf32, #tpu.memory_space<vmem>>, vector<16x20x128xf32>
    %20 = arith.maximumf %18, %19 : vector<16x20x128xf32>
    %21 = vector.extract_strided_slice %20 {offsets = [0, 0, 0], sizes = [16, 16, 128], strides = [1, 1, 1]} : vector<16x20x128xf32> to vector<16x16x128xf32>
    %22 = vector.extract_strided_slice %20 {offsets = [0, 1, 0], sizes = [16, 16, 128], strides = [1, 1, 1]} : vector<16x20x128xf32> to vector<16x16x128xf32>
    %23 = arith.maximumf %21, %22 : vector<16x16x128xf32>
    %24 = vector.extract_strided_slice %20 {offsets = [0, 2, 0], sizes = [16, 16, 128], strides = [1, 1, 1]} : vector<16x20x128xf32> to vector<16x16x128xf32>
    %25 = arith.maximumf %23, %24 : vector<16x16x128xf32>
    %26 = vector.extract_strided_slice %20 {offsets = [0, 3, 0], sizes = [16, 16, 128], strides = [1, 1, 1]} : vector<16x20x128xf32> to vector<16x16x128xf32>
    %27 = arith.maximumf %25, %26 : vector<16x16x128xf32>
    %28 = vector.extract_strided_slice %20 {offsets = [0, 4, 0], sizes = [16, 16, 128], strides = [1, 1, 1]} : vector<16x20x128xf32> to vector<16x16x128xf32>
    %29 = arith.maximumf %27, %28 : vector<16x16x128xf32>
    %30 = vector.shape_cast %29 : vector<16x16x128xf32> to vector<256x128xf32>
    %c0_31 = arith.constant 0 : index
    %c0_32 = arith.constant 0 : index
    %c0_33 = arith.constant 0 : index
    %31 = vector.load %arg2[%c0_31, %c0_32, %c0_33] : memref<4x128x128xf32, #tpu.memory_space<vmem>>, vector<1x128x128xf32>
    %32 = vector.shape_cast %31 : vector<1x128x128xf32> to vector<128x128xf32>
    %cst_34 = arith.constant dense<0.000000e+00> : vector<256x128xf32>
    %33 = tpu.matmul %30, %32, %cst_34 {dimension_numbers = #tpu.dot_dimension_numbers<[1], [0], [0], [1], [0, 0, 1, 1], [], []>} : vector<256x128xf32>, vector<128x128xf32>, vector<256x128xf32> -> vector<256x128xf32>
    %34 = arith.addf %10, %33 : vector<256x128xf32>
    %35 = vector.shape_cast %33 : vector<256x128xf32> to vector<16x16x128xf32>
    %c2_35 = arith.constant 2 : index
    %c2_36 = arith.constant 2 : index
    %c0_37 = arith.constant 0 : index
    %36 = vector.load %arg4[%c2_35, %c2_36, %c0_37] : memref<20x20x128xf32, #tpu.memory_space<vmem>>, vector<16x16x128xf32>
    tpu.vector_store %arg4[%c2_35, %c2_36, %c0_37], %35 {strides = array<i32>} : memref<20x20x128xf32, #tpu.memory_space<vmem>>, vector<16x16x128xf32>,
    %c0_38 = arith.constant 0 : index
    %c0_39 = arith.constant 0 : index
    %c0_40 = arith.constant 0 : index
    %37 = vector.load %arg4[%c0_38, %c0_39, %c0_40] : memref<20x20x128xf32, #tpu.memory_space<vmem>>, vector<16x20x128xf32>
    %c1_41 = arith.constant 1 : index
    %c0_42 = arith.constant 0 : index
    %c0_43 = arith.constant 0 : index
    %38 = vector.load %arg4[%c1_41, %c0_42, %c0_43] : memref<20x20x128xf32, #tpu.memory_space<vmem>>, vector<16x20x128xf32>
    %39 = arith.maximumf %37, %38 : vector<16x20x128xf32>
    %c2_44 = arith.constant 2 : index
    %c0_45 = arith.constant 0 : index
    %c0_46 = arith.constant 0 : index
    %40 = vector.load %arg4[%c2_44, %c0_45, %c0_46] : memref<20x20x128xf32, #tpu.memory_space<vmem>>, vector<16x20x128xf32>
    %41 = arith.maximumf %39, %40 : vector<16x20x128xf32>
    %c3_47 = arith.constant 3 : index
    %c0_48 = arith.constant 0 : index
    %c0_49 = arith.constant 0 : index
    %42 = vector.load %arg4[%c3_47, %c0_48, %c0_49] : memref<20x20x128xf32, #tpu.memory_space<vmem>>, vector<16x20x128xf32>
    %43 = arith.maximumf %41, %42 : vector<16x20x128xf32>
    %c4_50 = arith.constant 4 : index
    %c0_51 = arith.constant 0 : index
    %c0_52 = arith.constant 0 : index
    %44 = vector.load %arg4[%c4_50, %c0_51, %c0_52] : memref<20x20x128xf32, #tpu.memory_space<vmem>>, vector<16x20x128xf32>
    %45 = arith.maximumf %43, %44 : vector<16x20x128xf32>
    %46 = vector.extract_strided_slice %45 {offsets = [0, 0, 0], sizes = [16, 16, 128], strides = [1, 1, 1]} : vector<16x20x128xf32> to vector<16x16x128xf32>
    %47 = vector.extract_strided_slice %45 {offsets = [0, 1, 0], sizes = [16, 16, 128], strides = [1, 1, 1]} : vector<16x20x128xf32> to vector<16x16x128xf32>
    %48 = arith.maximumf %46, %47 : vector<16x16x128xf32>
    %49 = vector.extract_strided_slice %45 {offsets = [0, 2, 0], sizes = [16, 16, 128], strides = [1, 1, 1]} : vector<16x20x128xf32> to vector<16x16x128xf32>
    %50 = arith.maximumf %48, %49 : vector<16x16x128xf32>
    %51 = vector.extract_strided_slice %45 {offsets = [0, 3, 0], sizes = [16, 16, 128], strides = [1, 1, 1]} : vector<16x20x128xf32> to vector<16x16x128xf32>
    %52 = arith.maximumf %50, %51 : vector<16x16x128xf32>
    %53 = vector.extract_strided_slice %45 {offsets = [0, 4, 0], sizes = [16, 16, 128], strides = [1, 1, 1]} : vector<16x20x128xf32> to vector<16x16x128xf32>
    %54 = arith.maximumf %52, %53 : vector<16x16x128xf32>
    %55 = vector.shape_cast %54 : vector<16x16x128xf32> to vector<256x128xf32>
    %c1_53 = arith.constant 1 : index
    %c0_54 = arith.constant 0 : index
    %c0_55 = arith.constant 0 : index
    %56 = vector.load %arg2[%c1_53, %c0_54, %c0_55] : memref<4x128x128xf32, #tpu.memory_space<vmem>>, vector<1x128x128xf32>
    %57 = vector.shape_cast %56 : vector<1x128x128xf32> to vector<128x128xf32>
    %cst_56 = arith.constant dense<0.000000e+00> : vector<256x128xf32>
    %58 = tpu.matmul %55, %57, %cst_56 {dimension_numbers = #tpu.dot_dimension_numbers<[1], [0], [0], [1], [0, 0, 1, 1], [], []>} : vector<256x128xf32>, vector<128x128xf32>, vector<256x128xf32> -> vector<256x128xf32>
    %59 = arith.addf %34, %58 : vector<256x128xf32>
    %60 = vector.shape_cast %58 : vector<256x128xf32> to vector<16x16x128xf32>
    %c2_57 = arith.constant 2 : index
    %c2_58 = arith.constant 2 : index
    %c0_59 = arith.constant 0 : index
    %61 = vector.load %arg4[%c2_57, %c2_58, %c0_59] : memref<20x20x128xf32, #tpu.memory_space<vmem>>, vector<16x16x128xf32>
    tpu.vector_store %arg4[%c2_57, %c2_58, %c0_59], %60 {strides = array<i32>} : memref<20x20x128xf32, #tpu.memory_space<vmem>>, vector<16x16x128xf32>,
    %c0_60 = arith.constant 0 : index
    %c0_61 = arith.constant 0 : index
    %c0_62 = arith.constant 0 : index
    %62 = vector.load %arg4[%c0_60, %c0_61, %c0_62] : memref<20x20x128xf32, #tpu.memory_space<vmem>>, vector<16x20x128xf32>
    %c1_63 = arith.constant 1 : index
    %c0_64 = arith.constant 0 : index
    %c0_65 = arith.constant 0 : index
    %63 = vector.load %arg4[%c1_63, %c0_64, %c0_65] : memref<20x20x128xf32, #tpu.memory_space<vmem>>, vector<16x20x128xf32>
    %64 = arith.maximumf %62, %63 : vector<16x20x128xf32>
    %c2_66 = arith.constant 2 : index
    %c0_67 = arith.constant 0 : index
    %c0_68 = arith.constant 0 : index
    %65 = vector.load %arg4[%c2_66, %c0_67, %c0_68] : memref<20x20x128xf32, #tpu.memory_space<vmem>>, vector<16x20x128xf32>
    %66 = arith.maximumf %64, %65 : vector<16x20x128xf32>
    %c3_69 = arith.constant 3 : index
    %c0_70 = arith.constant 0 : index
    %c0_71 = arith.constant 0 : index
    %67 = vector.load %arg4[%c3_69, %c0_70, %c0_71] : memref<20x20x128xf32, #tpu.memory_space<vmem>>, vector<16x20x128xf32>
    %68 = arith.maximumf %66, %67 : vector<16x20x128xf32>
    %c4_72 = arith.constant 4 : index
    %c0_73 = arith.constant 0 : index
    %c0_74 = arith.constant 0 : index
    %69 = vector.load %arg4[%c4_72, %c0_73, %c0_74] : memref<20x20x128xf32, #tpu.memory_space<vmem>>, vector<16x20x128xf32>
    %70 = arith.maximumf %68, %69 : vector<16x20x128xf32>
    %71 = vector.extract_strided_slice %70 {offsets = [0, 0, 0], sizes = [16, 16, 128], strides = [1, 1, 1]} : vector<16x20x128xf32> to vector<16x16x128xf32>
    %72 = vector.extract_strided_slice %70 {offsets = [0, 1, 0], sizes = [16, 16, 128], strides = [1, 1, 1]} : vector<16x20x128xf32> to vector<16x16x128xf32>
    %73 = arith.maximumf %71, %72 : vector<16x16x128xf32>
    %74 = vector.extract_strided_slice %70 {offsets = [0, 2, 0], sizes = [16, 16, 128], strides = [1, 1, 1]} : vector<16x20x128xf32> to vector<16x16x128xf32>
    %75 = arith.maximumf %73, %74 : vector<16x16x128xf32>
    %76 = vector.extract_strided_slice %70 {offsets = [0, 3, 0], sizes = [16, 16, 128], strides = [1, 1, 1]} : vector<16x20x128xf32> to vector<16x16x128xf32>
    %77 = arith.maximumf %75, %76 : vector<16x16x128xf32>
    %78 = vector.extract_strided_slice %70 {offsets = [0, 4, 0], sizes = [16, 16, 128], strides = [1, 1, 1]} : vector<16x20x128xf32> to vector<16x16x128xf32>
    %79 = arith.maximumf %77, %78 : vector<16x16x128xf32>
    %80 = vector.shape_cast %79 : vector<16x16x128xf32> to vector<256x128xf32>
    %c2_75 = arith.constant 2 : index
    %c0_76 = arith.constant 0 : index
    %c0_77 = arith.constant 0 : index
    %81 = vector.load %arg2[%c2_75, %c0_76, %c0_77] : memref<4x128x128xf32, #tpu.memory_space<vmem>>, vector<1x128x128xf32>
    %82 = vector.shape_cast %81 : vector<1x128x128xf32> to vector<128x128xf32>
    %cst_78 = arith.constant dense<0.000000e+00> : vector<256x128xf32>
    %83 = tpu.matmul %80, %82, %cst_78 {dimension_numbers = #tpu.dot_dimension_numbers<[1], [0], [0], [1], [0, 0, 1, 1], [], []>} : vector<256x128xf32>, vector<128x128xf32>, vector<256x128xf32> -> vector<256x128xf32>
    %84 = arith.addf %59, %83 : vector<256x128xf32>
    %85 = vector.shape_cast %83 : vector<256x128xf32> to vector<16x16x128xf32>
    %c2_79 = arith.constant 2 : index
    %c2_80 = arith.constant 2 : index
    %c0_81 = arith.constant 0 : index
    %86 = vector.load %arg4[%c2_79, %c2_80, %c0_81] : memref<20x20x128xf32, #tpu.memory_space<vmem>>, vector<16x16x128xf32>
    tpu.vector_store %arg4[%c2_79, %c2_80, %c0_81], %85 {strides = array<i32>} : memref<20x20x128xf32, #tpu.memory_space<vmem>>, vector<16x16x128xf32>,
    %c0_82 = arith.constant 0 : index
    %c0_83 = arith.constant 0 : index
    %c0_84 = arith.constant 0 : index
    %87 = vector.load %arg4[%c0_82, %c0_83, %c0_84] : memref<20x20x128xf32, #tpu.memory_space<vmem>>, vector<16x20x128xf32>
    %c1_85 = arith.constant 1 : index
    %c0_86 = arith.constant 0 : index
    %c0_87 = arith.constant 0 : index
    %88 = vector.load %arg4[%c1_85, %c0_86, %c0_87] : memref<20x20x128xf32, #tpu.memory_space<vmem>>, vector<16x20x128xf32>
    %89 = arith.maximumf %87, %88 : vector<16x20x128xf32>
    %c2_88 = arith.constant 2 : index
    %c0_89 = arith.constant 0 : index
    %c0_90 = arith.constant 0 : index
    %90 = vector.load %arg4[%c2_88, %c0_89, %c0_90] : memref<20x20x128xf32, #tpu.memory_space<vmem>>, vector<16x20x128xf32>
    %91 = arith.maximumf %89, %90 : vector<16x20x128xf32>
    %c3_91 = arith.constant 3 : index
    %c0_92 = arith.constant 0 : index
    %c0_93 = arith.constant 0 : index
    %92 = vector.load %arg4[%c3_91, %c0_92, %c0_93] : memref<20x20x128xf32, #tpu.memory_space<vmem>>, vector<16x20x128xf32>
    %93 = arith.maximumf %91, %92 : vector<16x20x128xf32>
    %c4_94 = arith.constant 4 : index
    %c0_95 = arith.constant 0 : index
    %c0_96 = arith.constant 0 : index
    %94 = vector.load %arg4[%c4_94, %c0_95, %c0_96] : memref<20x20x128xf32, #tpu.memory_space<vmem>>, vector<16x20x128xf32>
    %95 = arith.maximumf %93, %94 : vector<16x20x128xf32>
    %96 = vector.extract_strided_slice %95 {offsets = [0, 0, 0], sizes = [16, 16, 128], strides = [1, 1, 1]} : vector<16x20x128xf32> to vector<16x16x128xf32>
    %97 = vector.extract_strided_slice %95 {offsets = [0, 1, 0], sizes = [16, 16, 128], strides = [1, 1, 1]} : vector<16x20x128xf32> to vector<16x16x128xf32>
    %98 = arith.maximumf %96, %97 : vector<16x16x128xf32>
    %99 = vector.extract_strided_slice %95 {offsets = [0, 2, 0], sizes = [16, 16, 128], strides = [1, 1, 1]} : vector<16x20x128xf32> to vector<16x16x128xf32>
    %100 = arith.maximumf %98, %99 : vector<16x16x128xf32>
    %101 = vector.extract_strided_slice %95 {offsets = [0, 3, 0], sizes = [16, 16, 128], strides = [1, 1, 1]} : vector<16x20x128xf32> to vector<16x16x128xf32>
    %102 = arith.maximumf %100, %101 : vector<16x16x128xf32>
    %103 = vector.extract_strided_slice %95 {offsets = [0, 4, 0], sizes = [16, 16, 128], strides = [1, 1, 1]} : vector<16x20x128xf32> to vector<16x16x128xf32>
    %104 = arith.maximumf %102, %103 : vector<16x16x128xf32>
    %105 = vector.shape_cast %104 : vector<16x16x128xf32> to vector<256x128xf32>
    %c3_97 = arith.constant 3 : index
    %c0_98 = arith.constant 0 : index
    %c0_99 = arith.constant 0 : index
    %106 = vector.load %arg2[%c3_97, %c0_98, %c0_99] : memref<4x128x128xf32, #tpu.memory_space<vmem>>, vector<1x128x128xf32>
    %107 = vector.shape_cast %106 : vector<1x128x128xf32> to vector<128x128xf32>
    %cst_100 = arith.constant dense<0.000000e+00> : vector<256x128xf32>
    %108 = tpu.matmul %105, %107, %cst_100 {dimension_numbers = #tpu.dot_dimension_numbers<[1], [0], [0], [1], [0, 0, 1, 1], [], []>} : vector<256x128xf32>, vector<128x128xf32>, vector<256x128xf32> -> vector<256x128xf32>
    %109 = arith.addf %84, %108 : vector<256x128xf32>
    %110 = vector.shape_cast %109 : vector<256x128xf32> to vector<16x16x128xf32>
    %c0_101 = arith.constant 0 : index
    %c0_102 = arith.constant 0 : index
    %c0_103 = arith.constant 0 : index
    %c0_104 = arith.constant 0 : index
    %111 = vector.load %arg3[%c0_101, %c0_102, %c0_103, %c0_104] : memref<1x16x16x128xf32, #tpu.memory_space<vmem>>, vector<1x16x16x128xf32>
    %112 = vector.shape_cast %111 : vector<1x16x16x128xf32> to vector<16x16x128xf32>
    %113 = vector.shape_cast %110 : vector<16x16x128xf32> to vector<1x16x16x128xf32>
    tpu.vector_store %arg3[%c0_101, %c0_102, %c0_103, %c0_104], %113 {strides = array<i32>} : memref<1x16x16x128xf32, #tpu.memory_space<vmem>>, vector<1x16x16x128xf32>,
    return
  }
  func.func @transform_0(%arg0: i32) -> (i32, i32, i32, i32) {
    %c0_i32 = arith.constant 0 : i32
    %c0_i32_0 = arith.constant 0 : i32
    %c0_i32_1 = arith.constant 0 : i32
    %c0_i32_2 = arith.constant 0 : i32
    return %arg0, %c0_i32, %c0_i32_0, %c0_i32_1 : i32, i32, i32, i32
  }
  func.func @transform_1(%arg0: i32) -> (i32, i32, i32) {
    %c0_i32 = arith.constant 0 : i32
    %c0_i32_0 = arith.constant 0 : i32
    %c0_i32_1 = arith.constant 0 : i32
    %c0_i32_2 = arith.constant 0 : i32
    return %c0_i32, %c0_i32_0, %c0_i32_1 : i32, i32, i32
  }
  func.func @transform_2(%arg0: i32) -> (i32, i32, i32, i32) {
    %c0_i32 = arith.constant 0 : i32
    %c0_i32_0 = arith.constant 0 : i32
    %c0_i32_1 = arith.constant 0 : i32
    %c0_i32_2 = arith.constant 0 : i32
    return %arg0, %c0_i32, %c0_i32_0, %c0_i32_1 : i32, i32, i32, i32
  }
}

</mosaic_0001>

<llo_original>
// kernel: tpu_custom_call.1
$region0: #{tpu_custom_call.1}
  #allocation0 [shape = 'u32[]', space=smem, size = 0x4, offset = 0x4, fixed_abs, tag = 'smem constant byte address 0x4 - core index']
  #allocation1 [shape = 'u32[72,128]{1,0:T(1,128)}', space=vmem, size = 0x9000, scoped, tag = 'internal scratch']
  #allocation2 [shape = 'f32[20,20,128]{2,1,0:T(8,128)}', space=vmem, size = 0x3c000, scoped, tag = 'scratch operand']
  %s0 = inlined_call_operand.hbm [shape: f32[2,16,16,128], index: 0, kind: input, shape index: {}]
  %s1 = inlined_call_operand.hbm [shape: f32[4,128,128], index: 1, kind: input, shape index: {}]
  %s2 = inlined_call_operand.hbm [shape: f32[2,16,16,128], index: 2, kind: output, shape index: {}]
  %s3 = sld [smem:[#allocation0]]
  $region49: #{tpu_custom_call.1} parent=0
    _
  %s5 = ssub.s32 1, %s3
  %s6 = scalar_select 0, %s5, %s3
  $region1: #{tpu_custom_call.1} parent=0
    #allocation3 [shape = 'u8[262144]{0}', space=vmem, size = 0x40000, scoped, tag = 'input window, operand 0']
    #allocation4 [shape = 's32[2]{0}', space=sflag, size = 0x8, scoped, tag = 'scoped memory for tpu_custom_call.1']
    #allocation5 [shape = 's32[2]{0}', space=sflag, size = 0x8, scoped, tag = 'scoped memory for tpu_custom_call.1']
    #allocation6 [shape = 'u8[262144]{0}', space=vmem, size = 0x40000, scoped, tag = 'input window, operand 1, single buffered']
    #allocation7 [shape = 's32[1]{0}', space=sflag, size = 0x4, scoped, tag = 'scoped memory for tpu_custom_call.1']
    #allocation8 [shape = 'u8[262144]{0}', space=vmem, size = 0x40000, scoped, tag = 'output window, operand 0']
    %7 = vsyncpa [#allocation4], 0
    %s8 = scalar_lea.sflag [#allocation4], 1
    %9 = vsyncpa %s8, 0
    %10 = vsyncpa [#allocation7], 0
    %11 = vsyncpa [#allocation5], 0
    %s12 = scalar_lea.sflag [#allocation5], 1
    %13 = vsyncpa %s12, 0
    loop: start=0, step=1, limit=4
    $region2: #{tpu_custom_call.1} parent=1 // loop_pre_header
      _
    $region3: #{tpu_custom_call.1} parent=1 // loop_header
      %s15 = sphi 0, %s19
      %p16 = scmp.ge.s32.totalorder %s15, 4
      %s25 = sphi 0, %s27
      %s28 = sphi 0, %s25
      %s29 = sphi 0, %s28
      %s45 = sphi 0, %s29
      %s49 = sphi 0, %s49
      %s51 = sphi 0, %s49
      %s52 = sphi 0, %s51
      %s66 = sphi 0, %s52
      %s72 = sphi 0, %s74
      %s75 = sphi 0, %s72
      %s76 = sphi 0, %s75
      %s92 = sphi 0, %s76
    $region4: #{tpu_custom_call.1} parent=1 // loop_header_branch
      %18 = sbr.rel (%p16) target = $region8
    $region5: #{tpu_custom_call.1} parent=1 // loop_body
      %s20 = ssub.s32 %s15, 1
      %s21 = ssub.s32 %s15, 2
      %s22 = sadd.s32 %s15, 1
      %s23 = ssub.s32 %s15, %s22
      %p24 = scmp.eq.s32.totalorder %s23, 0
      %s26 = sadd.s32 %s25, 1
      %s27 = scalar_select %p24, %s25, %s26
      %p30 = pneg %p24
      %p31 = scmp.eq.s32.totalorder %s15, 1
      %p32 = por %p30, %p31
      %p33 = scmp.ne.s32.totalorder %s25, %s28
      %p34 = scmp.eq.s32.totalorder %s15, 0
      %p35 = por %p33, %p34
      %p36 = scmp.ne.s32.totalorder %s25, %s28
      %p37 = scmp.eq.s32.totalorder %s20, 1
      %p38 = por %p36, %p37
      %p39 = scmp.ne.s32.totalorder %s28, %s29
      %p40 = scmp.eq.s32.totalorder %s20, 0
      %p41 = por %p39, %p40
      %p42 = scmp.ne.s32.totalorder %s28, %s29
      %p43 = scmp.eq.s32.totalorder %s21, 1
      %p44 = por %p42, %p43
      %p46 = scmp.ne.s32.totalorder %s29, %s45
      %p47 = scmp.eq.s32.totalorder %s21, 0
      %p48 = por %p46, %p47
      %s50 = sadd.s32 %s49, 1
      %p53 = scmp.eq.s32.totalorder %s15, 1
      %p54 = scmp.ne.s32.totalorder %s49, %s51
      %p55 = scmp.eq.s32.totalorder %s15, 0
      %p56 = por %p54, %p55
      %p57 = scmp.ne.s32.totalorder %s49, %s51
      %p58 = scmp.eq.s32.totalorder %s20, 1
      %p59 = por %p57, %p58
      %p60 = scmp.ne.s32.totalorder %s51, %s52
      %p61 = scmp.eq.s32.totalorder %s20, 0
      %p62 = por %p60, %p61
      %p63 = scmp.ne.s32.totalorder %s51, %s52
      %p64 = scmp.eq.s32.totalorder %s21, 1
      %p65 = por %p63, %p64
      %p67 = scmp.ne.s32.totalorder %s52, %s66
      %p68 = scmp.eq.s32.totalorder %s21, 0
      %p69 = por %p67, %p68
      %s70 = ssub.s32 %s15, %s22
      %p71 = scmp.eq.s32.totalorder %s70, 0
      %s73 = sadd.s32 %s72, 1
      %s74 = scalar_select %p71, %s72, %s73
      %p77 = pneg %p71
      %p78 = scmp.eq.s32.totalorder %s15, 1
      %p79 = por %p77, %p78
      %p80 = scmp.ne.s32.totalorder %s72, %s75
      %p81 = scmp.eq.s32.totalorder %s15, 0
      %p82 = por %p80, %p81
      %p83 = scmp.ne.s32.totalorder %s72, %s75
      %p84 = scmp.eq.s32.totalorder %s20, 1
      %p85 = por %p83, %p84
      %p86 = scmp.ne.s32.totalorder %s75, %s76
      %p87 = scmp.eq.s32.totalorder %s20, 0
      %p88 = por %p86, %p87
      %p89 = scmp.ne.s32.totalorder %s75, %s76
      %p90 = scmp.eq.s32.totalorder %s21, 1
      %p91 = por %p89, %p90
      %p93 = scmp.ne.s32.totalorder %s76, %s92
      %p94 = scmp.eq.s32.totalorder %s21, 0
      %p95 = por %p93, %p94
      %p96 = scmp.le.s32.totalorder 1, %s15
      %p97 = scmp.lt.s32.totalorder %s15, 3
      %p98 = pnand %p96, %p97
      %p99 = pneg %p98
      // Predicated region
      $region9: #{tpu_custom_call.1} parent=5 // pred_check
        _
      $region10: #{tpu_custom_call.1} parent=5 // pred_check_branch
        %101 = sbr.rel (%p98) target = $region12
      $region11: #{tpu_custom_call.1} parent=5 // pred_region
        %s102 = ssub.s32 %s15, 1
        // Predicated region
        $region13: #{tpu_custom_call.1} parent=11 // pred_check
          %p103 = pneg %p62
        $region14: #{tpu_custom_call.1} parent=11 // pred_check_branch
          %105 = sbr.rel (%p103) target = $region16
        $region15: #{tpu_custom_call.1} parent=11 // pred_region
          %107 = vsyncadd [#allocation7], 0
          %s108 = sshll.u32 %s1, 4
          %s109 = int_to_ptr.hbm [resolvable:$true] %s108
          %s110 = sshll.u32 [#allocation6], 4
          %s111 = int_to_ptr.vmem [resolvable:$true] %s110
          %116 = dma.hbm_to_vmem [thread:$0]  %s109, 8192, %s111, [#allocation7], 128, 128, 8
        $region16: #{tpu_custom_call.1} parent=11 // pred_fallthru
          _
      $region12: #{tpu_custom_call.1} parent=5 // pred_fallthru
        _
      %p117 = scmp.lt.s32.totalorder %s15, 2
      // Predicated region
      $region17: #{tpu_custom_call.1} parent=5 // pred_check
        %p118 = pneg %p117
      $region18: #{tpu_custom_call.1} parent=5 // pred_check_branch
        %120 = sbr.rel (%p118) target = $region20
      $region19: #{tpu_custom_call.1} parent=5 // pred_region
        // Predicated region
        $region21: #{tpu_custom_call.1} parent=19 // pred_check
          %p121 = pneg %p35
        $region22: #{tpu_custom_call.1} parent=19 // pred_check_branch
          %123 = sbr.rel (%p121) target = $region24
        $region23: #{tpu_custom_call.1} parent=19 // pred_region
          %s124 = sand.u32 %s25, 1
          %s125 = scalar_lea.sflag [#allocation4], %s124
          %s126 = sand.u32 %s25, 1
          %s127 = smul.addr %s126, 256
          %s128 = scalar_lea.vmem [#allocation3], %s127
          %130 = vsyncadd %s125, 0
          %s131 = smul.addr %s15, 32
          %s132 = smul.addr %s131, 8
          %s133 = scalar_lea.hbm %s0, %s132
          %s134 = sshll.u32 %s133, 4
          %s135 = int_to_ptr.hbm [resolvable:$true] %s134
          %s136 = sshll.u32 %s128, 4
          %s137 = int_to_ptr.vmem [resolvable:$true] %s136
          %142 = dma.hbm_to_vmem [thread:$0]  %s135, 4096, %s137, %s125, 128, 128, 8
        $region24: #{tpu_custom_call.1} parent=19 // pred_fallthru
          _
      $region20: #{tpu_custom_call.1} parent=5 // pred_fallthru
        _
      %p143 = scmp.le.s32.totalorder 1, %s15
      %p144 = scmp.lt.s32.totalorder %s15, 3
      %p145 = pnand %p143, %p144
      %p146 = pneg %p145
      // Predicated region
      $region25: #{tpu_custom_call.1} parent=5 // pred_check
        _
      $region26: #{tpu_custom_call.1} parent=5 // pred_check_branch
        %148 = sbr.rel (%p145) target = $region28
      $region27: #{tpu_custom_call.1} parent=5 // pred_region
        %s149 = ssub.s32 %s15, 1
        %s150 = sand.u32 %s28, 1
        %s151 = scalar_lea.sflag [#allocation4], %s150
        %s152 = sand.u32 %s28, 1
        %s153 = smul.addr %s152, 256
        %s154 = scalar_lea.vmem [#allocation3], %s153
        // Predicated region
        $region29: #{tpu_custom_call.1} parent=27 // pred_check
          %p155 = pneg %p41
        $region30: #{tpu_custom_call.1} parent=27 // pred_check_branch
          %157 = sbr.rel (%p155) target = $region32
        $region31: #{tpu_custom_call.1} parent=27 // pred_region
          %159 = dma.done %s151, 4096
        $region32: #{tpu_custom_call.1} parent=27 // pred_fallthru
          _
        // Predicated region
        $region33: #{tpu_custom_call.1} parent=27 // pred_check
          %p160 = pneg %p62
        $region34: #{tpu_custom_call.1} parent=27 // pred_check_branch
          %162 = sbr.rel (%p160) target = $region36
        $region35: #{tpu_custom_call.1} parent=27 // pred_region
          %164 = dma.done [#allocation7], 8192
        $region36: #{tpu_custom_call.1} parent=27 // pred_fallthru
          _
        %s165 = sand.u32 %s28, 1
        %s166 = scalar_lea.sflag [#allocation4], %s165
        %s167 = sand.u32 %s28, 1
        %s168 = smul.addr %s167, 256
        %s169 = scalar_lea.vmem [#allocation3], %s168
        %p170 = pneg %p41
        %p171 = pneg %p38
        %p172 = pneg %p62
        %p173 = pneg %p59
        %p174 = pneg %p88
        %p175 = pneg %p85
        %s176 = sand.u32 %s75, 1
        %s177 = scalar_lea.sflag [#allocation5], %s176
        %s178 = sand.u32 %s75, 1
        %s179 = smul.addr %s178, 256
        %s180 = scalar_lea.vmem [#allocation8], %s179
        %181 = vst [vmem:[#allocation2] sm:$0xff] -inf
        %182 = vst [vmem:[#allocation2 + $0x8] sm:$0xff] -inf
        %183 = vst [vmem:[#allocation2 + $0x10] sm:$0xf] -inf
        %184 = vst [vmem:[#allocation2 + $0x18] sm:$0xff] -inf
        %185 = vst [vmem:[#allocation2 + $0x20] sm:$0xff] -inf
        %186 = vst [vmem:[#allocation2 + $0x28] sm:$0xf] -inf
        %s187 = scalar_lea.vmem [#allocation2], 432
        %188 = vst [vmem:[%s187] sm:$0xff] -inf
        %189 = vst [vmem:[%s187 + $0x8] sm:$0xff] -inf
        %190 = vst [vmem:[%s187 + $0x10] sm:$0xf] -inf
        %191 = vst [vmem:[%s187 + $0x18] sm:$0xff] -inf
        %192 = vst [vmem:[%s187 + $0x20] sm:$0xff] -inf
        %193 = vst [vmem:[%s187 + $0x28] sm:$0xf] -inf
        %194 = vst [vmem:[#allocation2] sm:$0x3] -inf
        %195 = vst [vmem:[#allocation2 + $0x18] sm:$0x3] -inf
        %196 = vst [vmem:[#allocation2 + $0x30] sm:$0x3] -inf
        %197 = vst [vmem:[#allocation2 + $0x48] sm:$0x3] -inf
        %198 = vst [vmem:[#allocation2 + $0x60] sm:$0x3] -inf
        %199 = vst [vmem:[#allocation2 + $0x78] sm:$0x3] -inf
        %200 = vst [vmem:[#allocation2 + $0x90] sm:$0x3] -inf
        %201 = vst [vmem:[#allocation2 + $0xa8] sm:$0x3] -inf
        %202 = vst [vmem:[#allocation2 + $0xc0] sm:$0x3] -inf
        %203 = vst [vmem:[#allocation2 + $0xd8] sm:$0x3] -inf
        %204 = vst [vmem:[#allocation2 + $0xf0] sm:$0x3] -inf
        %205 = vst [vmem:[#allocation2 + $0x108] sm:$0x3] -inf
        %206 = vst [vmem:[#allocation2 + $0x120] sm:$0x3] -inf
        %207 = vst [vmem:[#allocation2 + $0x138] sm:$0x3] -inf
        %208 = vst [vmem:[#allocation2 + $0x150] sm:$0x3] -inf
        %209 = vst [vmem:[#allocation2 + $0x168] sm:$0x3] -inf
        %210 = vst [vmem:[#allocation2 + $0x180] sm:$0x3] -inf
        %211 = vst [vmem:[#allocation2 + $0x198] sm:$0x3] -inf
        %212 = vst [vmem:[#allocation2 + $0x1b0] sm:$0x3] -inf
        %213 = vst [vmem:[#allocation2 + $0x1c8] sm:$0x3] -inf
        %214 = vst [vmem:[#allocation2 + $0x12] sm:$0x3] -inf
        %215 = vst [vmem:[#allocation2 + $0x2a] sm:$0x3] -inf
        %216 = vst [vmem:[#allocation2 + $0x42] sm:$0x3] -inf
        %217 = vst [vmem:[#allocation2 + $0x5a] sm:$0x3] -inf
        %218 = vst [vmem:[#allocation2 + $0x72] sm:$0x3] -inf
        %219 = vst [vmem:[#allocation2 + $0x8a] sm:$0x3] -inf
        %220 = vst [vmem:[#allocation2 + $0xa2] sm:$0x3] -inf
        %221 = vst [vmem:[#allocation2 + $0xba] sm:$0x3] -inf
        %222 = vst [vmem:[#allocation2 + $0xd2] sm:$0x3] -inf
        %223 = vst [vmem:[#allocation2 + $0xea] sm:$0x3] -inf
        %224 = vst [vmem:[#allocation2 + $0x102] sm:$0x3] -inf
        %225 = vst [vmem:[#allocation2 + $0x11a] sm:$0x3] -inf
        %226 = vst [vmem:[#allocation2 + $0x132] sm:$0x3] -inf
        %227 = vst [vmem:[#allocation2 + $0x14a] sm:$0x3] -inf
        %228 = vst [vmem:[#allocation2 + $0x162] sm:$0x3] -inf
        %229 = vst [vmem:[#allocation2 + $0x17a] sm:$0x3] -inf
        %230 = vst [vmem:[#allocation2 + $0x192] sm:$0x3] -inf
        %231 = vst [vmem:[#allocation2 + $0x1aa] sm:$0x3] -inf
        %232 = vst [vmem:[#allocation2 + $0x1c2] sm:$0x3] -inf
        %233 = vst [vmem:[#allocation2 + $0x1da] sm:$0x3] -inf
        %v234 = vld [vmem:[%s154] sm:$0xff]
        %v235 = vld [vmem:[%s154 + $0x8] sm:$0xff]
        %v236 = vld [vmem:[%s154 + $0x10] sm:$0xff]
        %v237 = vld [vmem:[%s154 + $0x18] sm:$0xff]
        %v238 = vld [vmem:[%s154 + $0x20] sm:$0xff]
        %v239 = vld [vmem:[%s154 + $0x28] sm:$0xff]
        %v240 = vld [vmem:[%s154 + $0x30] sm:$0xff]
        %v241 = vld [vmem:[%s154 + $0x38] sm:$0xff]
        %v242 = vld [vmem:[%s154 + $0x40] sm:$0xff]
        %v243 = vld [vmem:[%s154 + $0x48] sm:$0xff]
        %v244 = vld [vmem:[%s154 + $0x50] sm:$0xff]
        %v245 = vld [vmem:[%s154 + $0x58] sm:$0xff]
        %v246 = vld [vmem:[%s154 + $0x60] sm:$0xff]
        %v247 = vld [vmem:[%s154 + $0x68] sm:$0xff]
        %v248 = vld [vmem:[%s154 + $0x70] sm:$0xff]
        %v249 = vld [vmem:[%s154 + $0x78] sm:$0xff]
        %v250 = vld [vmem:[%s154 + $0x80] sm:$0xff]
        %v251 = vld [vmem:[%s154 + $0x88] sm:$0xff]
        %v252 = vld [vmem:[%s154 + $0x90] sm:$0xff]
        %v253 = vld [vmem:[%s154 + $0x98] sm:$0xff]
        %v254 = vld [vmem:[%s154 + $0xa0] sm:$0xff]
        %v255 = vld [vmem:[%s154 + $0xa8] sm:$0xff]
        %v256 = vld [vmem:[%s154 + $0xb0] sm:$0xff]
        %v257 = vld [vmem:[%s154 + $0xb8] sm:$0xff]
        %v258 = vld [vmem:[%s154 + $0xc0] sm:$0xff]
        %v259 = vld [vmem:[%s154 + $0xc8] sm:$0xff]
        %v260 = vld [vmem:[%s154 + $0xd0] sm:$0xff]
        %v261 = vld [vmem:[%s154 + $0xd8] sm:$0xff]
        %v262 = vld [vmem:[%s154 + $0xe0] sm:$0xff]
        %v263 = vld [vmem:[%s154 + $0xe8] sm:$0xff]
        %v264 = vld [vmem:[%s154 + $0xf0] sm:$0xff]
        %v265 = vld [vmem:[%s154 + $0xf8] sm:$0xff]
        %s266 = scalar_lea.vmem [#allocation2], 48
        %267 = vst [vmem:[%s266 + $0x2] sm:$0xff] %v234
        %268 = vst [vmem:[%s266 + $0xa] sm:$0xff] %v235
        %269 = vst [vmem:[%s266 + $0x1a] sm:$0xff] %v236
        %270 = vst [vmem:[%s266 + $0x22] sm:$0xff] %v237
        %271 = vst [vmem:[%s266 + $0x32] sm:$0xff] %v238
        %272 = vst [vmem:[%s266 + $0x3a] sm:$0xff] %v239
        %273 = vst [vmem:[%s266 + $0x4a] sm:$0xff] %v240
        %274 = vst [vmem:[%s266 + $0x52] sm:$0xff] %v241
        %275 = vst [vmem:[%s266 + $0x62] sm:$0xff] %v242
        %276 = vst [vmem:[%s266 + $0x6a] sm:$0xff] %v243
        %277 = vst [vmem:[%s266 + $0x7a] sm:$0xff] %v244
        %278 = vst [vmem:[%s266 + $0x82] sm:$0xff] %v245
        %279 = vst [vmem:[%s266 + $0x92] sm:$0xff] %v246
        %280 = vst [vmem:[%s266 + $0x9a] sm:$0xff] %v247
        %281 = vst [vmem:[%s266 + $0xaa] sm:$0xff] %v248
        %282 = vst [vmem:[%s266 + $0xb2] sm:$0xff] %v249
        %283 = vst [vmem:[%s266 + $0xc2] sm:$0xff] %v250
        %284 = vst [vmem:[%s266 + $0xca] sm:$0xff] %v251
        %285 = vst [vmem:[%s266 + $0xda] sm:$0xff] %v252
        %286 = vst [vmem:[%s266 + $0xe2] sm:$0xff] %v253
        %287 = vst [vmem:[%s266 + $0xf2] sm:$0xff] %v254
        %288 = vst [vmem:[%s266 + $0xfa] sm:$0xff] %v255
        %289 = vst [vmem:[%s266 + $0x10a] sm:$0xff] %v256
        %290 = vst [vmem:[%s266 + $0x112] sm:$0xff] %v257
        %291 = vst [vmem:[%s266 + $0x122] sm:$0xff] %v258
        %292 = vst [vmem:[%s266 + $0x12a] sm:$0xff] %v259
        %293 = vst [vmem:[%s266 + $0x13a] sm:$0xff] %v260
        %294 = vst [vmem:[%s266 + $0x142] sm:$0xff] %v261
        %295 = vst [vmem:[%s266 + $0x152] sm:$0xff] %v262
        %296 = vst [vmem:[%s266 + $0x15a] sm:$0xff] %v263
        %297 = vst [vmem:[%s266 + $0x16a] sm:$0xff] %v264
        %298 = vst [vmem:[%s266 + $0x172] sm:$0xff] %v265
        %v299 = vld [vmem:[#allocation2] sm:$0xff]
        %v300 = vld [vmem:[#allocation2 + $0x8] sm:$0xff]
        %v301 = vld [vmem:[#allocation2 + $0x10] sm:$0xf]
        %v302 = vld [vmem:[#allocation2 + $0x18] sm:$0xff]
        %v303 = vld [vmem:[#allocation2 + $0x20] sm:$0xff]
        %v304 = vld [vmem:[#allocation2 + $0x28] sm:$0xf]
        %v305 = vld [vmem:[#allocation2 + $0x30] sm:$0xff]
        %v306 = vld [vmem:[#allocation2 + $0x38] sm:$0xff]
        %v307 = vld [vmem:[#allocation2 + $0x40] sm:$0xf]
        %v308 = vld [vmem:[#allocation2 + $0x48] sm:$0xff]
        %v309 = vld [vmem:[#allocation2 + $0x50] sm:$0xff]
        %v310 = vld [vmem:[#allocation2 + $0x58] sm:$0xf]
        %v311 = vld [vmem:[#allocation2 + $0x60] sm:$0xff]
        %v312 = vld [vmem:[#allocation2 + $0x68] sm:$0xff]
        %v313 = vld [vmem:[#allocation2 + $0x70] sm:$0xf]
        %v314 = vld [vmem:[#allocation2 + $0x78] sm:$0xff]
        %v315 = vld [vmem:[#allocation2 + $0x80] sm:$0xff]
        %v316 = vld [vmem:[#allocation2 + $0x88] sm:$0xf]
        %v317 = vld [vmem:[#allocation2 + $0x90] sm:$0xff]
        %v318 = vld [vmem:[#allocation2 + $0x98] sm:$0xff]
        %v319 = vld [vmem:[#allocation2 + $0xa0] sm:$0xf]
        %v320 = vld [vmem:[#allocation2 + $0xa8] sm:$0xff]
        %v321 = vld [vmem:[#allocation2 + $0xb0] sm:$0xff]
        %v322 = vld [vmem:[#allocation2 + $0xb8] sm:$0xf]
        %v323 = vld [vmem:[#allocation2 + $0xc0] sm:$0xff]
        %v324 = vld [vmem:[#allocation2 + $0xc8] sm:$0xff]
        %v325 = vld [vmem:[#allocation2 + $0xd0] sm:$0xf]
        %v326 = vld [vmem:[#allocation2 + $0xd8] sm:$0xff]
        %v327 = vld [vmem:[#allocation2 + $0xe0] sm:$0xff]
        %v328 = vld [vmem:[#allocation2 + $0xe8] sm:$0xf]
        %v329 = vld [vmem:[#allocation2 + $0xf0] sm:$0xff]
        %v330 = vld [vmem:[#allocation2 + $0xf8] sm:$0xff]
        %v331 = vld [vmem:[#allocation2 + $0x100] sm:$0xf]
        %v332 = vld [vmem:[#allocation2 + $0x108] sm:$0xff]
        %v333 = vld [vmem:[#allocation2 + $0x110] sm:$0xff]
        %v334 = vld [vmem:[#allocation2 + $0x118] sm:$0xf]
        %v335 = vld [vmem:[#allocation2 + $0x120] sm:$0xff]
        %v336 = vld [vmem:[#allocation2 + $0x128] sm:$0xff]
        %v337 = vld [vmem:[#allocation2 + $0x130] sm:$0xf]
        %v338 = vld [vmem:[#allocation2 + $0x138] sm:$0xff]
        %v339 = vld [vmem:[#allocation2 + $0x140] sm:$0xff]
        %v340 = vld [vmem:[#allocation2 + $0x148] sm:$0xf]
        %v341 = vld [vmem:[#allocation2 + $0x150] sm:$0xff]
        %v342 = vld [vmem:[#allocation2 + $0x158] sm:$0xff]
        %v343 = vld [vmem:[#allocation2 + $0x160] sm:$0xf]
        %v344 = vld [vmem:[#allocation2 + $0x168] sm:$0xff]
        %v345 = vld [vmem:[#allocation2 + $0x170] sm:$0xff]
        %v346 = vld [vmem:[#allocation2 + $0x178] sm:$0xf]
        %s347 = scalar_lea.vmem [#allocation2], 24
        %v348 = vld [vmem:[%s347] sm:$0xff]
        %v349 = vld [vmem:[%s347 + $0x8] sm:$0xff]
        %v350 = vld [vmem:[%s347 + $0x10] sm:$0xf]
        %v351 = vld [vmem:[%s347 + $0x18] sm:$0xff]
        %v352 = vld [vmem:[%s347 + $0x20] sm:$0xff]
        %v353 = vld [vmem:[%s347 + $0x28] sm:$0xf]
        %v354 = vld [vmem:[%s347 + $0x30] sm:$0xff]
        %v355 = vld [vmem:[%s347 + $0x38] sm:$0xff]
        %v356 = vld [vmem:[%s347 + $0x40] sm:$0xf]
        %v357 = vld [vmem:[%s347 + $0x48] sm:$0xff]
        %v358 = vld [vmem:[%s347 + $0x50] sm:$0xff]
        %v359 = vld [vmem:[%s347 + $0x58] sm:$0xf]
        %v360 = vld [vmem:[%s347 + $0x60] sm:$0xff]
        %v361 = vld [vmem:[%s347 + $0x68] sm:$0xff]
        %v362 = vld [vmem:[%s347 + $0x70] sm:$0xf]
        %v363 = vld [vmem:[%s347 + $0x78] sm:$0xff]
        %v364 = vld [vmem:[%s347 + $0x80] sm:$0xff]
        %v365 = vld [vmem:[%s347 + $0x88] sm:$0xf]
        %v366 = vld [vmem:[%s347 + $0x90] sm:$0xff]
        %v367 = vld [vmem:[%s347 + $0x98] sm:$0xff]
        %v368 = vld [vmem:[%s347 + $0xa0] sm:$0xf]
        %v369 = vld [vmem:[%s347 + $0xa8] sm:$0xff]
        %v370 = vld [vmem:[%s347 + $0xb0] sm:$0xff]
        %v371 = vld [vmem:[%s347 + $0xb8] sm:$0xf]
        %v372 = vld [vmem:[%s347 + $0xc0] sm:$0xff]
        %v373 = vld [vmem:[%s347 + $0xc8] sm:$0xff]
        %v374 = vld [vmem:[%s347 + $0xd0] sm:$0xf]
        %v375 = vld [vmem:[%s347 + $0xd8] sm:$0xff]
        %v376 = vld [vmem:[%s347 + $0xe0] sm:$0xff]
        %v377 = vld [vmem:[%s347 + $0xe8] sm:$0xf]
        %v378 = vld [vmem:[%s347 + $0xf0] sm:$0xff]
        %v379 = vld [vmem:[%s347 + $0xf8] sm:$0xff]
        %v380 = vld [vmem:[%s347 + $0x100] sm:$0xf]
        %v381 = vld [vmem:[%s347 + $0x108] sm:$0xff]
        %v382 = vld [vmem:[%s347 + $0x110] sm:$0xff]
        %v383 = vld [vmem:[%s347 + $0x118] sm:$0xf]
        %v384 = vld [vmem:[%s347 + $0x120] sm:$0xff]
        %v385 = vld [vmem:[%s347 + $0x128] sm:$0xff]
        %v386 = vld [vmem:[%s347 + $0x130] sm:$0xf]
        %v387 = vld [vmem:[%s347 + $0x138] sm:$0xff]
        %v388 = vld [vmem:[%s347 + $0x140] sm:$0xff]
        %v389 = vld [vmem:[%s347 + $0x148] sm:$0xf]
        %v390 = vld [vmem:[%s347 + $0x150] sm:$0xff]
        %v391 = vld [vmem:[%s347 + $0x158] sm:$0xff]
        %v392 = vld [vmem:[%s347 + $0x160] sm:$0xf]
        %v393 = vld [vmem:[%s347 + $0x168] sm:$0xff]
        %v394 = vld [vmem:[%s347 + $0x170] sm:$0xff]
        %v395 = vld [vmem:[%s347 + $0x178] sm:$0xf]
        %v396 = vmax.f32 %v299, %v348
        %v397 = vmax.f32 %v300, %v349
        %v398 = vmax.f32 %v301, %v350
        %v399 = vmax.f32 %v302, %v351
        %v400 = vmax.f32 %v303, %v352
        %v401 = vmax.f32 %v304, %v353
        %v402 = vmax.f32 %v305, %v354
        %v403 = vmax.f32 %v306, %v355
        %v404 = vmax.f32 %v307, %v356
        %v405 = vmax.f32 %v308, %v357
        %v406 = vmax.f32 %v309, %v358
        %v407 = vmax.f32 %v310, %v359
        %v408 = vmax.f32 %v311, %v360
        %v409 = vmax.f32 %v312, %v361
        %v410 = vmax.f32 %v313, %v362
        %v411 = vmax.f32 %v314, %v363
        %v412 = vmax.f32 %v315, %v364
        %v413 = vmax.f32 %v316, %v365
        %v414 = vmax.f32 %v317, %v366
        %v415 = vmax.f32 %v318, %v367
        %v416 = vmax.f32 %v319, %v368
        %v417 = vmax.f32 %v320, %v369
        %v418 = vmax.f32 %v321, %v370
        %v419 = vmax.f32 %v322, %v371
        %v420 = vmax.f32 %v323, %v372
        %v421 = vmax.f32 %v324, %v373
        %v422 = vmax.f32 %v325, %v374
        %v423 = vmax.f32 %v326, %v375
        %v424 = vmax.f32 %v327, %v376
        %v425 = vmax.f32 %v328, %v377
        %v426 = vmax.f32 %v329, %v378
        %v427 = vmax.f32 %v330, %v379
        %v428 = vmax.f32 %v331, %v380
        %v429 = vmax.f32 %v332, %v381
        %v430 = vmax.f32 %v333, %v382
        %v431 = vmax.f32 %v334, %v383
        %v432 = vmax.f32 %v335, %v384
        %v433 = vmax.f32 %v336, %v385
        %v434 = vmax.f32 %v337, %v386
        %v435 = vmax.f32 %v338, %v387
        %v436 = vmax.f32 %v339, %v388
        %v437 = vmax.f32 %v340, %v389
        %v438 = vmax.f32 %v341, %v390
        %v439 = vmax.f32 %v342, %v391
        %v440 = vmax.f32 %v343, %v392
        %v441 = vmax.f32 %v344, %v393
        %v442 = vmax.f32 %v345, %v394
        %v443 = vmax.f32 %v346, %v395
        %v444 = vld [vmem:[%s266] sm:$0xff]
        %v445 = vld [vmem:[%s266 + $0x8] sm:$0xff]
        %v446 = vld [vmem:[%s266 + $0x10] sm:$0xf]
        %v447 = vld [vmem:[%s266 + $0x18] sm:$0xff]
        %v448 = vld [vmem:[%s266 + $0x20] sm:$0xff]
        %v449 = vld [vmem:[%s266 + $0x28] sm:$0xf]
        %v450 = vld [vmem:[%s266 + $0x30] sm:$0xff]
        %v451 = vld [vmem:[%s266 + $0x38] sm:$0xff]
        %v452 = vld [vmem:[%s266 + $0x40] sm:$0xf]
        %v453 = vld [vmem:[%s266 + $0x48] sm:$0xff]
        %v454 = vld [vmem:[%s266 + $0x50] sm:$0xff]
        %v455 = vld [vmem:[%s266 + $0x58] sm:$0xf]
        %v456 = vld [vmem:[%s266 + $0x60] sm:$0xff]
        %v457 = vld [vmem:[%s266 + $0x68] sm:$0xff]
        %v458 = vld [vmem:[%s266 + $0x70] sm:$0xf]
        %v459 = vld [vmem:[%s266 + $0x78] sm:$0xff]
        %v460 = vld [vmem:[%s266 + $0x80] sm:$0xff]
        %v461 = vld [vmem:[%s266 + $0x88] sm:$0xf]
        %v462 = vld [vmem:[%s266 + $0x90] sm:$0xff]
        %v463 = vld [vmem:[%s266 + $0x98] sm:$0xff]
        %v464 = vld [vmem:[%s266 + $0xa0] sm:$0xf]
        %v465 = vld [vmem:[%s266 + $0xa8] sm:$0xff]
        %v466 = vld [vmem:[%s266 + $0xb0] sm:$0xff]
        %v467 = vld [vmem:[%s266 + $0xb8] sm:$0xf]
        %v468 = vld [vmem:[%s266 + $0xc0] sm:$0xff]
        %v469 = vld [vmem:[%s266 + $0xc8] sm:$0xff]
        %v470 = vld [vmem:[%s266 + $0xd0] sm:$0xf]
        %v471 = vld [vmem:[%s266 + $0xd8] sm:$0xff]
        %v472 = vld [vmem:[%s266 + $0xe0] sm:$0xff]
        %v473 = vld [vmem:[%s266 + $0xe8] sm:$0xf]
        %v474 = vld [vmem:[%s266 + $0xf0] sm:$0xff]
        %v475 = vld [vmem:[%s266 + $0xf8] sm:$0xff]
        %v476 = vld [vmem:[%s266 + $0x100] sm:$0xf]
        %v477 = vld [vmem:[%s266 + $0x108] sm:$0xff]
        %v478 = vld [vmem:[%s266 + $0x110] sm:$0xff]
        %v479 = vld [vmem:[%s266 + $0x118] sm:$0xf]
        %v480 = vld [vmem:[%s266 + $0x120] sm:$0xff]
        %v481 = vld [vmem:[%s266 + $0x128] sm:$0xff]
        %v482 = vld [vmem:[%s266 + $0x130] sm:$0xf]
        %v483 = vld [vmem:[%s266 + $0x138] sm:$0xff]
        %v484 = vld [vmem:[%s266 + $0x140] sm:$0xff]
        %v485 = vld [vmem:[%s266 + $0x148] sm:$0xf]
        %v486 = vld [vmem:[%s266 + $0x150] sm:$0xff]
        %v487 = vld [vmem:[%s266 + $0x158] sm:$0xff]
        %v488 = vld [vmem:[%s266 + $0x160] sm:$0xf]
        %v489 = vld [vmem:[%s266 + $0x168] sm:$0xff]
        %v490 = vld [vmem:[%s266 + $0x170] sm:$0xff]
        %v491 = vld [vmem:[%s266 + $0x178] sm:$0xf]
        %v492 = vmax.f32 %v396, %v444
        %v493 = vmax.f32 %v397, %v445
        %v494 = vmax.f32 %v398, %v446
        %v495 = vmax.f32 %v399, %v447
        %v496 = vmax.f32 %v400, %v448
        %v497 = vmax.f32 %v401, %v449
        %v498 = vmax.f32 %v402, %v450
        %v499 = vmax.f32 %v403, %v451
        %v500 = vmax.f32 %v404, %v452
        %v501 = vmax.f32 %v405, %v453
        %v502 = vmax.f32 %v406, %v454
        %v503 = vmax.f32 %v407, %v455
        %v504 = vmax.f32 %v408, %v456
        %v505 = vmax.f32 %v409, %v457
        %v506 = vmax.f32 %v410, %v458
        %v507 = vmax.f32 %v411, %v459
        %v508 = vmax.f32 %v412, %v460
        %v509 = vmax.f32 %v413, %v461
        %v510 = vmax.f32 %v414, %v462
        %v511 = vmax.f32 %v415, %v463
        %v512 = vmax.f32 %v416, %v464
        %v513 = vmax.f32 %v417, %v465
        %v514 = vmax.f32 %v418, %v466
        %v515 = vmax.f32 %v419, %v467
        %v516 = vmax.f32 %v420, %v468
        %v517 = vmax.f32 %v421, %v469
        %v518 = vmax.f32 %v422, %v470
        %v519 = vmax.f32 %v423, %v471
        %v520 = vmax.f32 %v424, %v472
        %v521 = vmax.f32 %v425, %v473
        %v522 = vmax.f32 %v426, %v474
        %v523 = vmax.f32 %v427, %v475
        %v524 = vmax.f32 %v428, %v476
        %v525 = vmax.f32 %v429, %v477
        %v526 = vmax.f32 %v430, %v478
        %v527 = vmax.f32 %v431, %v479
        %v528 = vmax.f32 %v432, %v480
        %v529 = vmax.f32 %v433, %v481
        %v530 = vmax.f32 %v434, %v482
        %v531 = vmax.f32 %v435, %v483
        %v532 = vmax.f32 %v436, %v484
        %v533 = vmax.f32 %v437, %v485
        %v534 = vmax.f32 %v438, %v486
        %v535 = vmax.f32 %v439, %v487
        %v536 = vmax.f32 %v440, %v488
        %v537 = vmax.f32 %v441, %v489
        %v538 = vmax.f32 %v442, %v490
        %v539 = vmax.f32 %v443, %v491
        %s540 = scalar_lea.vmem [#allocation2], 72
        %v541 = vld [vmem:[%s540] sm:$0xff]
        %v542 = vld [vmem:[%s540 + $0x8] sm:$0xff]
        %v543 = vld [vmem:[%s540 + $0x10] sm:$0xf]
        %v544 = vld [vmem:[%s540 + $0x18] sm:$0xff]
        %v545 = vld [vmem:[%s540 + $0x20] sm:$0xff]
        %v546 = vld [vmem:[%s540 + $0x28] sm:$0xf]
        %v547 = vld [vmem:[%s540 + $0x30] sm:$0xff]
        %v548 = vld [vmem:[%s540 + $0x38] sm:$0xff]
        %v549 = vld [vmem:[%s540 + $0x40] sm:$0xf]
        %v550 = vld [vmem:[%s540 + $0x48] sm:$0xff]
        %v551 = vld [vmem:[%s540 + $0x50] sm:$0xff]
        %v552 = vld [vmem:[%s540 + $0x58] sm:$0xf]
        %v553 = vld [vmem:[%s540 + $0x60] sm:$0xff]
        %v554 = vld [vmem:[%s540 + $0x68] sm:$0xff]
        %v555 = vld [vmem:[%s540 + $0x70] sm:$0xf]
        %v556 = vld [vmem:[%s540 + $0x78] sm:$0xff]
        %v557 = vld [vmem:[%s540 + $0x80] sm:$0xff]
        %v558 = vld [vmem:[%s540 + $0x88] sm:$0xf]
        %v559 = vld [vmem:[%s540 + $0x90] sm:$0xff]
        %v560 = vld [vmem:[%s540 + $0x98] sm:$0xff]
        %v561 = vld [vmem:[%s540 + $0xa0] sm:$0xf]
        %v562 = vld [vmem:[%s540 + $0xa8] sm:$0xff]
        %v563 = vld [vmem:[%s540 + $0xb0] sm:$0xff]
        %v564 = vld [vmem:[%s540 + $0xb8] sm:$0xf]
        %v565 = vld [vmem:[%s540 + $0xc0] sm:$0xff]
        %v566 = vld [vmem:[%s540 + $0xc8] sm:$0xff]
        %v567 = vld [vmem:[%s540 + $0xd0] sm:$0xf]
        %v568 = vld [vmem:[%s540 + $0xd8] sm:$0xff]
        %v569 = vld [vmem:[%s540 + $0xe0] sm:$0xff]
        %v570 = vld [vmem:[%s540 + $0xe8] sm:$0xf]
        %v571 = vld [vmem:[%s540 + $0xf0] sm:$0xff]
        %v572 = vld [vmem:[%s540 + $0xf8] sm:$0xff]
        %v573 = vld [vmem:[%s540 + $0x100] sm:$0xf]
        %v574 = vld [vmem:[%s540 + $0x108] sm:$0xff]
        %v575 = vld [vmem:[%s540 + $0x110] sm:$0xff]
        %v576 = vld [vmem:[%s540 + $0x118] sm:$0xf]
        %v577 = vld [vmem:[%s540 + $0x120] sm:$0xff]
        %v578 = vld [vmem:[%s540 + $0x128] sm:$0xff]
        %v579 = vld [vmem:[%s540 + $0x130] sm:$0xf]
        %v580 = vld [vmem:[%s540 + $0x138] sm:$0xff]
        %v581 = vld [vmem:[%s540 + $0x140] sm:$0xff]
        %v582 = vld [vmem:[%s540 + $0x148] sm:$0xf]
        %v583 = vld [vmem:[%s540 + $0x150] sm:$0xff]
        %v584 = vld [vmem:[%s540 + $0x158] sm:$0xff]
        %v585 = vld [vmem:[%s540 + $0x160] sm:$0xf]
        %v586 = vld [vmem:[%s540 + $0x168] sm:$0xff]
        %v587 = vld [vmem:[%s540 + $0x170] sm:$0xff]
        %v588 = vld [vmem:[%s540 + $0x178] sm:$0xf]
        %v589 = vmax.f32 %v492, %v541
        %v590 = vmax.f32 %v493, %v542
        %v591 = vmax.f32 %v494, %v543
        %v592 = vmax.f32 %v495, %v544
        %v593 = vmax.f32 %v496, %v545
        %v594 = vmax.f32 %v497, %v546
        %v595 = vmax.f32 %v498, %v547
        %v596 = vmax.f32 %v499, %v548
        %v597 = vmax.f32 %v500, %v549
        %v598 = vmax.f32 %v501, %v550
        %v599 = vmax.f32 %v502, %v551
        %v600 = vmax.f32 %v503, %v552
        %v601 = vmax.f32 %v504, %v553
        %v602 = vmax.f32 %v505, %v554
        %v603 = vmax.f32 %v506, %v555
        %v604 = vmax.f32 %v507, %v556
        %v605 = vmax.f32 %v508, %v557
        %v606 = vmax.f32 %v509, %v558
        %v607 = vmax.f32 %v510, %v559
        %v608 = vmax.f32 %v511, %v560
        %v609 = vmax.f32 %v512, %v561
        %v610 = vmax.f32 %v513, %v562
        %v611 = vmax.f32 %v514, %v563
        %v612 = vmax.f32 %v515, %v564
        %v613 = vmax.f32 %v516, %v565
        %v614 = vmax.f32 %v517, %v566
        %v615 = vmax.f32 %v518, %v567
        %v616 = vmax.f32 %v519, %v568
        %v617 = vmax.f32 %v520, %v569
        %v618 = vmax.f32 %v521, %v570
        %v619 = vmax.f32 %v522, %v571
        %v620 = vmax.f32 %v523, %v572
        %v621 = vmax.f32 %v524, %v573
        %v622 = vmax.f32 %v525, %v574
        %v623 = vmax.f32 %v526, %v575
        %v624 = vmax.f32 %v527, %v576
        %v625 = vmax.f32 %v528, %v577
        %v626 = vmax.f32 %v529, %v578
        %v627 = vmax.f32 %v530, %v579
        %v628 = vmax.f32 %v531, %v580
        %v629 = vmax.f32 %v532, %v581
        %v630 = vmax.f32 %v533, %v582
        %v631 = vmax.f32 %v534, %v583
        %v632 = vmax.f32 %v535, %v584
        %v633 = vmax.f32 %v536, %v585
        %v634 = vmax.f32 %v537, %v586
        %v635 = vmax.f32 %v538, %v587
        %v636 = vmax.f32 %v539, %v588
        %s637 = scalar_lea.vmem [#allocation2], 96
        %v638 = vld [vmem:[%s637] sm:$0xff]
        %v639 = vld [vmem:[%s637 + $0x8] sm:$0xff]
        %v640 = vld [vmem:[%s637 + $0x10] sm:$0xf]
        %v641 = vld [vmem:[%s637 + $0x18] sm:$0xff]
        %v642 = vld [vmem:[%s637 + $0x20] sm:$0xff]
        %v643 = vld [vmem:[%s637 + $0x28] sm:$0xf]
        %v644 = vld [vmem:[%s637 + $0x30] sm:$0xff]
        %v645 = vld [vmem:[%s637 + $0x38] sm:$0xff]
        %v646 = vld [vmem:[%s637 + $0x40] sm:$0xf]
        %v647 = vld [vmem:[%s637 + $0x48] sm:$0xff]
        %v648 = vld [vmem:[%s637 + $0x50] sm:$0xff]
        %v649 = vld [vmem:[%s637 + $0x58] sm:$0xf]
        %v650 = vld [vmem:[%s637 + $0x60] sm:$0xff]
        %v651 = vld [vmem:[%s637 + $0x68] sm:$0xff]
        %v652 = vld [vmem:[%s637 + $0x70] sm:$0xf]
        %v653 = vld [vmem:[%s637 + $0x78] sm:$0xff]
        %v654 = vld [vmem:[%s637 + $0x80] sm:$0xff]
        %v655 = vld [vmem:[%s637 + $0x88] sm:$0xf]
        %v656 = vld [vmem:[%s637 + $0x90] sm:$0xff]
        %v657 = vld [vmem:[%s637 + $0x98] sm:$0xff]
        %v658 = vld [vmem:[%s637 + $0xa0] sm:$0xf]
        %v659 = vld [vmem:[%s637 + $0xa8] sm:$0xff]
        %v660 = vld [vmem:[%s637 + $0xb0] sm:$0xff]
        %v661 = vld [vmem:[%s637 + $0xb8] sm:$0xf]
        %v662 = vld [vmem:[%s637 + $0xc0] sm:$0xff]
        %v663 = vld [vmem:[%s637 + $0xc8] sm:$0xff]
        %v664 = vld [vmem:[%s637 + $0xd0] sm:$0xf]
        %v665 = vld [vmem:[%s637 + $0xd8] sm:$0xff]
        %v666 = vld [vmem:[%s637 + $0xe0] sm:$0xff]
        %v667 = vld [vmem:[%s637 + $0xe8] sm:$0xf]
        %v668 = vld [vmem:[%s637 + $0xf0] sm:$0xff]
        %v669 = vld [vmem:[%s637 + $0xf8] sm:$0xff]
        %v670 = vld [vmem:[%s637 + $0x100] sm:$0xf]
        %v671 = vld [vmem:[%s637 + $0x108] sm:$0xff]
        %v672 = vld [vmem:[%s637 + $0x110] sm:$0xff]
        %v673 = vld [vmem:[%s637 + $0x118] sm:$0xf]
        %v674 = vld [vmem:[%s637 + $0x120] sm:$0xff]
        %v675 = vld [vmem:[%s637 + $0x128] sm:$0xff]
        %v676 = vld [vmem:[%s637 + $0x130] sm:$0xf]
        %v677 = vld [vmem:[%s637 + $0x138] sm:$0xff]
        %v678 = vld [vmem:[%s637 + $0x140] sm:$0xff]
        %v679 = vld [vmem:[%s637 + $0x148] sm:$0xf]
        %v680 = vld [vmem:[%s637 + $0x150] sm:$0xff]
        %v681 = vld [vmem:[%s637 + $0x158] sm:$0xff]
        %v682 = vld [vmem:[%s637 + $0x160] sm:$0xf]
        %v683 = vld [vmem:[%s637 + $0x168] sm:$0xff]
        %v684 = vld [vmem:[%s637 + $0x170] sm:$0xff]
        %v685 = vld [vmem:[%s637 + $0x178] sm:$0xf]
        %v686 = vmax.f32 %v589, %v638
        %v687 = vmax.f32 %v590, %v639
        %v688 = vmax.f32 %v591, %v640
        %v689 = vmax.f32 %v592, %v641
        %v690 = vmax.f32 %v593, %v642
        %v691 = vmax.f32 %v594, %v643
        %v692 = vmax.f32 %v595, %v644
        %v693 = vmax.f32 %v596, %v645
        %v694 = vmax.f32 %v597, %v646
        %v695 = vmax.f32 %v598, %v647
        %v696 = vmax.f32 %v599, %v648
        %v697 = vmax.f32 %v600, %v649
        %v698 = vmax.f32 %v601, %v650
        %v699 = vmax.f32 %v602, %v651
        %v700 = vmax.f32 %v603, %v652
        %v701 = vmax.f32 %v604, %v653
        %v702 = vmax.f32 %v605, %v654
        %v703 = vmax.f32 %v606, %v655
        %v704 = vmax.f32 %v607, %v656
        %v705 = vmax.f32 %v608, %v657
        %v706 = vmax.f32 %v609, %v658
        %v707 = vmax.f32 %v610, %v659
        %v708 = vmax.f32 %v611, %v660
        %v709 = vmax.f32 %v612, %v661
        %v710 = vmax.f32 %v613, %v662
        %v711 = vmax.f32 %v614, %v663
        %v712 = vmax.f32 %v615, %v664
        %v713 = vmax.f32 %v616, %v665
        %v714 = vmax.f32 %v617, %v666
        %v715 = vmax.f32 %v618, %v667
        %v716 = vmax.f32 %v619, %v668
        %v717 = vmax.f32 %v620, %v669
        %v718 = vmax.f32 %v621, %v670
        %v719 = vmax.f32 %v622, %v671
        %v720 = vmax.f32 %v623, %v672
        %v721 = vmax.f32 %v624, %v673
        %v722 = vmax.f32 %v625, %v674
        %v723 = vmax.f32 %v626, %v675
        %v724 = vmax.f32 %v627, %v676
        %v725 = vmax.f32 %v628, %v677
        %v726 = vmax.f32 %v629, %v678
        %v727 = vmax.f32 %v630, %v679
        %v728 = vmax.f32 %v631, %v680
        %v729 = vmax.f32 %v632, %v681
        %v730 = vmax.f32 %v633, %v682
        %v731 = vmax.f32 %v634, %v683
        %v732 = vmax.f32 %v635, %v684
        %v733 = vmax.f32 %v636, %v685
        %vm782 = vcmask 1046528
        %v783 = vrot.slane %v686, 1
        %v784 = vrot.slane %v687, 1
        %v785 = vsel %vm782, %v783, %v784
        %v786 = vrot.slane %v688, 1
        %v787 = vsel %vm782, %v784, %v786
        %v788 = vrot.slane %v689, 1
        %v789 = vrot.slane %v690, 1
        %v790 = vsel %vm782, %v788, %v789
        %v791 = vrot.slane %v691, 1
        %v792 = vsel %vm782, %v789, %v791
        %v793 = vrot.slane %v692, 1
        %v794 = vrot.slane %v693, 1
        %v795 = vsel %vm782, %v793, %v794
        %v796 = vrot.slane %v694, 1
        %v797 = vsel %vm782, %v794, %v796
        %v798 = vrot.slane %v695, 1
        %v799 = vrot.slane %v696, 1
        %v800 = vsel %vm782, %v798, %v799
        %v801 = vrot.slane %v697, 1
        %v802 = vsel %vm782, %v799, %v801
        %v803 = vrot.slane %v698, 1
        %v804 = vrot.slane %v699, 1
        %v805 = vsel %vm782, %v803, %v804
        %v806 = vrot.slane %v700, 1
        %v807 = vsel %vm782, %v804, %v806
        %v808 = vrot.slane %v701, 1
        %v809 = vrot.slane %v702, 1
        %v810 = vsel %vm782, %v808, %v809
        %v811 = vrot.slane %v703, 1
        %v812 = vsel %vm782, %v809, %v811
        %v813 = vrot.slane %v704, 1
        %v814 = vrot.slane %v705, 1
        %v815 = vsel %vm782, %v813, %v814
        %v816 = vrot.slane %v706, 1
        %v817 = vsel %vm782, %v814, %v816
        %v818 = vrot.slane %v707, 1
        %v819 = vrot.slane %v708, 1
        %v820 = vsel %vm782, %v818, %v819
        %v821 = vrot.slane %v709, 1
        %v822 = vsel %vm782, %v819, %v821
        %v823 = vrot.slane %v710, 1
        %v824 = vrot.slane %v711, 1
        %v825 = vsel %vm782, %v823, %v824
        %v826 = vrot.slane %v712, 1
        %v827 = vsel %vm782, %v824, %v826
        %v828 = vrot.slane %v713, 1
        %v829 = vrot.slane %v714, 1
        %v830 = vsel %vm782, %v828, %v829
        %v831 = vrot.slane %v715, 1
        %v832 = vsel %vm782, %v829, %v831
        %v833 = vrot.slane %v716, 1
        %v834 = vrot.slane %v717, 1
        %v835 = vsel %vm782, %v833, %v834
        %v836 = vrot.slane %v718, 1
        %v837 = vsel %vm782, %v834, %v836
        %v838 = vrot.slane %v719, 1
        %v839 = vrot.slane %v720, 1
        %v840 = vsel %vm782, %v838, %v839
        %v841 = vrot.slane %v721, 1
        %v842 = vsel %vm782, %v839, %v841
        %v843 = vrot.slane %v722, 1
        %v844 = vrot.slane %v723, 1
        %v845 = vsel %vm782, %v843, %v844
        %v846 = vrot.slane %v724, 1
        %v847 = vsel %vm782, %v844, %v846
        %v848 = vrot.slane %v725, 1
        %v849 = vrot.slane %v726, 1
        %v850 = vsel %vm782, %v848, %v849
        %v851 = vrot.slane %v727, 1
        %v852 = vsel %vm782, %v849, %v851
        %v853 = vrot.slane %v728, 1
        %v854 = vrot.slane %v729, 1
        %v855 = vsel %vm782, %v853, %v854
        %v856 = vrot.slane %v730, 1
        %v857 = vsel %vm782, %v854, %v856
        %v858 = vrot.slane %v731, 1
        %v859 = vrot.slane %v732, 1
        %v860 = vsel %vm782, %v858, %v859
        %v861 = vrot.slane %v733, 1
        %v862 = vsel %vm782, %v859, %v861
        %v895 = vmax.f32 %v686, %v785
        %v896 = vmax.f32 %v687, %v787
        %v897 = vmax.f32 %v689, %v790
        %v898 = vmax.f32 %v690, %v792
        %v899 = vmax.f32 %v692, %v795
        %v900 = vmax.f32 %v693, %v797
        %v901 = vmax.f32 %v695, %v800
        %v902 = vmax.f32 %v696, %v802
        %v903 = vmax.f32 %v698, %v805
        %v904 = vmax.f32 %v699, %v807
        %v905 = vmax.f32 %v701, %v810
        %v906 = vmax.f32 %v702, %v812
        %v907 = vmax.f32 %v704, %v815
        %v908 = vmax.f32 %v705, %v817
        %v909 = vmax.f32 %v707, %v820
        %v910 = vmax.f32 %v708, %v822
        %v911 = vmax.f32 %v710, %v825
        %v912 = vmax.f32 %v711, %v827
        %v913 = vmax.f32 %v713, %v830
        %v914 = vmax.f32 %v714, %v832
        %v915 = vmax.f32 %v716, %v835
        %v916 = vmax.f32 %v717, %v837
        %v917 = vmax.f32 %v719, %v840
        %v918 = vmax.f32 %v720, %v842
        %v919 = vmax.f32 %v722, %v845
        %v920 = vmax.f32 %v723, %v847
        %v921 = vmax.f32 %v725, %v850
        %v922 = vmax.f32 %v726, %v852
        %v923 = vmax.f32 %v728, %v855
        %v924 = vmax.f32 %v729, %v857
        %v925 = vmax.f32 %v731, %v860
        %v926 = vmax.f32 %v732, %v862
        %vm927 = vcmask 1045504
        %v928 = vrot.slane %v686, 2
        %v929 = vrot.slane %v687, 2
        %v930 = vsel %vm927, %v928, %v929
        %v931 = vrot.slane %v688, 2
        %v932 = vsel %vm927, %v929, %v931
        %v933 = vrot.slane %v689, 2
        %v934 = vrot.slane %v690, 2
        %v935 = vsel %vm927, %v933, %v934
        %v936 = vrot.slane %v691, 2
        %v937 = vsel %vm927, %v934, %v936
        %v938 = vrot.slane %v692, 2
        %v939 = vrot.slane %v693, 2
        %v940 = vsel %vm927, %v938, %v939
        %v941 = vrot.slane %v694, 2
        %v942 = vsel %vm927, %v939, %v941
        %v943 = vrot.slane %v695, 2
        %v944 = vrot.slane %v696, 2
        %v945 = vsel %vm927, %v943, %v944
        %v946 = vrot.slane %v697, 2
        %v947 = vsel %vm927, %v944, %v946
        %v948 = vrot.slane %v698, 2
        %v949 = vrot.slane %v699, 2
        %v950 = vsel %vm927, %v948, %v949
        %v951 = vrot.slane %v700, 2
        %v952 = vsel %vm927, %v949, %v951
        %v953 = vrot.slane %v701, 2
        %v954 = vrot.slane %v702, 2
        %v955 = vsel %vm927, %v953, %v954
        %v956 = vrot.slane %v703, 2
        %v957 = vsel %vm927, %v954, %v956
        %v958 = vrot.slane %v704, 2
        %v959 = vrot.slane %v705, 2
        %v960 = vsel %vm927, %v958, %v959
        %v961 = vrot.slane %v706, 2
        %v962 = vsel %vm927, %v959, %v961
        %v963 = vrot.slane %v707, 2
        %v964 = vrot.slane %v708, 2
        %v965 = vsel %vm927, %v963, %v964
        %v966 = vrot.slane %v709, 2
        %v967 = vsel %vm927, %v964, %v966
        %v968 = vrot.slane %v710, 2
        %v969 = vrot.slane %v711, 2
        %v970 = vsel %vm927, %v968, %v969
        %v971 = vrot.slane %v712, 2
        %v972 = vsel %vm927, %v969, %v971
        %v973 = vrot.slane %v713, 2
        %v974 = vrot.slane %v714, 2
        %v975 = vsel %vm927, %v973, %v974
        %v976 = vrot.slane %v715, 2
        %v977 = vsel %vm927, %v974, %v976
        %v978 = vrot.slane %v716, 2
        %v979 = vrot.slane %v717, 2
        %v980 = vsel %vm927, %v978, %v979
        %v981 = vrot.slane %v718, 2
        %v982 = vsel %vm927, %v979, %v981
        %v983 = vrot.slane %v719, 2
        %v984 = vrot.slane %v720, 2
        %v985 = vsel %vm927, %v983, %v984
        %v986 = vrot.slane %v721, 2
        %v987 = vsel %vm927, %v984, %v986
        %v988 = vrot.slane %v722, 2
        %v989 = vrot.slane %v723, 2
        %v990 = vsel %vm927, %v988, %v989
        %v991 = vrot.slane %v724, 2
        %v992 = vsel %vm927, %v989, %v991
        %v993 = vrot.slane %v725, 2
        %v994 = vrot.slane %v726, 2
        %v995 = vsel %vm927, %v993, %v994
        %v996 = vrot.slane %v727, 2
        %v997 = vsel %vm927, %v994, %v996
        %v998 = vrot.slane %v728, 2
        %v999 = vrot.slane %v729, 2
        %v1000 = vsel %vm927, %v998, %v999
        %v1001 = vrot.slane %v730, 2
        %v1002 = vsel %vm927, %v999, %v1001
        %v1003 = vrot.slane %v731, 2
        %v1004 = vrot.slane %v732, 2
        %v1005 = vsel %vm927, %v1003, %v1004
        %v1006 = vrot.slane %v733, 2
        %v1007 = vsel %vm927, %v1004, %v1006
        %v1040 = vmax.f32 %v895, %v930
        %v1041 = vmax.f32 %v896, %v932
        %v1042 = vmax.f32 %v897, %v935
        %v1043 = vmax.f32 %v898, %v937
        %v1044 = vmax.f32 %v899, %v940
        %v1045 = vmax.f32 %v900, %v942
        %v1046 = vmax.f32 %v901, %v945
        %v1047 = vmax.f32 %v902, %v947
        %v1048 = vmax.f32 %v903, %v950
        %v1049 = vmax.f32 %v904, %v952
        %v1050 = vmax.f32 %v905, %v955
        %v1051 = vmax.f32 %v906, %v957
        %v1052 = vmax.f32 %v907, %v960
        %v1053 = vmax.f32 %v908, %v962
        %v1054 = vmax.f32 %v909, %v965
        %v1055 = vmax.f32 %v910, %v967
        %v1056 = vmax.f32 %v911, %v970
        %v1057 = vmax.f32 %v912, %v972
        %v1058 = vmax.f32 %v913, %v975
        %v1059 = vmax.f32 %v914, %v977
        %v1060 = vmax.f32 %v915, %v980
        %v1061 = vmax.f32 %v916, %v982
        %v1062 = vmax.f32 %v917, %v985
        %v1063 = vmax.f32 %v918, %v987
        %v1064 = vmax.f32 %v919, %v990
        %v1065 = vmax.f32 %v920, %v992
        %v1066 = vmax.f32 %v921, %v995
        %v1067 = vmax.f32 %v922, %v997
        %v1068 = vmax.f32 %v923, %v1000
        %v1069 = vmax.f32 %v924, %v1002
        %v1070 = vmax.f32 %v925, %v1005
        %v1071 = vmax.f32 %v926, %v1007
        %vm1072 = vcmask 1044480
        %v1073 = vrot.slane %v686, 3
        %v1074 = vrot.slane %v687, 3
        %v1075 = vsel %vm1072, %v1073, %v1074
        %v1076 = vrot.slane %v688, 3
        %v1077 = vsel %vm1072, %v1074, %v1076
        %v1078 = vrot.slane %v689, 3
        %v1079 = vrot.slane %v690, 3
        %v1080 = vsel %vm1072, %v1078, %v1079
        %v1081 = vrot.slane %v691, 3
        %v1082 = vsel %vm1072, %v1079, %v1081
        %v1083 = vrot.slane %v692, 3
        %v1084 = vrot.slane %v693, 3
        %v1085 = vsel %vm1072, %v1083, %v1084
        %v1086 = vrot.slane %v694, 3
        %v1087 = vsel %vm1072, %v1084, %v1086
        %v1088 = vrot.slane %v695, 3
        %v1089 = vrot.slane %v696, 3
        %v1090 = vsel %vm1072, %v1088, %v1089
        %v1091 = vrot.slane %v697, 3
        %v1092 = vsel %vm1072, %v1089, %v1091
        %v1093 = vrot.slane %v698, 3
        %v1094 = vrot.slane %v699, 3
        %v1095 = vsel %vm1072, %v1093, %v1094
        %v1096 = vrot.slane %v700, 3
        %v1097 = vsel %vm1072, %v1094, %v1096
        %v1098 = vrot.slane %v701, 3
        %v1099 = vrot.slane %v702, 3
        %v1100 = vsel %vm1072, %v1098, %v1099
        %v1101 = vrot.slane %v703, 3
        %v1102 = vsel %vm1072, %v1099, %v1101
        %v1103 = vrot.slane %v704, 3
        %v1104 = vrot.slane %v705, 3
        %v1105 = vsel %vm1072, %v1103, %v1104
        %v1106 = vrot.slane %v706, 3
        %v1107 = vsel %vm1072, %v1104, %v1106
        %v1108 = vrot.slane %v707, 3
        %v1109 = vrot.slane %v708, 3
        %v1110 = vsel %vm1072, %v1108, %v1109
        %v1111 = vrot.slane %v709, 3
        %v1112 = vsel %vm1072, %v1109, %v1111
        %v1113 = vrot.slane %v710, 3
        %v1114 = vrot.slane %v711, 3
        %v1115 = vsel %vm1072, %v1113, %v1114
        %v1116 = vrot.slane %v712, 3
        %v1117 = vsel %vm1072, %v1114, %v1116
        %v1118 = vrot.slane %v713, 3
        %v1119 = vrot.slane %v714, 3
        %v1120 = vsel %vm1072, %v1118, %v1119
        %v1121 = vrot.slane %v715, 3
        %v1122 = vsel %vm1072, %v1119, %v1121
        %v1123 = vrot.slane %v716, 3
        %v1124 = vrot.slane %v717, 3
        %v1125 = vsel %vm1072, %v1123, %v1124
        %v1126 = vrot.slane %v718, 3
        %v1127 = vsel %vm1072, %v1124, %v1126
        %v1128 = vrot.slane %v719, 3
        %v1129 = vrot.slane %v720, 3
        %v1130 = vsel %vm1072, %v1128, %v1129
        %v1131 = vrot.slane %v721, 3
        %v1132 = vsel %vm1072, %v1129, %v1131
        %v1133 = vrot.slane %v722, 3
        %v1134 = vrot.slane %v723, 3
        %v1135 = vsel %vm1072, %v1133, %v1134
        %v1136 = vrot.slane %v724, 3
        %v1137 = vsel %vm1072, %v1134, %v1136
        %v1138 = vrot.slane %v725, 3
        %v1139 = vrot.slane %v726, 3
        %v1140 = vsel %vm1072, %v1138, %v1139
        %v1141 = vrot.slane %v727, 3
        %v1142 = vsel %vm1072, %v1139, %v1141
        %v1143 = vrot.slane %v728, 3
        %v1144 = vrot.slane %v729, 3
        %v1145 = vsel %vm1072, %v1143, %v1144
        %v1146 = vrot.slane %v730, 3
        %v1147 = vsel %vm1072, %v1144, %v1146
        %v1148 = vrot.slane %v731, 3
        %v1149 = vrot.slane %v732, 3
        %v1150 = vsel %vm1072, %v1148, %v1149
        %v1151 = vrot.slane %v733, 3
        %v1152 = vsel %vm1072, %v1149, %v1151
        %v1185 = vmax.f32 %v1040, %v1075
        %v1186 = vmax.f32 %v1041, %v1077
        %v1187 = vmax.f32 %v1042, %v1080
        %v1188 = vmax.f32 %v1043, %v1082
        %v1189 = vmax.f32 %v1044, %v1085
        %v1190 = vmax.f32 %v1045, %v1087
        %v1191 = vmax.f32 %v1046, %v1090
        %v1192 = vmax.f32 %v1047, %v1092
        %v1193 = vmax.f32 %v1048, %v1095
        %v1194 = vmax.f32 %v1049, %v1097
        %v1195 = vmax.f32 %v1050, %v1100
        %v1196 = vmax.f32 %v1051, %v1102
        %v1197 = vmax.f32 %v1052, %v1105
        %v1198 = vmax.f32 %v1053, %v1107
        %v1199 = vmax.f32 %v1054, %v1110
        %v1200 = vmax.f32 %v1055, %v1112
        %v1201 = vmax.f32 %v1056, %v1115
        %v1202 = vmax.f32 %v1057, %v1117
        %v1203 = vmax.f32 %v1058, %v1120
        %v1204 = vmax.f32 %v1059, %v1122
        %v1205 = vmax.f32 %v1060, %v1125
        %v1206 = vmax.f32 %v1061, %v1127
        %v1207 = vmax.f32 %v1062, %v1130
        %v1208 = vmax.f32 %v1063, %v1132
        %v1209 = vmax.f32 %v1064, %v1135
        %v1210 = vmax.f32 %v1065, %v1137
        %v1211 = vmax.f32 %v1066, %v1140
        %v1212 = vmax.f32 %v1067, %v1142
        %v1213 = vmax.f32 %v1068, %v1145
        %v1214 = vmax.f32 %v1069, %v1147
        %v1215 = vmax.f32 %v1070, %v1150
        %v1216 = vmax.f32 %v1071, %v1152
        %vm1217 = vcmask 1043456
        %v1218 = vrot.slane %v686, 4
        %v1219 = vrot.slane %v687, 4
        %v1220 = vsel %vm1217, %v1218, %v1219
        %v1221 = vrot.slane %v688, 4
        %v1222 = vsel %vm1217, %v1219, %v1221
        %v1223 = vrot.slane %v689, 4
        %v1224 = vrot.slane %v690, 4
        %v1225 = vsel %vm1217, %v1223, %v1224
        %v1226 = vrot.slane %v691, 4
        %v1227 = vsel %vm1217, %v1224, %v1226
        %v1228 = vrot.slane %v692, 4
        %v1229 = vrot.slane %v693, 4
        %v1230 = vsel %vm1217, %v1228, %v1229
        %v1231 = vrot.slane %v694, 4
        %v1232 = vsel %vm1217, %v1229, %v1231
        %v1233 = vrot.slane %v695, 4
        %v1234 = vrot.slane %v696, 4
        %v1235 = vsel %vm1217, %v1233, %v1234
        %v1236 = vrot.slane %v697, 4
        %v1237 = vsel %vm1217, %v1234, %v1236
        %v1238 = vrot.slane %v698, 4
        %v1239 = vrot.slane %v699, 4
        %v1240 = vsel %vm1217, %v1238, %v1239
        %v1241 = vrot.slane %v700, 4
        %v1242 = vsel %vm1217, %v1239, %v1241
        %v1243 = vrot.slane %v701, 4
        %v1244 = vrot.slane %v702, 4
        %v1245 = vsel %vm1217, %v1243, %v1244
        %v1246 = vrot.slane %v703, 4
        %v1247 = vsel %vm1217, %v1244, %v1246
        %v1248 = vrot.slane %v704, 4
        %v1249 = vrot.slane %v705, 4
        %v1250 = vsel %vm1217, %v1248, %v1249
        %v1251 = vrot.slane %v706, 4
        %v1252 = vsel %vm1217, %v1249, %v1251
        %v1253 = vrot.slane %v707, 4
        %v1254 = vrot.slane %v708, 4
        %v1255 = vsel %vm1217, %v1253, %v1254
        %v1256 = vrot.slane %v709, 4
        %v1257 = vsel %vm1217, %v1254, %v1256
        %v1258 = vrot.slane %v710, 4
        %v1259 = vrot.slane %v711, 4
        %v1260 = vsel %vm1217, %v1258, %v1259
        %v1261 = vrot.slane %v712, 4
        %v1262 = vsel %vm1217, %v1259, %v1261
        %v1263 = vrot.slane %v713, 4
        %v1264 = vrot.slane %v714, 4
        %v1265 = vsel %vm1217, %v1263, %v1264
        %v1266 = vrot.slane %v715, 4
        %v1267 = vsel %vm1217, %v1264, %v1266
        %v1268 = vrot.slane %v716, 4
        %v1269 = vrot.slane %v717, 4
        %v1270 = vsel %vm1217, %v1268, %v1269
        %v1271 = vrot.slane %v718, 4
        %v1272 = vsel %vm1217, %v1269, %v1271
        %v1273 = vrot.slane %v719, 4
        %v1274 = vrot.slane %v720, 4
        %v1275 = vsel %vm1217, %v1273, %v1274
        %v1276 = vrot.slane %v721, 4
        %v1277 = vsel %vm1217, %v1274, %v1276
        %v1278 = vrot.slane %v722, 4
        %v1279 = vrot.slane %v723, 4
        %v1280 = vsel %vm1217, %v1278, %v1279
        %v1281 = vrot.slane %v724, 4
        %v1282 = vsel %vm1217, %v1279, %v1281
        %v1283 = vrot.slane %v725, 4
        %v1284 = vrot.slane %v726, 4
        %v1285 = vsel %vm1217, %v1283, %v1284
        %v1286 = vrot.slane %v727, 4
        %v1287 = vsel %vm1217, %v1284, %v1286
        %v1288 = vrot.slane %v728, 4
        %v1289 = vrot.slane %v729, 4
        %v1290 = vsel %vm1217, %v1288, %v1289
        %v1291 = vrot.slane %v730, 4
        %v1292 = vsel %vm1217, %v1289, %v1291
        %v1293 = vrot.slane %v731, 4
        %v1294 = vrot.slane %v732, 4
        %v1295 = vsel %vm1217, %v1293, %v1294
        %v1296 = vrot.slane %v733, 4
        %v1297 = vsel %vm1217, %v1294, %v1296
        %v1330 = vmax.f32 %v1185, %v1220
        %v1331 = vmax.f32 %v1186, %v1222
        %v1332 = vmax.f32 %v1187, %v1225
        %v1333 = vmax.f32 %v1188, %v1227
        %v1334 = vmax.f32 %v1189, %v1230
        %v1335 = vmax.f32 %v1190, %v1232
        %v1336 = vmax.f32 %v1191, %v1235
        %v1337 = vmax.f32 %v1192, %v1237
        %v1338 = vmax.f32 %v1193, %v1240
        %v1339 = vmax.f32 %v1194, %v1242
        %v1340 = vmax.f32 %v1195, %v1245
        %v1341 = vmax.f32 %v1196, %v1247
        %v1342 = vmax.f32 %v1197, %v1250
        %v1343 = vmax.f32 %v1198, %v1252
        %v1344 = vmax.f32 %v1199, %v1255
        %v1345 = vmax.f32 %v1200, %v1257
        %v1346 = vmax.f32 %v1201, %v1260
        %v1347 = vmax.f32 %v1202, %v1262
        %v1348 = vmax.f32 %v1203, %v1265
        %v1349 = vmax.f32 %v1204, %v1267
        %v1350 = vmax.f32 %v1205, %v1270
        %v1351 = vmax.f32 %v1206, %v1272
        %v1352 = vmax.f32 %v1207, %v1275
        %v1353 = vmax.f32 %v1208, %v1277
        %v1354 = vmax.f32 %v1209, %v1280
        %v1355 = vmax.f32 %v1210, %v1282
        %v1356 = vmax.f32 %v1211, %v1285
        %v1357 = vmax.f32 %v1212, %v1287
        %v1358 = vmax.f32 %v1213, %v1290
        %v1359 = vmax.f32 %v1214, %v1292
        %v1360 = vmax.f32 %v1215, %v1295
        %v1361 = vmax.f32 %v1216, %v1297
        %v1362 = vld [vmem:[#allocation6] sm:$0xff]
        %v1363 = vld [vmem:[#allocation6 + $0x8] sm:$0xff]
        %v1364 = vld [vmem:[#allocation6 + $0x10] sm:$0xff]
        %v1365 = vld [vmem:[#allocation6 + $0x18] sm:$0xff]
        %v1366 = vld [vmem:[#allocation6 + $0x20] sm:$0xff]
        %v1367 = vld [vmem:[#allocation6 + $0x28] sm:$0xff]
        %v1368 = vld [vmem:[#allocation6 + $0x30] sm:$0xff]
        %v1369 = vld [vmem:[#allocation6 + $0x38] sm:$0xff]
        %v1370 = vld [vmem:[#allocation6 + $0x40] sm:$0xff]
        %v1371 = vld [vmem:[#allocation6 + $0x48] sm:$0xff]
        %v1372 = vld [vmem:[#allocation6 + $0x50] sm:$0xff]
        %v1373 = vld [vmem:[#allocation6 + $0x58] sm:$0xff]
        %v1374 = vld [vmem:[#allocation6 + $0x60] sm:$0xff]
        %v1375 = vld [vmem:[#allocation6 + $0x68] sm:$0xff]
        %v1376 = vld [vmem:[#allocation6 + $0x70] sm:$0xff]
        %v1377 = vld [vmem:[#allocation6 + $0x78] sm:$0xff]
        %1378 = vmatpush.msra.mxu0 %v1377
        %1379 = vmatpush.msra.mxu0 %v1376
        %1380 = vmatpush.msra.mxu0 %v1375
        %1381 = vmatpush.msra.mxu0 %v1374
        %1382 = vmatpush.msra.mxu0 %v1373
        %1383 = vmatpush.msra.mxu0 %v1372
        %1384 = vmatpush.msra.mxu0 %v1371
        %1385 = vmatpush.msra.mxu0 %v1370
        %1386 = vmatpush.msra.mxu0 %v1369
        %1387 = vmatpush.msra.mxu0 %v1368
        %1388 = vmatpush.msra.mxu0 %v1367
        %1389 = vmatpush.msra.mxu0 %v1366
        %1390 = vmatpush.msra.mxu0 %v1365
        %1391 = vmatpush.msra.mxu0 %v1364
        %1392 = vmatpush.msra.mxu0 %v1363
        %1393 = vmatpush.msra.mxu0 %v1362
        %1394 = vmatmul.f32.gmra.mxu0 %v1330
        %v1395 = vpop.f32.mrf.mxu0
        %v1396 = vadd.f32 0.0, %v1395
        %1397 = vmatmul.f32.gmra.mxu0 %v1331
        %v1398 = vpop.f32.mrf.mxu0
        %v1399 = vadd.f32 0.0, %v1398
        %1400 = vmatmul.f32.gmra.mxu0 %v1332
        %v1401 = vpop.f32.mrf.mxu0
        %v1402 = vadd.f32 0.0, %v1401
        %1403 = vmatmul.f32.gmra.mxu0 %v1333
        %v1404 = vpop.f32.mrf.mxu0
        %v1405 = vadd.f32 0.0, %v1404
        %1406 = vmatmul.f32.gmra.mxu0 %v1334
        %v1407 = vpop.f32.mrf.mxu0
        %v1408 = vadd.f32 0.0, %v1407
        %1409 = vmatmul.f32.gmra.mxu0 %v1335
        %v1410 = vpop.f32.mrf.mxu0
        %v1411 = vadd.f32 0.0, %v1410
        %1412 = vmatmul.f32.gmra.mxu0 %v1336
        %v1413 = vpop.f32.mrf.mxu0
        %v1414 = vadd.f32 0.0, %v1413
        %1415 = vmatmul.f32.gmra.mxu0 %v1337
        %v1416 = vpop.f32.mrf.mxu0
        %v1417 = vadd.f32 0.0, %v1416
        %1418 = vmatmul.f32.gmra.mxu0 %v1338
        %v1419 = vpop.f32.mrf.mxu0
        %v1420 = vadd.f32 0.0, %v1419
        %1421 = vmatmul.f32.gmra.mxu0 %v1339
        %v1422 = vpop.f32.mrf.mxu0
        %v1423 = vadd.f32 0.0, %v1422
        %1424 = vmatmul.f32.gmra.mxu0 %v1340
        %v1425 = vpop.f32.mrf.mxu0
        %v1426 = vadd.f32 0.0, %v1425
        %1427 = vmatmul.f32.gmra.mxu0 %v1341
        %v1428 = vpop.f32.mrf.mxu0
        %v1429 = vadd.f32 0.0, %v1428
        %1430 = vmatmul.f32.gmra.mxu0 %v1342
        %v1431 = vpop.f32.mrf.mxu0
        %v1432 = vadd.f32 0.0, %v1431
        %1433 = vmatmul.f32.gmra.mxu0 %v1343
        %v1434 = vpop.f32.mrf.mxu0
        %v1435 = vadd.f32 0.0, %v1434
        %1436 = vmatmul.f32.gmra.mxu0 %v1344
        %v1437 = vpop.f32.mrf.mxu0
        %v1438 = vadd.f32 0.0, %v1437
        %1439 = vmatmul.f32.gmra.mxu0 %v1345
        %v1440 = vpop.f32.mrf.mxu0
        %v1441 = vadd.f32 0.0, %v1440
        %1442 = vmatmul.f32.gmra.mxu0 %v1346
        %v1443 = vpop.f32.mrf.mxu0
        %v1444 = vadd.f32 0.0, %v1443
        %1445 = vmatmul.f32.gmra.mxu0 %v1347
        %v1446 = vpop.f32.mrf.mxu0
        %v1447 = vadd.f32 0.0, %v1446
        %1448 = vmatmul.f32.gmra.mxu0 %v1348
        %v1449 = vpop.f32.mrf.mxu0
        %v1450 = vadd.f32 0.0, %v1449
        %1451 = vmatmul.f32.gmra.mxu0 %v1349
        %v1452 = vpop.f32.mrf.mxu0
        %v1453 = vadd.f32 0.0, %v1452
        %1454 = vmatmul.f32.gmra.mxu0 %v1350
        %v1455 = vpop.f32.mrf.mxu0
        %v1456 = vadd.f32 0.0, %v1455
        %1457 = vmatmul.f32.gmra.mxu0 %v1351
        %v1458 = vpop.f32.mrf.mxu0
        %v1459 = vadd.f32 0.0, %v1458
        %1460 = vmatmul.f32.gmra.mxu0 %v1352
        %v1461 = vpop.f32.mrf.mxu0
        %v1462 = vadd.f32 0.0, %v1461
        %1463 = vmatmul.f32.gmra.mxu0 %v1353
        %v1464 = vpop.f32.mrf.mxu0
        %v1465 = vadd.f32 0.0, %v1464
        %1466 = vmatmul.f32.gmra.mxu0 %v1354
        %v1467 = vpop.f32.mrf.mxu0
        %v1468 = vadd.f32 0.0, %v1467
        %1469 = vmatmul.f32.gmra.mxu0 %v1355
        %v1470 = vpop.f32.mrf.mxu0
        %v1471 = vadd.f32 0.0, %v1470
        %1472 = vmatmul.f32.gmra.mxu0 %v1356
        %v1473 = vpop.f32.mrf.mxu0
        %v1474 = vadd.f32 0.0, %v1473
        %1475 = vmatmul.f32.gmra.mxu0 %v1357
        %v1476 = vpop.f32.mrf.mxu0
        %v1477 = vadd.f32 0.0, %v1476
        %1478 = vmatmul.f32.gmra.mxu0 %v1358
        %v1479 = vpop.f32.mrf.mxu0
        %v1480 = vadd.f32 0.0, %v1479
        %1481 = vmatmul.f32.gmra.mxu0 %v1359
        %v1482 = vpop.f32.mrf.mxu0
        %v1483 = vadd.f32 0.0, %v1482
        %1484 = vmatmul.f32.gmra.mxu0 %v1360
        %v1485 = vpop.f32.mrf.mxu0
        %v1486 = vadd.f32 0.0, %v1485
        %1487 = vmatmul.f32.gmra.mxu0 %v1361
        %v1488 = vpop.f32.mrf.mxu0
        %v1489 = vadd.f32 0.0, %v1488
        %1490 = vdwg.mxu0
        %v1491 = vadd.f32 %v234, %v1396
        %v1492 = vadd.f32 %v235, %v1399
        %v1493 = vadd.f32 %v236, %v1402
        %v1494 = vadd.f32 %v237, %v1405
        %v1495 = vadd.f32 %v238, %v1408
        %v1496 = vadd.f32 %v239, %v1411
        %v1497 = vadd.f32 %v240, %v1414
        %v1498 = vadd.f32 %v241, %v1417
        %v1499 = vadd.f32 %v242, %v1420
        %v1500 = vadd.f32 %v243, %v1423
        %v1501 = vadd.f32 %v244, %v1426
        %v1502 = vadd.f32 %v245, %v1429
        %v1503 = vadd.f32 %v246, %v1432
        %v1504 = vadd.f32 %v247, %v1435
        %v1505 = vadd.f32 %v248, %v1438
        %v1506 = vadd.f32 %v249, %v1441
        %v1507 = vadd.f32 %v250, %v1444
        %v1508 = vadd.f32 %v251, %v1447
        %v1509 = vadd.f32 %v252, %v1450
        %v1510 = vadd.f32 %v253, %v1453
        %v1511 = vadd.f32 %v254, %v1456
        %v1512 = vadd.f32 %v255, %v1459
        %v1513 = vadd.f32 %v256, %v1462
        %v1514 = vadd.f32 %v257, %v1465
        %v1515 = vadd.f32 %v258, %v1468
        %v1516 = vadd.f32 %v259, %v1471
        %v1517 = vadd.f32 %v260, %v1474
        %v1518 = vadd.f32 %v261, %v1477
        %v1519 = vadd.f32 %v262, %v1480
        %v1520 = vadd.f32 %v263, %v1483
        %v1521 = vadd.f32 %v264, %v1486
        %v1522 = vadd.f32 %v265, %v1489
        %1523 = vst [vmem:[%s266 + $0x2] sm:$0xff] %v1396
        %1524 = vst [vmem:[%s266 + $0xa] sm:$0xff] %v1399
        %1525 = vst [vmem:[%s266 + $0x1a] sm:$0xff] %v1402
        %1526 = vst [vmem:[%s266 + $0x22] sm:$0xff] %v1405
        %1527 = vst [vmem:[%s266 + $0x32] sm:$0xff] %v1408
        %1528 = vst [vmem:[%s266 + $0x3a] sm:$0xff] %v1411
        %1529 = vst [vmem:[%s266 + $0x4a] sm:$0xff] %v1414
        %1530 = vst [vmem:[%s266 + $0x52] sm:$0xff] %v1417
        %1531 = vst [vmem:[%s266 + $0x62] sm:$0xff] %v1420
        %1532 = vst [vmem:[%s266 + $0x6a] sm:$0xff] %v1423
        %1533 = vst [vmem:[%s266 + $0x7a] sm:$0xff] %v1426
        %1534 = vst [vmem:[%s266 + $0x82] sm:$0xff] %v1429
        %1535 = vst [vmem:[%s266 + $0x92] sm:$0xff] %v1432
        %1536 = vst [vmem:[%s266 + $0x9a] sm:$0xff] %v1435
        %1537 = vst [vmem:[%s266 + $0xaa] sm:$0xff] %v1438
        %1538 = vst [vmem:[%s266 + $0xb2] sm:$0xff] %v1441
        %1539 = vst [vmem:[%s266 + $0xc2] sm:$0xff] %v1444
        %1540 = vst [vmem:[%s266 + $0xca] sm:$0xff] %v1447
        %1541 = vst [vmem:[%s266 + $0xda] sm:$0xff] %v1450
        %1542 = vst [vmem:[%s266 + $0xe2] sm:$0xff] %v1453
        %1543 = vst [vmem:[%s266 + $0xf2] sm:$0xff] %v1456
        %1544 = vst [vmem:[%s266 + $0xfa] sm:$0xff] %v1459
        %1545 = vst [vmem:[%s266 + $0x10a] sm:$0xff] %v1462
        %1546 = vst [vmem:[%s266 + $0x112] sm:$0xff] %v1465
        %1547 = vst [vmem:[%s266 + $0x122] sm:$0xff] %v1468
        %1548 = vst [vmem:[%s266 + $0x12a] sm:$0xff] %v1471
        %1549 = vst [vmem:[%s266 + $0x13a] sm:$0xff] %v1474
        %1550 = vst [vmem:[%s266 + $0x142] sm:$0xff] %v1477
        %1551 = vst [vmem:[%s266 + $0x152] sm:$0xff] %v1480
        %1552 = vst [vmem:[%s266 + $0x15a] sm:$0xff] %v1483
        %1553 = vst [vmem:[%s266 + $0x16a] sm:$0xff] %v1486
        %1554 = vst [vmem:[%s266 + $0x172] sm:$0xff] %v1489
        %v1555 = vld [vmem:[#allocation2] sm:$0xff]
        %v1556 = vld [vmem:[#allocation2 + $0x8] sm:$0xff]
        %v1557 = vld [vmem:[#allocation2 + $0x10] sm:$0xf]
        %v1558 = vld [vmem:[#allocation2 + $0x18] sm:$0xff]
        %v1559 = vld [vmem:[#allocation2 + $0x20] sm:$0xff]
        %v1560 = vld [vmem:[#allocation2 + $0x28] sm:$0xf]
        %v1561 = vld [vmem:[#allocation2 + $0x30] sm:$0xff]
        %v1562 = vld [vmem:[#allocation2 + $0x38] sm:$0xff]
        %v1563 = vld [vmem:[#allocation2 + $0x40] sm:$0xf]
        %v1564 = vld [vmem:[#allocation2 + $0x48] sm:$0xff]
        %v1565 = vld [vmem:[#allocation2 + $0x50] sm:$0xff]
        %v1566 = vld [vmem:[#allocation2 + $0x58] sm:$0xf]
        %v1567 = vld [vmem:[#allocation2 + $0x60] sm:$0xff]
        %v1568 = vld [vmem:[#allocation2 + $0x68] sm:$0xff]
        %v1569 = vld [vmem:[#allocation2 + $0x70] sm:$0xf]
        %v1570 = vld [vmem:[#allocation2 + $0x78] sm:$0xff]
        %v1571 = vld [vmem:[#allocation2 + $0x80] sm:$0xff]
        %v1572 = vld [vmem:[#allocation2 + $0x88] sm:$0xf]
        %v1573 = vld [vmem:[#allocation2 + $0x90] sm:$0xff]
        %v1574 = vld [vmem:[#allocation2 + $0x98] sm:$0xff]
        %v1575 = vld [vmem:[#allocation2 + $0xa0] sm:$0xf]
        %v1576 = vld [vmem:[#allocation2 + $0xa8] sm:$0xff]
        %v1577 = vld [vmem:[#allocation2 + $0xb0] sm:$0xff]
        %v1578 = vld [vmem:[#allocation2 + $0xb8] sm:$0xf]
        %v1579 = vld [vmem:[#allocation2 + $0xc0] sm:$0xff]
        %v1580 = vld [vmem:[#allocation2 + $0xc8] sm:$0xff]
        %v1581 = vld [vmem:[#allocation2 + $0xd0] sm:$0xf]
        %v1582 = vld [vmem:[#allocation2 + $0xd8] sm:$0xff]
        %v1583 = vld [vmem:[#allocation2 + $0xe0] sm:$0xff]
        %v1584 = vld [vmem:[#allocation2 + $0xe8] sm:$0xf]
        %v1585 = vld [vmem:[#allocation2 + $0xf0] sm:$0xff]
        %v1586 = vld [vmem:[#allocation2 + $0xf8] sm:$0xff]
        %v1587 = vld [vmem:[#allocation2 + $0x100] sm:$0xf]
        %v1588 = vld [vmem:[#allocation2 + $0x108] sm:$0xff]
        %v1589 = vld [vmem:[#allocation2 + $0x110] sm:$0xff]
        %v1590 = vld [vmem:[#allocation2 + $0x118] sm:$0xf]
        %v1591 = vld [vmem:[#allocation2 + $0x120] sm:$0xff]
        %v1592 = vld [vmem:[#allocation2 + $0x128] sm:$0xff]
        %v1593 = vld [vmem:[#allocation2 + $0x130] sm:$0xf]
        %v1594 = vld [vmem:[#allocation2 + $0x138] sm:$0xff]
        %v1595 = vld [vmem:[#allocation2 + $0x140] sm:$0xff]
        %v1596 = vld [vmem:[#allocation2 + $0x148] sm:$0xf]
        %v1597 = vld [vmem:[#allocation2 + $0x150] sm:$0xff]
        %v1598 = vld [vmem:[#allocation2 + $0x158] sm:$0xff]
        %v1599 = vld [vmem:[#allocation2 + $0x160] sm:$0xf]
        %v1600 = vld [vmem:[#allocation2 + $0x168] sm:$0xff]
        %v1601 = vld [vmem:[#allocation2 + $0x170] sm:$0xff]
        %v1602 = vld [vmem:[#allocation2 + $0x178] sm:$0xf]
        %v1603 = vld [vmem:[%s347] sm:$0xff]
        %v1604 = vld [vmem:[%s347 + $0x8] sm:$0xff]
        %v1605 = vld [vmem:[%s347 + $0x10] sm:$0xf]
        %v1606 = vld [vmem:[%s347 + $0x18] sm:$0xff]
        %v1607 = vld [vmem:[%s347 + $0x20] sm:$0xff]
        %v1608 = vld [vmem:[%s347 + $0x28] sm:$0xf]
        %v1609 = vld [vmem:[%s347 + $0x30] sm:$0xff]
        %v1610 = vld [vmem:[%s347 + $0x38] sm:$0xff]
        %v1611 = vld [vmem:[%s347 + $0x40] sm:$0xf]
        %v1612 = vld [vmem:[%s347 + $0x48] sm:$0xff]
        %v1613 = vld [vmem:[%s347 + $0x50] sm:$0xff]
        %v1614 = vld [vmem:[%s347 + $0x58] sm:$0xf]
        %v1615 = vld [vmem:[%s347 + $0x60] sm:$0xff]
        %v1616 = vld [vmem:[%s347 + $0x68] sm:$0xff]
        %v1617 = vld [vmem:[%s347 + $0x70] sm:$0xf]
        %v1618 = vld [vmem:[%s347 + $0x78] sm:$0xff]
        %v1619 = vld [vmem:[%s347 + $0x80] sm:$0xff]
        %v1620 = vld [vmem:[%s347 + $0x88] sm:$0xf]
        %v1621 = vld [vmem:[%s347 + $0x90] sm:$0xff]
        %v1622 = vld [vmem:[%s347 + $0x98] sm:$0xff]
        %v1623 = vld [vmem:[%s347 + $0xa0] sm:$0xf]
        %v1624 = vld [vmem:[%s347 + $0xa8] sm:$0xff]
        %v1625 = vld [vmem:[%s347 + $0xb0] sm:$0xff]
        %v1626 = vld [vmem:[%s347 + $0xb8] sm:$0xf]
        %v1627 = vld [vmem:[%s347 + $0xc0] sm:$0xff]
        %v1628 = vld [vmem:[%s347 + $0xc8] sm:$0xff]
        %v1629 = vld [vmem:[%s347 + $0xd0] sm:$0xf]
        %v1630 = vld [vmem:[%s347 + $0xd8] sm:$0xff]
        %v1631 = vld [vmem:[%s347 + $0xe0] sm:$0xff]
        %v1632 = vld [vmem:[%s347 + $0xe8] sm:$0xf]
        %v1633 = vld [vmem:[%s347 + $0xf0] sm:$0xff]
        %v1634 = vld [vmem:[%s347 + $0xf8] sm:$0xff]
        %v1635 = vld [vmem:[%s347 + $0x100] sm:$0xf]
        %v1636 = vld [vmem:[%s347 + $0x108] sm:$0xff]
        %v1637 = vld [vmem:[%s347 + $0x110] sm:$0xff]
        %v1638 = vld [vmem:[%s347 + $0x118] sm:$0xf]
        %v1639 = vld [vmem:[%s347 + $0x120] sm:$0xff]
        %v1640 = vld [vmem:[%s347 + $0x128] sm:$0xff]
        %v1641 = vld [vmem:[%s347 + $0x130] sm:$0xf]
        %v1642 = vld [vmem:[%s347 + $0x138] sm:$0xff]
        %v1643 = vld [vmem:[%s347 + $0x140] sm:$0xff]
        %v1644 = vld [vmem:[%s347 + $0x148] sm:$0xf]
        %v1645 = vld [vmem:[%s347 + $0x150] sm:$0xff]
        %v1646 = vld [vmem:[%s347 + $0x158] sm:$0xff]
        %v1647 = vld [vmem:[%s347 + $0x160] sm:$0xf]
        %v1648 = vld [vmem:[%s347 + $0x168] sm:$0xff]
        %v1649 = vld [vmem:[%s347 + $0x170] sm:$0xff]
        %v1650 = vld [vmem:[%s347 + $0x178] sm:$0xf]
        %v1651 = vmax.f32 %v1555, %v1603
        %v1652 = vmax.f32 %v1556, %v1604
        %v1653 = vmax.f32 %v1557, %v1605
        %v1654 = vmax.f32 %v1558, %v1606
        %v1655 = vmax.f32 %v1559, %v1607
        %v1656 = vmax.f32 %v1560, %v1608
        %v1657 = vmax.f32 %v1561, %v1609
        %v1658 = vmax.f32 %v1562, %v1610
        %v1659 = vmax.f32 %v1563, %v1611
        %v1660 = vmax.f32 %v1564, %v1612
        %v1661 = vmax.f32 %v1565, %v1613
        %v1662 = vmax.f32 %v1566, %v1614
        %v1663 = vmax.f32 %v1567, %v1615
        %v1664 = vmax.f32 %v1568, %v1616
        %v1665 = vmax.f32 %v1569, %v1617
        %v1666 = vmax.f32 %v1570, %v1618
        %v1667 = vmax.f32 %v1571, %v1619
        %v1668 = vmax.f32 %v1572, %v1620
        %v1669 = vmax.f32 %v1573, %v1621
        %v1670 = vmax.f32 %v1574, %v1622
        %v1671 = vmax.f32 %v1575, %v1623
        %v1672 = vmax.f32 %v1576, %v1624
        %v1673 = vmax.f32 %v1577, %v1625
        %v1674 = vmax.f32 %v1578, %v1626
        %v1675 = vmax.f32 %v1579, %v1627
        %v1676 = vmax.f32 %v1580, %v1628
        %v1677 = vmax.f32 %v1581, %v1629
        %v1678 = vmax.f32 %v1582, %v1630
        %v1679 = vmax.f32 %v1583, %v1631
        %v1680 = vmax.f32 %v1584, %v1632
        %v1681 = vmax.f32 %v1585, %v1633
        %v1682 = vmax.f32 %v1586, %v1634
        %v1683 = vmax.f32 %v1587, %v1635
        %v1684 = vmax.f32 %v1588, %v1636
        %v1685 = vmax.f32 %v1589, %v1637
        %v1686 = vmax.f32 %v1590, %v1638
        %v1687 = vmax.f32 %v1591, %v1639
        %v1688 = vmax.f32 %v1592, %v1640
        %v1689 = vmax.f32 %v1593, %v1641
        %v1690 = vmax.f32 %v1594, %v1642
        %v1691 = vmax.f32 %v1595, %v1643
        %v1692 = vmax.f32 %v1596, %v1644
        %v1693 = vmax.f32 %v1597, %v1645
        %v1694 = vmax.f32 %v1598, %v1646
        %v1695 = vmax.f32 %v1599, %v1647
        %v1696 = vmax.f32 %v1600, %v1648
        %v1697 = vmax.f32 %v1601, %v1649
        %v1698 = vmax.f32 %v1602, %v1650
        %v1699 = vld [vmem:[%s266] sm:$0xff]
        %v1700 = vld [vmem:[%s266 + $0x8] sm:$0xff]
        %v1701 = vld [vmem:[%s266 + $0x10] sm:$0xf]
        %v1702 = vld [vmem:[%s266 + $0x18] sm:$0xff]
        %v1703 = vld [vmem:[%s266 + $0x20] sm:$0xff]
        %v1704 = vld [vmem:[%s266 + $0x28] sm:$0xf]
        %v1705 = vld [vmem:[%s266 + $0x30] sm:$0xff]
        %v1706 = vld [vmem:[%s266 + $0x38] sm:$0xff]
        %v1707 = vld [vmem:[%s266 + $0x40] sm:$0xf]
        %v1708 = vld [vmem:[%s266 + $0x48] sm:$0xff]
        %v1709 = vld [vmem:[%s266 + $0x50] sm:$0xff]
        %v1710 = vld [vmem:[%s266 + $0x58] sm:$0xf]
        %v1711 = vld [vmem:[%s266 + $0x60] sm:$0xff]
        %v1712 = vld [vmem:[%s266 + $0x68] sm:$0xff]
        %v1713 = vld [vmem:[%s266 + $0x70] sm:$0xf]
        %v1714 = vld [vmem:[%s266 + $0x78] sm:$0xff]
        %v1715 = vld [vmem:[%s266 + $0x80] sm:$0xff]
        %v1716 = vld [vmem:[%s266 + $0x88] sm:$0xf]
        %v1717 = vld [vmem:[%s266 + $0x90] sm:$0xff]
        %v1718 = vld [vmem:[%s266 + $0x98] sm:$0xff]
        %v1719 = vld [vmem:[%s266 + $0xa0] sm:$0xf]
        %v1720 = vld [vmem:[%s266 + $0xa8] sm:$0xff]
        %v1721 = vld [vmem:[%s266 + $0xb0] sm:$0xff]
        %v1722 = vld [vmem:[%s266 + $0xb8] sm:$0xf]
        %v1723 = vld [vmem:[%s266 + $0xc0] sm:$0xff]
        %v1724 = vld [vmem:[%s266 + $0xc8] sm:$0xff]
        %v1725 = vld [vmem:[%s266 + $0xd0] sm:$0xf]
        %v1726 = vld [vmem:[%s266 + $0xd8] sm:$0xff]
        %v1727 = vld [vmem:[%s266 + $0xe0] sm:$0xff]
        %v1728 = vld [vmem:[%s266 + $0xe8] sm:$0xf]
        %v1729 = vld [vmem:[%s266 + $0xf0] sm:$0xff]
        %v1730 = vld [vmem:[%s266 + $0xf8] sm:$0xff]
        %v1731 = vld [vmem:[%s266 + $0x100] sm:$0xf]
        %v1732 = vld [vmem:[%s266 + $0x108] sm:$0xff]
        %v1733 = vld [vmem:[%s266 + $0x110] sm:$0xff]
        %v1734 = vld [vmem:[%s266 + $0x118] sm:$0xf]
        %v1735 = vld [vmem:[%s266 + $0x120] sm:$0xff]
        %v1736 = vld [vmem:[%s266 + $0x128] sm:$0xff]
        %v1737 = vld [vmem:[%s266 + $0x130] sm:$0xf]
        %v1738 = vld [vmem:[%s266 + $0x138] sm:$0xff]
        %v1739 = vld [vmem:[%s266 + $0x140] sm:$0xff]
        %v1740 = vld [vmem:[%s266 + $0x148] sm:$0xf]
        %v1741 = vld [vmem:[%s266 + $0x150] sm:$0xff]
        %v1742 = vld [vmem:[%s266 + $0x158] sm:$0xff]
        %v1743 = vld [vmem:[%s266 + $0x160] sm:$0xf]
        %v1744 = vld [vmem:[%s266 + $0x168] sm:$0xff]
        %v1745 = vld [vmem:[%s266 + $0x170] sm:$0xff]
        %v1746 = vld [vmem:[%s266 + $0x178] sm:$0xf]
        %v1747 = vmax.f32 %v1651, %v1699
        %v1748 = vmax.f32 %v1652, %v1700
        %v1749 = vmax.f32 %v1653, %v1701
        %v1750 = vmax.f32 %v1654, %v1702
        %v1751 = vmax.f32 %v1655, %v1703
        %v1752 = vmax.f32 %v1656, %v1704
        %v1753 = vmax.f32 %v1657, %v1705
        %v1754 = vmax.f32 %v1658, %v1706
        %v1755 = vmax.f32 %v1659, %v1707
        %v1756 = vmax.f32 %v1660, %v1708
        %v1757 = vmax.f32 %v1661, %v1709
        %v1758 = vmax.f32 %v1662, %v1710
        %v1759 = vmax.f32 %v1663, %v1711
        %v1760 = vmax.f32 %v1664, %v1712
        %v1761 = vmax.f32 %v1665, %v1713
        %v1762 = vmax.f32 %v1666, %v1714
        %v1763 = vmax.f32 %v1667, %v1715
        %v1764 = vmax.f32 %v1668, %v1716
        %v1765 = vmax.f32 %v1669, %v1717
        %v1766 = vmax.f32 %v1670, %v1718
        %v1767 = vmax.f32 %v1671, %v1719
        %v1768 = vmax.f32 %v1672, %v1720
        %v1769 = vmax.f32 %v1673, %v1721
        %v1770 = vmax.f32 %v1674, %v1722
        %v1771 = vmax.f32 %v1675, %v1723
        %v1772 = vmax.f32 %v1676, %v1724
        %v1773 = vmax.f32 %v1677, %v1725
        %v1774 = vmax.f32 %v1678, %v1726
        %v1775 = vmax.f32 %v1679, %v1727
        %v1776 = vmax.f32 %v1680, %v1728
        %v1777 = vmax.f32 %v1681, %v1729
        %v1778 = vmax.f32 %v1682, %v1730
        %v1779 = vmax.f32 %v1683, %v1731
        %v1780 = vmax.f32 %v1684, %v1732
        %v1781 = vmax.f32 %v1685, %v1733
        %v1782 = vmax.f32 %v1686, %v1734
        %v1783 = vmax.f32 %v1687, %v1735
        %v1784 = vmax.f32 %v1688, %v1736
        %v1785 = vmax.f32 %v1689, %v1737
        %v1786 = vmax.f32 %v1690, %v1738
        %v1787 = vmax.f32 %v1691, %v1739
        %v1788 = vmax.f32 %v1692, %v1740
        %v1789 = vmax.f32 %v1693, %v1741
        %v1790 = vmax.f32 %v1694, %v1742
        %v1791 = vmax.f32 %v1695, %v1743
        %v1792 = vmax.f32 %v1696, %v1744
        %v1793 = vmax.f32 %v1697, %v1745
        %v1794 = vmax.f32 %v1698, %v1746
        %v1795 = vld [vmem:[%s540] sm:$0xff]
        %v1796 = vld [vmem:[%s540 + $0x8] sm:$0xff]
        %v1797 = vld [vmem:[%s540 + $0x10] sm:$0xf]
        %v1798 = vld [vmem:[%s540 + $0x18] sm:$0xff]
        %v1799 = vld [vmem:[%s540 + $0x20] sm:$0xff]
        %v1800 = vld [vmem:[%s540 + $0x28] sm:$0xf]
        %v1801 = vld [vmem:[%s540 + $0x30] sm:$0xff]
        %v1802 = vld [vmem:[%s540 + $0x38] sm:$0xff]
        %v1803 = vld [vmem:[%s540 + $0x40] sm:$0xf]
        %v1804 = vld [vmem:[%s540 + $0x48] sm:$0xff]
        %v1805 = vld [vmem:[%s540 + $0x50] sm:$0xff]
        %v1806 = vld [vmem:[%s540 + $0x58] sm:$0xf]
        %v1807 = vld [vmem:[%s540 + $0x60] sm:$0xff]
        %v1808 = vld [vmem:[%s540 + $0x68] sm:$0xff]
        %v1809 = vld [vmem:[%s540 + $0x70] sm:$0xf]
        %v1810 = vld [vmem:[%s540 + $0x78] sm:$0xff]
        %v1811 = vld [vmem:[%s540 + $0x80] sm:$0xff]
        %v1812 = vld [vmem:[%s540 + $0x88] sm:$0xf]
        %v1813 = vld [vmem:[%s540 + $0x90] sm:$0xff]
        %v1814 = vld [vmem:[%s540 + $0x98] sm:$0xff]
        %v1815 = vld [vmem:[%s540 + $0xa0] sm:$0xf]
        %v1816 = vld [vmem:[%s540 + $0xa8] sm:$0xff]
        %v1817 = vld [vmem:[%s540 + $0xb0] sm:$0xff]
        %v1818 = vld [vmem:[%s540 + $0xb8] sm:$0xf]
        %v1819 = vld [vmem:[%s540 + $0xc0] sm:$0xff]
        %v1820 = vld [vmem:[%s540 + $0xc8] sm:$0xff]
        %v1821 = vld [vmem:[%s540 + $0xd0] sm:$0xf]
        %v1822 = vld [vmem:[%s540 + $0xd8] sm:$0xff]
        %v1823 = vld [vmem:[%s540 + $0xe0] sm:$0xff]
        %v1824 = vld [vmem:[%s540 + $0xe8] sm:$0xf]
        %v1825 = vld [vmem:[%s540 + $0xf0] sm:$0xff]
        %v1826 = vld [vmem:[%s540 + $0xf8] sm:$0xff]
        %v1827 = vld [vmem:[%s540 + $0x100] sm:$0xf]
        %v1828 = vld [vmem:[%s540 + $0x108] sm:$0xff]
        %v1829 = vld [vmem:[%s540 + $0x110] sm:$0xff]
        %v1830 = vld [vmem:[%s540 + $0x118] sm:$0xf]
        %v1831 = vld [vmem:[%s540 + $0x120] sm:$0xff]
        %v1832 = vld [vmem:[%s540 + $0x128] sm:$0xff]
        %v1833 = vld [vmem:[%s540 + $0x130] sm:$0xf]
        %v1834 = vld [vmem:[%s540 + $0x138] sm:$0xff]
        %v1835 = vld [vmem:[%s540 + $0x140] sm:$0xff]
        %v1836 = vld [vmem:[%s540 + $0x148] sm:$0xf]
        %v1837 = vld [vmem:[%s540 + $0x150] sm:$0xff]
        %v1838 = vld [vmem:[%s540 + $0x158] sm:$0xff]
        %v1839 = vld [vmem:[%s540 + $0x160] sm:$0xf]
        %v1840 = vld [vmem:[%s540 + $0x168] sm:$0xff]
        %v1841 = vld [vmem:[%s540 + $0x170] sm:$0xff]
        %v1842 = vld [vmem:[%s540 + $0x178] sm:$0xf]
        %v1843 = vmax.f32 %v1747, %v1795
        %v1844 = vmax.f32 %v1748, %v1796
        %v1845 = vmax.f32 %v1749, %v1797
        %v1846 = vmax.f32 %v1750, %v1798
        %v1847 = vmax.f32 %v1751, %v1799
        %v1848 = vmax.f32 %v1752, %v1800
        %v1849 = vmax.f32 %v1753, %v1801
        %v1850 = vmax.f32 %v1754, %v1802
        %v1851 = vmax.f32 %v1755, %v1803
        %v1852 = vmax.f32 %v1756, %v1804
        %v1853 = vmax.f32 %v1757, %v1805
        %v1854 = vmax.f32 %v1758, %v1806
        %v1855 = vmax.f32 %v1759, %v1807
        %v1856 = vmax.f32 %v1760, %v1808
        %v1857 = vmax.f32 %v1761, %v1809
        %v1858 = vmax.f32 %v1762, %v1810
        %v1859 = vmax.f32 %v1763, %v1811
        %v1860 = vmax.f32 %v1764, %v1812
        %v1861 = vmax.f32 %v1765, %v1813
        %v1862 = vmax.f32 %v1766, %v1814
        %v1863 = vmax.f32 %v1767, %v1815
        %v1864 = vmax.f32 %v1768, %v1816
        %v1865 = vmax.f32 %v1769, %v1817
        %v1866 = vmax.f32 %v1770, %v1818
        %v1867 = vmax.f32 %v1771, %v1819
        %v1868 = vmax.f32 %v1772, %v1820
        %v1869 = vmax.f32 %v1773, %v1821
        %v1870 = vmax.f32 %v1774, %v1822
        %v1871 = vmax.f32 %v1775, %v1823
        %v1872 = vmax.f32 %v1776, %v1824
        %v1873 = vmax.f32 %v1777, %v1825
        %v1874 = vmax.f32 %v1778, %v1826
        %v1875 = vmax.f32 %v1779, %v1827
        %v1876 = vmax.f32 %v1780, %v1828
        %v1877 = vmax.f32 %v1781, %v1829
        %v1878 = vmax.f32 %v1782, %v1830
        %v1879 = vmax.f32 %v1783, %v1831
        %v1880 = vmax.f32 %v1784, %v1832
        %v1881 = vmax.f32 %v1785, %v1833
        %v1882 = vmax.f32 %v1786, %v1834
        %v1883 = vmax.f32 %v1787, %v1835
        %v1884 = vmax.f32 %v1788, %v1836
        %v1885 = vmax.f32 %v1789, %v1837
        %v1886 = vmax.f32 %v1790, %v1838
        %v1887 = vmax.f32 %v1791, %v1839
        %v1888 = vmax.f32 %v1792, %v1840
        %v1889 = vmax.f32 %v1793, %v1841
        %v1890 = vmax.f32 %v1794, %v1842
        %v1891 = vld [vmem:[%s637] sm:$0xff]
        %v1892 = vld [vmem:[%s637 + $0x8] sm:$0xff]
        %v1893 = vld [vmem:[%s637 + $0x10] sm:$0xf]
        %v1894 = vld [vmem:[%s637 + $0x18] sm:$0xff]
        %v1895 = vld [vmem:[%s637 + $0x20] sm:$0xff]
        %v1896 = vld [vmem:[%s637 + $0x28] sm:$0xf]
        %v1897 = vld [vmem:[%s637 + $0x30] sm:$0xff]
        %v1898 = vld [vmem:[%s637 + $0x38] sm:$0xff]
        %v1899 = vld [vmem:[%s637 + $0x40] sm:$0xf]
        %v1900 = vld [vmem:[%s637 + $0x48] sm:$0xff]
        %v1901 = vld [vmem:[%s637 + $0x50] sm:$0xff]
        %v1902 = vld [vmem:[%s637 + $0x58] sm:$0xf]
        %v1903 = vld [vmem:[%s637 + $0x60] sm:$0xff]
        %v1904 = vld [vmem:[%s637 + $0x68] sm:$0xff]
        %v1905 = vld [vmem:[%s637 + $0x70] sm:$0xf]
        %v1906 = vld [vmem:[%s637 + $0x78] sm:$0xff]
        %v1907 = vld [vmem:[%s637 + $0x80] sm:$0xff]
        %v1908 = vld [vmem:[%s637 + $0x88] sm:$0xf]
        %v1909 = vld [vmem:[%s637 + $0x90] sm:$0xff]
        %v1910 = vld [vmem:[%s637 + $0x98] sm:$0xff]
        %v1911 = vld [vmem:[%s637 + $0xa0] sm:$0xf]
        %v1912 = vld [vmem:[%s637 + $0xa8] sm:$0xff]
        %v1913 = vld [vmem:[%s637 + $0xb0] sm:$0xff]
        %v1914 = vld [vmem:[%s637 + $0xb8] sm:$0xf]
        %v1915 = vld [vmem:[%s637 + $0xc0] sm:$0xff]
        %v1916 = vld [vmem:[%s637 + $0xc8] sm:$0xff]
        %v1917 = vld [vmem:[%s637 + $0xd0] sm:$0xf]
        %v1918 = vld [vmem:[%s637 + $0xd8] sm:$0xff]
        %v1919 = vld [vmem:[%s637 + $0xe0] sm:$0xff]
        %v1920 = vld [vmem:[%s637 + $0xe8] sm:$0xf]
        %v1921 = vld [vmem:[%s637 + $0xf0] sm:$0xff]
        %v1922 = vld [vmem:[%s637 + $0xf8] sm:$0xff]
        %v1923 = vld [vmem:[%s637 + $0x100] sm:$0xf]
        %v1924 = vld [vmem:[%s637 + $0x108] sm:$0xff]
        %v1925 = vld [vmem:[%s637 + $0x110] sm:$0xff]
        %v1926 = vld [vmem:[%s637 + $0x118] sm:$0xf]
        %v1927 = vld [vmem:[%s637 + $0x120] sm:$0xff]
        %v1928 = vld [vmem:[%s637 + $0x128] sm:$0xff]
        %v1929 = vld [vmem:[%s637 + $0x130] sm:$0xf]
        %v1930 = vld [vmem:[%s637 + $0x138] sm:$0xff]
        %v1931 = vld [vmem:[%s637 + $0x140] sm:$0xff]
        %v1932 = vld [vmem:[%s637 + $0x148] sm:$0xf]
        %v1933 = vld [vmem:[%s637 + $0x150] sm:$0xff]
        %v1934 = vld [vmem:[%s637 + $0x158] sm:$0xff]
        %v1935 = vld [vmem:[%s637 + $0x160] sm:$0xf]
        %v1936 = vld [vmem:[%s637 + $0x168] sm:$0xff]
        %v1937 = vld [vmem:[%s637 + $0x170] sm:$0xff]
        %v1938 = vld [vmem:[%s637 + $0x178] sm:$0xf]
        %v1939 = vmax.f32 %v1843, %v1891
        %v1940 = vmax.f32 %v1844, %v1892
        %v1941 = vmax.f32 %v1845, %v1893
        %v1942 = vmax.f32 %v1846, %v1894
        %v1943 = vmax.f32 %v1847, %v1895
        %v1944 = vmax.f32 %v1848, %v1896
        %v1945 = vmax.f32 %v1849, %v1897
        %v1946 = vmax.f32 %v1850, %v1898
        %v1947 = vmax.f32 %v1851, %v1899
        %v1948 = vmax.f32 %v1852, %v1900
        %v1949 = vmax.f32 %v1853, %v1901
        %v1950 = vmax.f32 %v1854, %v1902
        %v1951 = vmax.f32 %v1855, %v1903
        %v1952 = vmax.f32 %v1856, %v1904
        %v1953 = vmax.f32 %v1857, %v1905
        %v1954 = vmax.f32 %v1858, %v1906
        %v1955 = vmax.f32 %v1859, %v1907
        %v1956 = vmax.f32 %v1860, %v1908
        %v1957 = vmax.f32 %v1861, %v1909
        %v1958 = vmax.f32 %v1862, %v1910
        %v1959 = vmax.f32 %v1863, %v1911
        %v1960 = vmax.f32 %v1864, %v1912
        %v1961 = vmax.f32 %v1865, %v1913
        %v1962 = vmax.f32 %v1866, %v1914
        %v1963 = vmax.f32 %v1867, %v1915
        %v1964 = vmax.f32 %v1868, %v1916
        %v1965 = vmax.f32 %v1869, %v1917
        %v1966 = vmax.f32 %v1870, %v1918
        %v1967 = vmax.f32 %v1871, %v1919
        %v1968 = vmax.f32 %v1872, %v1920
        %v1969 = vmax.f32 %v1873, %v1921
        %v1970 = vmax.f32 %v1874, %v1922
        %v1971 = vmax.f32 %v1875, %v1923
        %v1972 = vmax.f32 %v1876, %v1924
        %v1973 = vmax.f32 %v1877, %v1925
        %v1974 = vmax.f32 %v1878, %v1926
        %v1975 = vmax.f32 %v1879, %v1927
        %v1976 = vmax.f32 %v1880, %v1928
        %v1977 = vmax.f32 %v1881, %v1929
        %v1978 = vmax.f32 %v1882, %v1930
        %v1979 = vmax.f32 %v1883, %v1931
        %v1980 = vmax.f32 %v1884, %v1932
        %v1981 = vmax.f32 %v1885, %v1933
        %v1982 = vmax.f32 %v1886, %v1934
        %v1983 = vmax.f32 %v1887, %v1935
        %v1984 = vmax.f32 %v1888, %v1936
        %v1985 = vmax.f32 %v1889, %v1937
        %v1986 = vmax.f32 %v1890, %v1938
        %v2035 = vrot.slane %v1939, 1
        %v2036 = vrot.slane %v1940, 1
        %v2037 = vsel %vm782, %v2035, %v2036
        %v2038 = vrot.slane %v1941, 1
        %v2039 = vsel %vm782, %v2036, %v2038
        %v2040 = vrot.slane %v1942, 1
        %v2041 = vrot.slane %v1943, 1
        %v2042 = vsel %vm782, %v2040, %v2041
        %v2043 = vrot.slane %v1944, 1
        %v2044 = vsel %vm782, %v2041, %v2043
        %v2045 = vrot.slane %v1945, 1
        %v2046 = vrot.slane %v1946, 1
        %v2047 = vsel %vm782, %v2045, %v2046
        %v2048 = vrot.slane %v1947, 1
        %v2049 = vsel %vm782, %v2046, %v2048
        %v2050 = vrot.slane %v1948, 1
        %v2051 = vrot.slane %v1949, 1
        %v2052 = vsel %vm782, %v2050, %v2051
        %v2053 = vrot.slane %v1950, 1
        %v2054 = vsel %vm782, %v2051, %v2053
        %v2055 = vrot.slane %v1951, 1
        %v2056 = vrot.slane %v1952, 1
        %v2057 = vsel %vm782, %v2055, %v2056
        %v2058 = vrot.slane %v1953, 1
        %v2059 = vsel %vm782, %v2056, %v2058
        %v2060 = vrot.slane %v1954, 1
        %v2061 = vrot.slane %v1955, 1
        %v2062 = vsel %vm782, %v2060, %v2061
        %v2063 = vrot.slane %v1956, 1
        %v2064 = vsel %vm782, %v2061, %v2063
        %v2065 = vrot.slane %v1957, 1
        %v2066 = vrot.slane %v1958, 1
        %v2067 = vsel %vm782, %v2065, %v2066
        %v2068 = vrot.slane %v1959, 1
        %v2069 = vsel %vm782, %v2066, %v2068
        %v2070 = vrot.slane %v1960, 1
        %v2071 = vrot.slane %v1961, 1
        %v2072 = vsel %vm782, %v2070, %v2071
        %v2073 = vrot.slane %v1962, 1
        %v2074 = vsel %vm782, %v2071, %v2073
        %v2075 = vrot.slane %v1963, 1
        %v2076 = vrot.slane %v1964, 1
        %v2077 = vsel %vm782, %v2075, %v2076
        %v2078 = vrot.slane %v1965, 1
        %v2079 = vsel %vm782, %v2076, %v2078
        %v2080 = vrot.slane %v1966, 1
        %v2081 = vrot.slane %v1967, 1
        %v2082 = vsel %vm782, %v2080, %v2081
        %v2083 = vrot.slane %v1968, 1
        %v2084 = vsel %vm782, %v2081, %v2083
        %v2085 = vrot.slane %v1969, 1
        %v2086 = vrot.slane %v1970, 1
        %v2087 = vsel %vm782, %v2085, %v2086
        %v2088 = vrot.slane %v1971, 1
        %v2089 = vsel %vm782, %v2086, %v2088
        %v2090 = vrot.slane %v1972, 1
        %v2091 = vrot.slane %v1973, 1
        %v2092 = vsel %vm782, %v2090, %v2091
        %v2093 = vrot.slane %v1974, 1
        %v2094 = vsel %vm782, %v2091, %v2093
        %v2095 = vrot.slane %v1975, 1
        %v2096 = vrot.slane %v1976, 1
        %v2097 = vsel %vm782, %v2095, %v2096
        %v2098 = vrot.slane %v1977, 1
        %v2099 = vsel %vm782, %v2096, %v2098
        %v2100 = vrot.slane %v1978, 1
        %v2101 = vrot.slane %v1979, 1
        %v2102 = vsel %vm782, %v2100, %v2101
        %v2103 = vrot.slane %v1980, 1
        %v2104 = vsel %vm782, %v2101, %v2103
        %v2105 = vrot.slane %v1981, 1
        %v2106 = vrot.slane %v1982, 1
        %v2107 = vsel %vm782, %v2105, %v2106
        %v2108 = vrot.slane %v1983, 1
        %v2109 = vsel %vm782, %v2106, %v2108
        %v2110 = vrot.slane %v1984, 1
        %v2111 = vrot.slane %v1985, 1
        %v2112 = vsel %vm782, %v2110, %v2111
        %v2113 = vrot.slane %v1986, 1
        %v2114 = vsel %vm782, %v2111, %v2113
        %v2147 = vmax.f32 %v1939, %v2037
        %v2148 = vmax.f32 %v1940, %v2039
        %v2149 = vmax.f32 %v1942, %v2042
        %v2150 = vmax.f32 %v1943, %v2044
        %v2151 = vmax.f32 %v1945, %v2047
        %v2152 = vmax.f32 %v1946, %v2049
        %v2153 = vmax.f32 %v1948, %v2052
        %v2154 = vmax.f32 %v1949, %v2054
        %v2155 = vmax.f32 %v1951, %v2057
        %v2156 = vmax.f32 %v1952, %v2059
        %v2157 = vmax.f32 %v1954, %v2062
        %v2158 = vmax.f32 %v1955, %v2064
        %v2159 = vmax.f32 %v1957, %v2067
        %v2160 = vmax.f32 %v1958, %v2069
        %v2161 = vmax.f32 %v1960, %v2072
        %v2162 = vmax.f32 %v1961, %v2074
        %v2163 = vmax.f32 %v1963, %v2077
        %v2164 = vmax.f32 %v1964, %v2079
        %v2165 = vmax.f32 %v1966, %v2082
        %v2166 = vmax.f32 %v1967, %v2084
        %v2167 = vmax.f32 %v1969, %v2087
        %v2168 = vmax.f32 %v1970, %v2089
        %v2169 = vmax.f32 %v1972, %v2092
        %v2170 = vmax.f32 %v1973, %v2094
        %v2171 = vmax.f32 %v1975, %v2097
        %v2172 = vmax.f32 %v1976, %v2099
        %v2173 = vmax.f32 %v1978, %v2102
        %v2174 = vmax.f32 %v1979, %v2104
        %v2175 = vmax.f32 %v1981, %v2107
        %v2176 = vmax.f32 %v1982, %v2109
        %v2177 = vmax.f32 %v1984, %v2112
        %v2178 = vmax.f32 %v1985, %v2114
        %v2179 = vrot.slane %v1939, 2
        %v2180 = vrot.slane %v1940, 2
        %v2181 = vsel %vm927, %v2179, %v2180
        %v2182 = vrot.slane %v1941, 2
        %v2183 = vsel %vm927, %v2180, %v2182
        %v2184 = vrot.slane %v1942, 2
        %v2185 = vrot.slane %v1943, 2
        %v2186 = vsel %vm927, %v2184, %v2185
        %v2187 = vrot.slane %v1944, 2
        %v2188 = vsel %vm927, %v2185, %v2187
        %v2189 = vrot.slane %v1945, 2
        %v2190 = vrot.slane %v1946, 2
        %v2191 = vsel %vm927, %v2189, %v2190
        %v2192 = vrot.slane %v1947, 2
        %v2193 = vsel %vm927, %v2190, %v2192
        %v2194 = vrot.slane %v1948, 2
        %v2195 = vrot.slane %v1949, 2
        %v2196 = vsel %vm927, %v2194, %v2195
        %v2197 = vrot.slane %v1950, 2
        %v2198 = vsel %vm927, %v2195, %v2197
        %v2199 = vrot.slane %v1951, 2
        %v2200 = vrot.slane %v1952, 2
        %v2201 = vsel %vm927, %v2199, %v2200
        %v2202 = vrot.slane %v1953, 2
        %v2203 = vsel %vm927, %v2200, %v2202
        %v2204 = vrot.slane %v1954, 2
        %v2205 = vrot.slane %v1955, 2
        %v2206 = vsel %vm927, %v2204, %v2205
        %v2207 = vrot.slane %v1956, 2
        %v2208 = vsel %vm927, %v2205, %v2207
        %v2209 = vrot.slane %v1957, 2
        %v2210 = vrot.slane %v1958, 2
        %v2211 = vsel %vm927, %v2209, %v2210
        %v2212 = vrot.slane %v1959, 2
        %v2213 = vsel %vm927, %v2210, %v2212
        %v2214 = vrot.slane %v1960, 2
        %v2215 = vrot.slane %v1961, 2
        %v2216 = vsel %vm927, %v2214, %v2215
        %v2217 = vrot.slane %v1962, 2
        %v2218 = vsel %vm927, %v2215, %v2217
        %v2219 = vrot.slane %v1963, 2
        %v2220 = vrot.slane %v1964, 2
        %v2221 = vsel %vm927, %v2219, %v2220
        %v2222 = vrot.slane %v1965, 2
        %v2223 = vsel %vm927, %v2220, %v2222
        %v2224 = vrot.slane %v1966, 2
        %v2225 = vrot.slane %v1967, 2
        %v2226 = vsel %vm927, %v2224, %v2225
        %v2227 = vrot.slane %v1968, 2
        %v2228 = vsel %vm927, %v2225, %v2227
        %v2229 = vrot.slane %v1969, 2
        %v2230 = vrot.slane %v1970, 2
        %v2231 = vsel %vm927, %v2229, %v2230
        %v2232 = vrot.slane %v1971, 2
        %v2233 = vsel %vm927, %v2230, %v2232
        %v2234 = vrot.slane %v1972, 2
        %v2235 = vrot.slane %v1973, 2
        %v2236 = vsel %vm927, %v2234, %v2235
        %v2237 = vrot.slane %v1974, 2
        %v2238 = vsel %vm927, %v2235, %v2237
        %v2239 = vrot.slane %v1975, 2
        %v2240 = vrot.slane %v1976, 2
        %v2241 = vsel %vm927, %v2239, %v2240
        %v2242 = vrot.slane %v1977, 2
        %v2243 = vsel %vm927, %v2240, %v2242
        %v2244 = vrot.slane %v1978, 2
        %v2245 = vrot.slane %v1979, 2
        %v2246 = vsel %vm927, %v2244, %v2245
        %v2247 = vrot.slane %v1980, 2
        %v2248 = vsel %vm927, %v2245, %v2247
        %v2249 = vrot.slane %v1981, 2
        %v2250 = vrot.slane %v1982, 2
        %v2251 = vsel %vm927, %v2249, %v2250
        %v2252 = vrot.slane %v1983, 2
        %v2253 = vsel %vm927, %v2250, %v2252
        %v2254 = vrot.slane %v1984, 2
        %v2255 = vrot.slane %v1985, 2
        %v2256 = vsel %vm927, %v2254, %v2255
        %v2257 = vrot.slane %v1986, 2
        %v2258 = vsel %vm927, %v2255, %v2257
        %v2291 = vmax.f32 %v2147, %v2181
        %v2292 = vmax.f32 %v2148, %v2183
        %v2293 = vmax.f32 %v2149, %v2186
        %v2294 = vmax.f32 %v2150, %v2188
        %v2295 = vmax.f32 %v2151, %v2191
        %v2296 = vmax.f32 %v2152, %v2193
        %v2297 = vmax.f32 %v2153, %v2196
        %v2298 = vmax.f32 %v2154, %v2198
        %v2299 = vmax.f32 %v2155, %v2201
        %v2300 = vmax.f32 %v2156, %v2203
        %v2301 = vmax.f32 %v2157, %v2206
        %v2302 = vmax.f32 %v2158, %v2208
        %v2303 = vmax.f32 %v2159, %v2211
        %v2304 = vmax.f32 %v2160, %v2213
        %v2305 = vmax.f32 %v2161, %v2216
        %v2306 = vmax.f32 %v2162, %v2218
        %v2307 = vmax.f32 %v2163, %v2221
        %v2308 = vmax.f32 %v2164, %v2223
        %v2309 = vmax.f32 %v2165, %v2226
        %v2310 = vmax.f32 %v2166, %v2228
        %v2311 = vmax.f32 %v2167, %v2231
        %v2312 = vmax.f32 %v2168, %v2233
        %v2313 = vmax.f32 %v2169, %v2236
        %v2314 = vmax.f32 %v2170, %v2238
        %v2315 = vmax.f32 %v2171, %v2241
        %v2316 = vmax.f32 %v2172, %v2243
        %v2317 = vmax.f32 %v2173, %v2246
        %v2318 = vmax.f32 %v2174, %v2248
        %v2319 = vmax.f32 %v2175, %v2251
        %v2320 = vmax.f32 %v2176, %v2253
        %v2321 = vmax.f32 %v2177, %v2256
        %v2322 = vmax.f32 %v2178, %v2258
        %v2323 = vrot.slane %v1939, 3
        %v2324 = vrot.slane %v1940, 3
        %v2325 = vsel %vm1072, %v2323, %v2324
        %v2326 = vrot.slane %v1941, 3
        %v2327 = vsel %vm1072, %v2324, %v2326
        %v2328 = vrot.slane %v1942, 3
        %v2329 = vrot.slane %v1943, 3
        %v2330 = vsel %vm1072, %v2328, %v2329
        %v2331 = vrot.slane %v1944, 3
        %v2332 = vsel %vm1072, %v2329, %v2331
        %v2333 = vrot.slane %v1945, 3
        %v2334 = vrot.slane %v1946, 3
        %v2335 = vsel %vm1072, %v2333, %v2334
        %v2336 = vrot.slane %v1947, 3
        %v2337 = vsel %vm1072, %v2334, %v2336
        %v2338 = vrot.slane %v1948, 3
        %v2339 = vrot.slane %v1949, 3
        %v2340 = vsel %vm1072, %v2338, %v2339
        %v2341 = vrot.slane %v1950, 3
        %v2342 = vsel %vm1072, %v2339, %v2341
        %v2343 = vrot.slane %v1951, 3
        %v2344 = vrot.slane %v1952, 3
        %v2345 = vsel %vm1072, %v2343, %v2344
        %v2346 = vrot.slane %v1953, 3
        %v2347 = vsel %vm1072, %v2344, %v2346
        %v2348 = vrot.slane %v1954, 3
        %v2349 = vrot.slane %v1955, 3
        %v2350 = vsel %vm1072, %v2348, %v2349
        %v2351 = vrot.slane %v1956, 3
        %v2352 = vsel %vm1072, %v2349, %v2351
        %v2353 = vrot.slane %v1957, 3
        %v2354 = vrot.slane %v1958, 3
        %v2355 = vsel %vm1072, %v2353, %v2354
        %v2356 = vrot.slane %v1959, 3
        %v2357 = vsel %vm1072, %v2354, %v2356
        %v2358 = vrot.slane %v1960, 3
        %v2359 = vrot.slane %v1961, 3
        %v2360 = vsel %vm1072, %v2358, %v2359
        %v2361 = vrot.slane %v1962, 3
        %v2362 = vsel %vm1072, %v2359, %v2361
        %v2363 = vrot.slane %v1963, 3
        %v2364 = vrot.slane %v1964, 3
        %v2365 = vsel %vm1072, %v2363, %v2364
        %v2366 = vrot.slane %v1965, 3
        %v2367 = vsel %vm1072, %v2364, %v2366
        %v2368 = vrot.slane %v1966, 3
        %v2369 = vrot.slane %v1967, 3
        %v2370 = vsel %vm1072, %v2368, %v2369
        %v2371 = vrot.slane %v1968, 3
        %v2372 = vsel %vm1072, %v2369, %v2371
        %v2373 = vrot.slane %v1969, 3
        %v2374 = vrot.slane %v1970, 3
        %v2375 = vsel %vm1072, %v2373, %v2374
        %v2376 = vrot.slane %v1971, 3
        %v2377 = vsel %vm1072, %v2374, %v2376
        %v2378 = vrot.slane %v1972, 3
        %v2379 = vrot.slane %v1973, 3
        %v2380 = vsel %vm1072, %v2378, %v2379
        %v2381 = vrot.slane %v1974, 3
        %v2382 = vsel %vm1072, %v2379, %v2381
        %v2383 = vrot.slane %v1975, 3
        %v2384 = vrot.slane %v1976, 3
        %v2385 = vsel %vm1072, %v2383, %v2384
        %v2386 = vrot.slane %v1977, 3
        %v2387 = vsel %vm1072, %v2384, %v2386
        %v2388 = vrot.slane %v1978, 3
        %v2389 = vrot.slane %v1979, 3
        %v2390 = vsel %vm1072, %v2388, %v2389
        %v2391 = vrot.slane %v1980, 3
        %v2392 = vsel %vm1072, %v2389, %v2391
        %v2393 = vrot.slane %v1981, 3
        %v2394 = vrot.slane %v1982, 3
        %v2395 = vsel %vm1072, %v2393, %v2394
        %v2396 = vrot.slane %v1983, 3
        %v2397 = vsel %vm1072, %v2394, %v2396
        %v2398 = vrot.slane %v1984, 3
        %v2399 = vrot.slane %v1985, 3
        %v2400 = vsel %vm1072, %v2398, %v2399
        %v2401 = vrot.slane %v1986, 3
        %v2402 = vsel %vm1072, %v2399, %v2401
        %v2435 = vmax.f32 %v2291, %v2325
        %v2436 = vmax.f32 %v2292, %v2327
        %v2437 = vmax.f32 %v2293, %v2330
        %v2438 = vmax.f32 %v2294, %v2332
        %v2439 = vmax.f32 %v2295, %v2335
        %v2440 = vmax.f32 %v2296, %v2337
        %v2441 = vmax.f32 %v2297, %v2340
        %v2442 = vmax.f32 %v2298, %v2342
        %v2443 = vmax.f32 %v2299, %v2345
        %v2444 = vmax.f32 %v2300, %v2347
        %v2445 = vmax.f32 %v2301, %v2350
        %v2446 = vmax.f32 %v2302, %v2352
        %v2447 = vmax.f32 %v2303, %v2355
        %v2448 = vmax.f32 %v2304, %v2357
        %v2449 = vmax.f32 %v2305, %v2360
        %v2450 = vmax.f32 %v2306, %v2362
        %v2451 = vmax.f32 %v2307, %v2365
        %v2452 = vmax.f32 %v2308, %v2367
        %v2453 = vmax.f32 %v2309, %v2370
        %v2454 = vmax.f32 %v2310, %v2372
        %v2455 = vmax.f32 %v2311, %v2375
        %v2456 = vmax.f32 %v2312, %v2377
        %v2457 = vmax.f32 %v2313, %v2380
        %v2458 = vmax.f32 %v2314, %v2382
        %v2459 = vmax.f32 %v2315, %v2385
        %v2460 = vmax.f32 %v2316, %v2387
        %v2461 = vmax.f32 %v2317, %v2390
        %v2462 = vmax.f32 %v2318, %v2392
        %v2463 = vmax.f32 %v2319, %v2395
        %v2464 = vmax.f32 %v2320, %v2397
        %v2465 = vmax.f32 %v2321, %v2400
        %v2466 = vmax.f32 %v2322, %v2402
        %v2467 = vrot.slane %v1939, 4
        %v2468 = vrot.slane %v1940, 4
        %v2469 = vsel %vm1217, %v2467, %v2468
        %v2470 = vrot.slane %v1941, 4
        %v2471 = vsel %vm1217, %v2468, %v2470
        %v2472 = vrot.slane %v1942, 4
        %v2473 = vrot.slane %v1943, 4
        %v2474 = vsel %vm1217, %v2472, %v2473
        %v2475 = vrot.slane %v1944, 4
        %v2476 = vsel %vm1217, %v2473, %v2475
        %v2477 = vrot.slane %v1945, 4
        %v2478 = vrot.slane %v1946, 4
        %v2479 = vsel %vm1217, %v2477, %v2478
        %v2480 = vrot.slane %v1947, 4
        %v2481 = vsel %vm1217, %v2478, %v2480
        %v2482 = vrot.slane %v1948, 4
        %v2483 = vrot.slane %v1949, 4
        %v2484 = vsel %vm1217, %v2482, %v2483
        %v2485 = vrot.slane %v1950, 4
        %v2486 = vsel %vm1217, %v2483, %v2485
        %v2487 = vrot.slane %v1951, 4
        %v2488 = vrot.slane %v1952, 4
        %v2489 = vsel %vm1217, %v2487, %v2488
        %v2490 = vrot.slane %v1953, 4
        %v2491 = vsel %vm1217, %v2488, %v2490
        %v2492 = vrot.slane %v1954, 4
        %v2493 = vrot.slane %v1955, 4
        %v2494 = vsel %vm1217, %v2492, %v2493
        %v2495 = vrot.slane %v1956, 4
        %v2496 = vsel %vm1217, %v2493, %v2495
        %v2497 = vrot.slane %v1957, 4
        %v2498 = vrot.slane %v1958, 4
        %v2499 = vsel %vm1217, %v2497, %v2498
        %v2500 = vrot.slane %v1959, 4
        %v2501 = vsel %vm1217, %v2498, %v2500
        %v2502 = vrot.slane %v1960, 4
        %v2503 = vrot.slane %v1961, 4
        %v2504 = vsel %vm1217, %v2502, %v2503
        %v2505 = vrot.slane %v1962, 4
        %v2506 = vsel %vm1217, %v2503, %v2505
        %v2507 = vrot.slane %v1963, 4
        %v2508 = vrot.slane %v1964, 4
        %v2509 = vsel %vm1217, %v2507, %v2508
        %v2510 = vrot.slane %v1965, 4
        %v2511 = vsel %vm1217, %v2508, %v2510
        %v2512 = vrot.slane %v1966, 4
        %v2513 = vrot.slane %v1967, 4
        %v2514 = vsel %vm1217, %v2512, %v2513
        %v2515 = vrot.slane %v1968, 4
        %v2516 = vsel %vm1217, %v2513, %v2515
        %v2517 = vrot.slane %v1969, 4
        %v2518 = vrot.slane %v1970, 4
        %v2519 = vsel %vm1217, %v2517, %v2518
        %v2520 = vrot.slane %v1971, 4
        %v2521 = vsel %vm1217, %v2518, %v2520
        %v2522 = vrot.slane %v1972, 4
        %v2523 = vrot.slane %v1973, 4
        %v2524 = vsel %vm1217, %v2522, %v2523
        %v2525 = vrot.slane %v1974, 4
        %v2526 = vsel %vm1217, %v2523, %v2525
        %v2527 = vrot.slane %v1975, 4
        %v2528 = vrot.slane %v1976, 4
        %v2529 = vsel %vm1217, %v2527, %v2528
        %v2530 = vrot.slane %v1977, 4
        %v2531 = vsel %vm1217, %v2528, %v2530
        %v2532 = vrot.slane %v1978, 4
        %v2533 = vrot.slane %v1979, 4
        %v2534 = vsel %vm1217, %v2532, %v2533
        %v2535 = vrot.slane %v1980, 4
        %v2536 = vsel %vm1217, %v2533, %v2535
        %v2537 = vrot.slane %v1981, 4
        %v2538 = vrot.slane %v1982, 4
        %v2539 = vsel %vm1217, %v2537, %v2538
        %v2540 = vrot.slane %v1983, 4
        %v2541 = vsel %vm1217, %v2538, %v2540
        %v2542 = vrot.slane %v1984, 4
        %v2543 = vrot.slane %v1985, 4
        %v2544 = vsel %vm1217, %v2542, %v2543
        %v2545 = vrot.slane %v1986, 4
        %v2546 = vsel %vm1217, %v2543, %v2545
        %v2579 = vmax.f32 %v2435, %v2469
        %v2580 = vmax.f32 %v2436, %v2471
        %v2581 = vmax.f32 %v2437, %v2474
        %v2582 = vmax.f32 %v2438, %v2476
        %v2583 = vmax.f32 %v2439, %v2479
        %v2584 = vmax.f32 %v2440, %v2481
        %v2585 = vmax.f32 %v2441, %v2484
        %v2586 = vmax.f32 %v2442, %v2486
        %v2587 = vmax.f32 %v2443, %v2489
        %v2588 = vmax.f32 %v2444, %v2491
        %v2589 = vmax.f32 %v2445, %v2494
        %v2590 = vmax.f32 %v2446, %v2496
        %v2591 = vmax.f32 %v2447, %v2499
        %v2592 = vmax.f32 %v2448, %v2501
        %v2593 = vmax.f32 %v2449, %v2504
        %v2594 = vmax.f32 %v2450, %v2506
        %v2595 = vmax.f32 %v2451, %v2509
        %v2596 = vmax.f32 %v2452, %v2511
        %v2597 = vmax.f32 %v2453, %v2514
        %v2598 = vmax.f32 %v2454, %v2516
        %v2599 = vmax.f32 %v2455, %v2519
        %v2600 = vmax.f32 %v2456, %v2521
        %v2601 = vmax.f32 %v2457, %v2524
        %v2602 = vmax.f32 %v2458, %v2526
        %v2603 = vmax.f32 %v2459, %v2529
        %v2604 = vmax.f32 %v2460, %v2531
        %v2605 = vmax.f32 %v2461, %v2534
        %v2606 = vmax.f32 %v2462, %v2536
        %v2607 = vmax.f32 %v2463, %v2539
        %v2608 = vmax.f32 %v2464, %v2541
        %v2609 = vmax.f32 %v2465, %v2544
        %v2610 = vmax.f32 %v2466, %v2546
        %s2611 = scalar_lea.vmem [#allocation6], 128
        %v2612 = vld [vmem:[%s2611] sm:$0xff]
        %v2613 = vld [vmem:[%s2611 + $0x8] sm:$0xff]
        %v2614 = vld [vmem:[%s2611 + $0x10] sm:$0xff]
        %v2615 = vld [vmem:[%s2611 + $0x18] sm:$0xff]
        %v2616 = vld [vmem:[%s2611 + $0x20] sm:$0xff]
        %v2617 = vld [vmem:[%s2611 + $0x28] sm:$0xff]
        %v2618 = vld [vmem:[%s2611 + $0x30] sm:$0xff]
        %v2619 = vld [vmem:[%s2611 + $0x38] sm:$0xff]
        %v2620 = vld [vmem:[%s2611 + $0x40] sm:$0xff]
        %v2621 = vld [vmem:[%s2611 + $0x48] sm:$0xff]
        %v2622 = vld [vmem:[%s2611 + $0x50] sm:$0xff]
        %v2623 = vld [vmem:[%s2611 + $0x58] sm:$0xff]
        %v2624 = vld [vmem:[%s2611 + $0x60] sm:$0xff]
        %v2625 = vld [vmem:[%s2611 + $0x68] sm:$0xff]
        %v2626 = vld [vmem:[%s2611 + $0x70] sm:$0xff]
        %v2627 = vld [vmem:[%s2611 + $0x78] sm:$0xff]
        %2628 = vmatpush.msra.mxu0 %v2627
        %2629 = vmatpush.msra.mxu0 %v2626
        %2630 = vmatpush.msra.mxu0 %v2625
        %2631 = vmatpush.msra.mxu0 %v2624
        %2632 = vmatpush.msra.mxu0 %v2623
        %2633 = vmatpush.msra.mxu0 %v2622
        %2634 = vmatpush.msra.mxu0 %v2621
        %2635 = vmatpush.msra.mxu0 %v2620
        %2636 = vmatpush.msra.mxu0 %v2619
        %2637 = vmatpush.msra.mxu0 %v2618
        %2638 = vmatpush.msra.mxu0 %v2617
        %2639 = vmatpush.msra.mxu0 %v2616
        %2640 = vmatpush.msra.mxu0 %v2615
        %2641 = vmatpush.msra.mxu0 %v2614
        %2642 = vmatpush.msra.mxu0 %v2613
        %2643 = vmatpush.msra.mxu0 %v2612
        %2644 = vmatmul.f32.gmra.mxu0 %v2579
        %v2645 = vpop.f32.mrf.mxu0
        %v2646 = vadd.f32 0.0, %v2645
        %2647 = vmatmul.f32.gmra.mxu0 %v2580
        %v2648 = vpop.f32.mrf.mxu0
        %v2649 = vadd.f32 0.0, %v2648
        %2650 = vmatmul.f32.gmra.mxu0 %v2581
        %v2651 = vpop.f32.mrf.mxu0
        %v2652 = vadd.f32 0.0, %v2651
        %2653 = vmatmul.f32.gmra.mxu0 %v2582
        %v2654 = vpop.f32.mrf.mxu0
        %v2655 = vadd.f32 0.0, %v2654
        %2656 = vmatmul.f32.gmra.mxu0 %v2583
        %v2657 = vpop.f32.mrf.mxu0
        %v2658 = vadd.f32 0.0, %v2657
        %2659 = vmatmul.f32.gmra.mxu0 %v2584
        %v2660 = vpop.f32.mrf.mxu0
        %v2661 = vadd.f32 0.0, %v2660
        %2662 = vmatmul.f32.gmra.mxu0 %v2585
        %v2663 = vpop.f32.mrf.mxu0
        %v2664 = vadd.f32 0.0, %v2663
        %2665 = vmatmul.f32.gmra.mxu0 %v2586
        %v2666 = vpop.f32.mrf.mxu0
        %v2667 = vadd.f32 0.0, %v2666
        %2668 = vmatmul.f32.gmra.mxu0 %v2587
        %v2669 = vpop.f32.mrf.mxu0
        %v2670 = vadd.f32 0.0, %v2669
        %2671 = vmatmul.f32.gmra.mxu0 %v2588
        %v2672 = vpop.f32.mrf.mxu0
        %v2673 = vadd.f32 0.0, %v2672
        %2674 = vmatmul.f32.gmra.mxu0 %v2589
        %v2675 = vpop.f32.mrf.mxu0
        %v2676 = vadd.f32 0.0, %v2675
        %2677 = vmatmul.f32.gmra.mxu0 %v2590
        %v2678 = vpop.f32.mrf.mxu0
        %v2679 = vadd.f32 0.0, %v2678
        %2680 = vmatmul.f32.gmra.mxu0 %v2591
        %v2681 = vpop.f32.mrf.mxu0
        %v2682 = vadd.f32 0.0, %v2681
        %2683 = vmatmul.f32.gmra.mxu0 %v2592
        %v2684 = vpop.f32.mrf.mxu0
        %v2685 = vadd.f32 0.0, %v2684
        %2686 = vmatmul.f32.gmra.mxu0 %v2593
        %v2687 = vpop.f32.mrf.mxu0
        %v2688 = vadd.f32 0.0, %v2687
        %2689 = vmatmul.f32.gmra.mxu0 %v2594
        %v2690 = vpop.f32.mrf.mxu0
        %v2691 = vadd.f32 0.0, %v2690
        %2692 = vmatmul.f32.gmra.mxu0 %v2595
        %v2693 = vpop.f32.mrf.mxu0
        %v2694 = vadd.f32 0.0, %v2693
        %2695 = vmatmul.f32.gmra.mxu0 %v2596
        %v2696 = vpop.f32.mrf.mxu0
        %v2697 = vadd.f32 0.0, %v2696
        %2698 = vmatmul.f32.gmra.mxu0 %v2597
        %v2699 = vpop.f32.mrf.mxu0
        %v2700 = vadd.f32 0.0, %v2699
        %2701 = vmatmul.f32.gmra.mxu0 %v2598
        %v2702 = vpop.f32.mrf.mxu0
        %v2703 = vadd.f32 0.0, %v2702
        %2704 = vmatmul.f32.gmra.mxu0 %v2599
        %v2705 = vpop.f32.mrf.mxu0
        %v2706 = vadd.f32 0.0, %v2705
        %2707 = vmatmul.f32.gmra.mxu0 %v2600
        %v2708 = vpop.f32.mrf.mxu0
        %v2709 = vadd.f32 0.0, %v2708
        %2710 = vmatmul.f32.gmra.mxu0 %v2601
        %v2711 = vpop.f32.mrf.mxu0
        %v2712 = vadd.f32 0.0, %v2711
        %2713 = vmatmul.f32.gmra.mxu0 %v2602
        %v2714 = vpop.f32.mrf.mxu0
        %v2715 = vadd.f32 0.0, %v2714
        %2716 = vmatmul.f32.gmra.mxu0 %v2603
        %v2717 = vpop.f32.mrf.mxu0
        %v2718 = vadd.f32 0.0, %v2717
        %2719 = vmatmul.f32.gmra.mxu0 %v2604
        %v2720 = vpop.f32.mrf.mxu0
        %v2721 = vadd.f32 0.0, %v2720
        %2722 = vmatmul.f32.gmra.mxu0 %v2605
        %v2723 = vpop.f32.mrf.mxu0
        %v2724 = vadd.f32 0.0, %v2723
        %2725 = vmatmul.f32.gmra.mxu0 %v2606
        %v2726 = vpop.f32.mrf.mxu0
        %v2727 = vadd.f32 0.0, %v2726
        %2728 = vmatmul.f32.gmra.mxu0 %v2607
        %v2729 = vpop.f32.mrf.mxu0
        %v2730 = vadd.f32 0.0, %v2729
        %2731 = vmatmul.f32.gmra.mxu0 %v2608
        %v2732 = vpop.f32.mrf.mxu0
        %v2733 = vadd.f32 0.0, %v2732
        %2734 = vmatmul.f32.gmra.mxu0 %v2609
        %v2735 = vpop.f32.mrf.mxu0
        %v2736 = vadd.f32 0.0, %v2735
        %2737 = vmatmul.f32.gmra.mxu0 %v2610
        %v2738 = vpop.f32.mrf.mxu0
        %v2739 = vadd.f32 0.0, %v2738
        %2740 = vdwg.mxu0
        %v2741 = vadd.f32 %v1491, %v2646
        %v2742 = vadd.f32 %v1492, %v2649
        %v2743 = vadd.f32 %v1493, %v2652
        %v2744 = vadd.f32 %v1494, %v2655
        %v2745 = vadd.f32 %v1495, %v2658
        %v2746 = vadd.f32 %v1496, %v2661
        %v2747 = vadd.f32 %v1497, %v2664
        %v2748 = vadd.f32 %v1498, %v2667
        %v2749 = vadd.f32 %v1499, %v2670
        %v2750 = vadd.f32 %v1500, %v2673
        %v2751 = vadd.f32 %v1501, %v2676
        %v2752 = vadd.f32 %v1502, %v2679
        %v2753 = vadd.f32 %v1503, %v2682
        %v2754 = vadd.f32 %v1504, %v2685
        %v2755 = vadd.f32 %v1505, %v2688
        %v2756 = vadd.f32 %v1506, %v2691
        %v2757 = vadd.f32 %v1507, %v2694
        %v2758 = vadd.f32 %v1508, %v2697
        %v2759 = vadd.f32 %v1509, %v2700
        %v2760 = vadd.f32 %v1510, %v2703
        %v2761 = vadd.f32 %v1511, %v2706
        %v2762 = vadd.f32 %v1512, %v2709
        %v2763 = vadd.f32 %v1513, %v2712
        %v2764 = vadd.f32 %v1514, %v2715
        %v2765 = vadd.f32 %v1515, %v2718
        %v2766 = vadd.f32 %v1516, %v2721
        %v2767 = vadd.f32 %v1517, %v2724
        %v2768 = vadd.f32 %v1518, %v2727
        %v2769 = vadd.f32 %v1519, %v2730
        %v2770 = vadd.f32 %v1520, %v2733
        %v2771 = vadd.f32 %v1521, %v2736
        %v2772 = vadd.f32 %v1522, %v2739
        %2773 = vst [vmem:[%s266 + $0x2] sm:$0xff] %v2646
        %2774 = vst [vmem:[%s266 + $0xa] sm:$0xff] %v2649
        %2775 = vst [vmem:[%s266 + $0x1a] sm:$0xff] %v2652
        %2776 = vst [vmem:[%s266 + $0x22] sm:$0xff] %v2655
        %2777 = vst [vmem:[%s266 + $0x32] sm:$0xff] %v2658
        %2778 = vst [vmem:[%s266 + $0x3a] sm:$0xff] %v2661
        %2779 = vst [vmem:[%s266 + $0x4a] sm:$0xff] %v2664
        %2780 = vst [vmem:[%s266 + $0x52] sm:$0xff] %v2667
        %2781 = vst [vmem:[%s266 + $0x62] sm:$0xff] %v2670
        %2782 = vst [vmem:[%s266 + $0x6a] sm:$0xff] %v2673
        %2783 = vst [vmem:[%s266 + $0x7a] sm:$0xff] %v2676
        %2784 = vst [vmem:[%s266 + $0x82] sm:$0xff] %v2679
        %2785 = vst [vmem:[%s266 + $0x92] sm:$0xff] %v2682
        %2786 = vst [vmem:[%s266 + $0x9a] sm:$0xff] %v2685
        %2787 = vst [vmem:[%s266 + $0xaa] sm:$0xff] %v2688
        %2788 = vst [vmem:[%s266 + $0xb2] sm:$0xff] %v2691
        %2789 = vst [vmem:[%s266 + $0xc2] sm:$0xff] %v2694
        %2790 = vst [vmem:[%s266 + $0xca] sm:$0xff] %v2697
        %2791 = vst [vmem:[%s266 + $0xda] sm:$0xff] %v2700
        %2792 = vst [vmem:[%s266 + $0xe2] sm:$0xff] %v2703
        %2793 = vst [vmem:[%s266 + $0xf2] sm:$0xff] %v2706
        %2794 = vst [vmem:[%s266 + $0xfa] sm:$0xff] %v2709
        %2795 = vst [vmem:[%s266 + $0x10a] sm:$0xff] %v2712
        %2796 = vst [vmem:[%s266 + $0x112] sm:$0xff] %v2715
        %2797 = vst [vmem:[%s266 + $0x122] sm:$0xff] %v2718
        %2798 = vst [vmem:[%s266 + $0x12a] sm:$0xff] %v2721
        %2799 = vst [vmem:[%s266 + $0x13a] sm:$0xff] %v2724
        %2800 = vst [vmem:[%s266 + $0x142] sm:$0xff] %v2727
        %2801 = vst [vmem:[%s266 + $0x152] sm:$0xff] %v2730
        %2802 = vst [vmem:[%s266 + $0x15a] sm:$0xff] %v2733
        %2803 = vst [vmem:[%s266 + $0x16a] sm:$0xff] %v2736
        %2804 = vst [vmem:[%s266 + $0x172] sm:$0xff] %v2739
        %v2805 = vld [vmem:[#allocation2] sm:$0xff]
        %v2806 = vld [vmem:[#allocation2 + $0x8] sm:$0xff]
        %v2807 = vld [vmem:[#allocation2 + $0x10] sm:$0xf]
        %v2808 = vld [vmem:[#allocation2 + $0x18] sm:$0xff]
        %v2809 = vld [vmem:[#allocation2 + $0x20] sm:$0xff]
        %v2810 = vld [vmem:[#allocation2 + $0x28] sm:$0xf]
        %v2811 = vld [vmem:[#allocation2 + $0x30] sm:$0xff]
        %v2812 = vld [vmem:[#allocation2 + $0x38] sm:$0xff]
        %v2813 = vld [vmem:[#allocation2 + $0x40] sm:$0xf]
        %v2814 = vld [vmem:[#allocation2 + $0x48] sm:$0xff]
        %v2815 = vld [vmem:[#allocation2 + $0x50] sm:$0xff]
        %v2816 = vld [vmem:[#allocation2 + $0x58] sm:$0xf]
        %v2817 = vld [vmem:[#allocation2 + $0x60] sm:$0xff]
        %v2818 = vld [vmem:[#allocation2 + $0x68] sm:$0xff]
        %v2819 = vld [vmem:[#allocation2 + $0x70] sm:$0xf]
        %v2820 = vld [vmem:[#allocation2 + $0x78] sm:$0xff]
        %v2821 = vld [vmem:[#allocation2 + $0x80] sm:$0xff]
        %v2822 = vld [vmem:[#allocation2 + $0x88] sm:$0xf]
        %v2823 = vld [vmem:[#allocation2 + $0x90] sm:$0xff]
        %v2824 = vld [vmem:[#allocation2 + $0x98] sm:$0xff]
        %v2825 = vld [vmem:[#allocation2 + $0xa0] sm:$0xf]
        %v2826 = vld [vmem:[#allocation2 + $0xa8] sm:$0xff]
        %v2827 = vld [vmem:[#allocation2 + $0xb0] sm:$0xff]
        %v2828 = vld [vmem:[#allocation2 + $0xb8] sm:$0xf]
        %v2829 = vld [vmem:[#allocation2 + $0xc0] sm:$0xff]
        %v2830 = vld [vmem:[#allocation2 + $0xc8] sm:$0xff]
        %v2831 = vld [vmem:[#allocation2 + $0xd0] sm:$0xf]
        %v2832 = vld [vmem:[#allocation2 + $0xd8] sm:$0xff]
        %v2833 = vld [vmem:[#allocation2 + $0xe0] sm:$0xff]
        %v2834 = vld [vmem:[#allocation2 + $0xe8] sm:$0xf]
        %v2835 = vld [vmem:[#allocation2 + $0xf0] sm:$0xff]
        %v2836 = vld [vmem:[#allocation2 + $0xf8] sm:$0xff]
        %v2837 = vld [vmem:[#allocation2 + $0x100] sm:$0xf]
        %v2838 = vld [vmem:[#allocation2 + $0x108] sm:$0xff]
        %v2839 = vld [vmem:[#allocation2 + $0x110] sm:$0xff]
        %v2840 = vld [vmem:[#allocation2 + $0x118] sm:$0xf]
        %v2841 = vld [vmem:[#allocation2 + $0x120] sm:$0xff]
        %v2842 = vld [vmem:[#allocation2 + $0x128] sm:$0xff]
        %v2843 = vld [vmem:[#allocation2 + $0x130] sm:$0xf]
        %v2844 = vld [vmem:[#allocation2 + $0x138] sm:$0xff]
        %v2845 = vld [vmem:[#allocation2 + $0x140] sm:$0xff]
        %v2846 = vld [vmem:[#allocation2 + $0x148] sm:$0xf]
        %v2847 = vld [vmem:[#allocation2 + $0x150] sm:$0xff]
        %v2848 = vld [vmem:[#allocation2 + $0x158] sm:$0xff]
        %v2849 = vld [vmem:[#allocation2 + $0x160] sm:$0xf]
        %v2850 = vld [vmem:[#allocation2 + $0x168] sm:$0xff]
        %v2851 = vld [vmem:[#allocation2 + $0x170] sm:$0xff]
        %v2852 = vld [vmem:[#allocation2 + $0x178] sm:$0xf]
        %v2853 = vld [vmem:[%s347] sm:$0xff]
        %v2854 = vld [vmem:[%s347 + $0x8] sm:$0xff]
        %v2855 = vld [vmem:[%s347 + $0x10] sm:$0xf]
        %v2856 = vld [vmem:[%s347 + $0x18] sm:$0xff]
        %v2857 = vld [vmem:[%s347 + $0x20] sm:$0xff]
        %v2858 = vld [vmem:[%s347 + $0x28] sm:$0xf]
        %v2859 = vld [vmem:[%s347 + $0x30] sm:$0xff]
        %v2860 = vld [vmem:[%s347 + $0x38] sm:$0xff]
        %v2861 = vld [vmem:[%s347 + $0x40] sm:$0xf]
        %v2862 = vld [vmem:[%s347 + $0x48] sm:$0xff]
        %v2863 = vld [vmem:[%s347 + $0x50] sm:$0xff]
        %v2864 = vld [vmem:[%s347 + $0x58] sm:$0xf]
        %v2865 = vld [vmem:[%s347 + $0x60] sm:$0xff]
        %v2866 = vld [vmem:[%s347 + $0x68] sm:$0xff]
        %v2867 = vld [vmem:[%s347 + $0x70] sm:$0xf]
        %v2868 = vld [vmem:[%s347 + $0x78] sm:$0xff]
        %v2869 = vld [vmem:[%s347 + $0x80] sm:$0xff]
        %v2870 = vld [vmem:[%s347 + $0x88] sm:$0xf]
        %v2871 = vld [vmem:[%s347 + $0x90] sm:$0xff]
        %v2872 = vld [vmem:[%s347 + $0x98] sm:$0xff]
        %v2873 = vld [vmem:[%s347 + $0xa0] sm:$0xf]
        %v2874 = vld [vmem:[%s347 + $0xa8] sm:$0xff]
        %v2875 = vld [vmem:[%s347 + $0xb0] sm:$0xff]
        %v2876 = vld [vmem:[%s347 + $0xb8] sm:$0xf]
        %v2877 = vld [vmem:[%s347 + $0xc0] sm:$0xff]
        %v2878 = vld [vmem:[%s347 + $0xc8] sm:$0xff]
        %v2879 = vld [vmem:[%s347 + $0xd0] sm:$0xf]
        %v2880 = vld [vmem:[%s347 + $0xd8] sm:$0xff]
        %v2881 = vld [vmem:[%s347 + $0xe0] sm:$0xff]
        %v2882 = vld [vmem:[%s347 + $0xe8] sm:$0xf]
        %v2883 = vld [vmem:[%s347 + $0xf0] sm:$0xff]
        %v2884 = vld [vmem:[%s347 + $0xf8] sm:$0xff]
        %v2885 = vld [vmem:[%s347 + $0x100] sm:$0xf]
        %v2886 = vld [vmem:[%s347 + $0x108] sm:$0xff]
        %v2887 = vld [vmem:[%s347 + $0x110] sm:$0xff]
        %v2888 = vld [vmem:[%s347 + $0x118] sm:$0xf]
        %v2889 = vld [vmem:[%s347 + $0x120] sm:$0xff]
        %v2890 = vld [vmem:[%s347 + $0x128] sm:$0xff]
        %v2891 = vld [vmem:[%s347 + $0x130] sm:$0xf]
        %v2892 = vld [vmem:[%s347 + $0x138] sm:$0xff]
        %v2893 = vld [vmem:[%s347 + $0x140] sm:$0xff]
        %v2894 = vld [vmem:[%s347 + $0x148] sm:$0xf]
        %v2895 = vld [vmem:[%s347 + $0x150] sm:$0xff]
        %v2896 = vld [vmem:[%s347 + $0x158] sm:$0xff]
        %v2897 = vld [vmem:[%s347 + $0x160] sm:$0xf]
        %v2898 = vld [vmem:[%s347 + $0x168] sm:$0xff]
        %v2899 = vld [vmem:[%s347 + $0x170] sm:$0xff]
        %v2900 = vld [vmem:[%s347 + $0x178] sm:$0xf]
        %v2901 = vmax.f32 %v2805, %v2853
        %v2902 = vmax.f32 %v2806, %v2854
        %v2903 = vmax.f32 %v2807, %v2855
        %v2904 = vmax.f32 %v2808, %v2856
        %v2905 = vmax.f32 %v2809, %v2857
        %v2906 = vmax.f32 %v2810, %v2858
        %v2907 = vmax.f32 %v2811, %v2859
        %v2908 = vmax.f32 %v2812, %v2860
        %v2909 = vmax.f32 %v2813, %v2861
        %v2910 = vmax.f32 %v2814, %v2862
        %v2911 = vmax.f32 %v2815, %v2863
        %v2912 = vmax.f32 %v2816, %v2864
        %v2913 = vmax.f32 %v2817, %v2865
        %v2914 = vmax.f32 %v2818, %v2866
        %v2915 = vmax.f32 %v2819, %v2867
        %v2916 = vmax.f32 %v2820, %v2868
        %v2917 = vmax.f32 %v2821, %v2869
        %v2918 = vmax.f32 %v2822, %v2870
        %v2919 = vmax.f32 %v2823, %v2871
        %v2920 = vmax.f32 %v2824, %v2872
        %v2921 = vmax.f32 %v2825, %v2873
        %v2922 = vmax.f32 %v2826, %v2874
        %v2923 = vmax.f32 %v2827, %v2875
        %v2924 = vmax.f32 %v2828, %v2876
        %v2925 = vmax.f32 %v2829, %v2877
        %v2926 = vmax.f32 %v2830, %v2878
        %v2927 = vmax.f32 %v2831, %v2879
        %v2928 = vmax.f32 %v2832, %v2880
        %v2929 = vmax.f32 %v2833, %v2881
        %v2930 = vmax.f32 %v2834, %v2882
        %v2931 = vmax.f32 %v2835, %v2883
        %v2932 = vmax.f32 %v2836, %v2884
        %v2933 = vmax.f32 %v2837, %v2885
        %v2934 = vmax.f32 %v2838, %v2886
        %v2935 = vmax.f32 %v2839, %v2887
        %v2936 = vmax.f32 %v2840, %v2888
        %v2937 = vmax.f32 %v2841, %v2889
        %v2938 = vmax.f32 %v2842, %v2890
        %v2939 = vmax.f32 %v2843, %v2891
        %v2940 = vmax.f32 %v2844, %v2892
        %v2941 = vmax.f32 %v2845, %v2893
        %v2942 = vmax.f32 %v2846, %v2894
        %v2943 = vmax.f32 %v2847, %v2895
        %v2944 = vmax.f32 %v2848, %v2896
        %v2945 = vmax.f32 %v2849, %v2897
        %v2946 = vmax.f32 %v2850, %v2898
        %v2947 = vmax.f32 %v2851, %v2899
        %v2948 = vmax.f32 %v2852, %v2900
        %v2949 = vld [vmem:[%s266] sm:$0xff]
        %v2950 = vld [vmem:[%s266 + $0x8] sm:$0xff]
        %v2951 = vld [vmem:[%s266 + $0x10] sm:$0xf]
        %v2952 = vld [vmem:[%s266 + $0x18] sm:$0xff]
        %v2953 = vld [vmem:[%s266 + $0x20] sm:$0xff]
        %v2954 = vld [vmem:[%s266 + $0x28] sm:$0xf]
        %v2955 = vld [vmem:[%s266 + $0x30] sm:$0xff]
        %v2956 = vld [vmem:[%s266 + $0x38] sm:$0xff]
        %v2957 = vld [vmem:[%s266 + $0x40] sm:$0xf]
        %v2958 = vld [vmem:[%s266 + $0x48] sm:$0xff]
        %v2959 = vld [vmem:[%s266 + $0x50] sm:$0xff]
        %v2960 = vld [vmem:[%s266 + $0x58] sm:$0xf]
        %v2961 = vld [vmem:[%s266 + $0x60] sm:$0xff]
        %v2962 = vld [vmem:[%s266 + $0x68] sm:$0xff]
        %v2963 = vld [vmem:[%s266 + $0x70] sm:$0xf]
        %v2964 = vld [vmem:[%s266 + $0x78] sm:$0xff]
        %v2965 = vld [vmem:[%s266 + $0x80] sm:$0xff]
        %v2966 = vld [vmem:[%s266 + $0x88] sm:$0xf]
        %v2967 = vld [vmem:[%s266 + $0x90] sm:$0xff]
        %v2968 = vld [vmem:[%s266 + $0x98] sm:$0xff]
        %v2969 = vld [vmem:[%s266 + $0xa0] sm:$0xf]
        %v2970 = vld [vmem:[%s266 + $0xa8] sm:$0xff]
        %v2971 = vld [vmem:[%s266 + $0xb0] sm:$0xff]
        %v2972 = vld [vmem:[%s266 + $0xb8] sm:$0xf]
        %v2973 = vld [vmem:[%s266 + $0xc0] sm:$0xff]
        %v2974 = vld [vmem:[%s266 + $0xc8] sm:$0xff]
        %v2975 = vld [vmem:[%s266 + $0xd0] sm:$0xf]
        %v2976 = vld [vmem:[%s266 + $0xd8] sm:$0xff]
        %v2977 = vld [vmem:[%s266 + $0xe0] sm:$0xff]
        %v2978 = vld [vmem:[%s266 + $0xe8] sm:$0xf]
        %v2979 = vld [vmem:[%s266 + $0xf0] sm:$0xff]
        %v2980 = vld [vmem:[%s266 + $0xf8] sm:$0xff]
        %v2981 = vld [vmem:[%s266 + $0x100] sm:$0xf]
        %v2982 = vld [vmem:[%s266 + $0x108] sm:$0xff]
        %v2983 = vld [vmem:[%s266 + $0x110] sm:$0xff]
        %v2984 = vld [vmem:[%s266 + $0x118] sm:$0xf]
        %v2985 = vld [vmem:[%s266 + $0x120] sm:$0xff]
        %v2986 = vld [vmem:[%s266 + $0x128] sm:$0xff]
        %v2987 = vld [vmem:[%s266 + $0x130] sm:$0xf]
        %v2988 = vld [vmem:[%s266 + $0x138] sm:$0xff]
        %v2989 = vld [vmem:[%s266 + $0x140] sm:$0xff]
        %v2990 = vld [vmem:[%s266 + $0x148] sm:$0xf]
        %v2991 = vld [vmem:[%s266 + $0x150] sm:$0xff]
        %v2992 = vld [vmem:[%s266 + $0x158] sm:$0xff]
        %v2993 = vld [vmem:[%s266 + $0x160] sm:$0xf]
        %v2994 = vld [vmem:[%s266 + $0x168] sm:$0xff]
        %v2995 = vld [vmem:[%s266 + $0x170] sm:$0xff]
        %v2996 = vld [vmem:[%s266 + $0x178] sm:$0xf]
        %v2997 = vmax.f32 %v2901, %v2949
        %v2998 = vmax.f32 %v2902, %v2950
        %v2999 = vmax.f32 %v2903, %v2951
        %v3000 = vmax.f32 %v2904, %v2952
        %v3001 = vmax.f32 %v2905, %v2953
        %v3002 = vmax.f32 %v2906, %v2954
        %v3003 = vmax.f32 %v2907, %v2955
        %v3004 = vmax.f32 %v2908, %v2956
        %v3005 = vmax.f32 %v2909, %v2957
        %v3006 = vmax.f32 %v2910, %v2958
        %v3007 = vmax.f32 %v2911, %v2959
        %v3008 = vmax.f32 %v2912, %v2960
        %v3009 = vmax.f32 %v2913, %v2961
        %v3010 = vmax.f32 %v2914, %v2962
        %v3011 = vmax.f32 %v2915, %v2963
        %v3012 = vmax.f32 %v2916, %v2964
        %v3013 = vmax.f32 %v2917, %v2965
        %v3014 = vmax.f32 %v2918, %v2966
        %v3015 = vmax.f32 %v2919, %v2967
        %v3016 = vmax.f32 %v2920, %v2968
        %v3017 = vmax.f32 %v2921, %v2969
        %v3018 = vmax.f32 %v2922, %v2970
        %v3019 = vmax.f32 %v2923, %v2971
        %v3020 = vmax.f32 %v2924, %v2972
        %v3021 = vmax.f32 %v2925, %v2973
        %v3022 = vmax.f32 %v2926, %v2974
        %v3023 = vmax.f32 %v2927, %v2975
        %v3024 = vmax.f32 %v2928, %v2976
        %v3025 = vmax.f32 %v2929, %v2977
        %v3026 = vmax.f32 %v2930, %v2978
        %v3027 = vmax.f32 %v2931, %v2979
        %v3028 = vmax.f32 %v2932, %v2980
        %v3029 = vmax.f32 %v2933, %v2981
        %v3030 = vmax.f32 %v2934, %v2982
        %v3031 = vmax.f32 %v2935, %v2983
        %v3032 = vmax.f32 %v2936, %v2984
        %v3033 = vmax.f32 %v2937, %v2985
        %v3034 = vmax.f32 %v2938, %v2986
        %v3035 = vmax.f32 %v2939, %v2987
        %v3036 = vmax.f32 %v2940, %v2988
        %v3037 = vmax.f32 %v2941, %v2989
        %v3038 = vmax.f32 %v2942, %v2990
        %v3039 = vmax.f32 %v2943, %v2991
        %v3040 = vmax.f32 %v2944, %v2992
        %v3041 = vmax.f32 %v2945, %v2993
        %v3042 = vmax.f32 %v2946, %v2994
        %v3043 = vmax.f32 %v2947, %v2995
        %v3044 = vmax.f32 %v2948, %v2996
        %v3045 = vld [vmem:[%s540] sm:$0xff]
        %v3046 = vld [vmem:[%s540 + $0x8] sm:$0xff]
        %v3047 = vld [vmem:[%s540 + $0x10] sm:$0xf]
        %v3048 = vld [vmem:[%s540 + $0x18] sm:$0xff]
        %v3049 = vld [vmem:[%s540 + $0x20] sm:$0xff]
        %v3050 = vld [vmem:[%s540 + $0x28] sm:$0xf]
        %v3051 = vld [vmem:[%s540 + $0x30] sm:$0xff]
        %v3052 = vld [vmem:[%s540 + $0x38] sm:$0xff]
        %v3053 = vld [vmem:[%s540 + $0x40] sm:$0xf]
        %v3054 = vld [vmem:[%s540 + $0x48] sm:$0xff]
        %v3055 = vld [vmem:[%s540 + $0x50] sm:$0xff]
        %v3056 = vld [vmem:[%s540 + $0x58] sm:$0xf]
        %v3057 = vld [vmem:[%s540 + $0x60] sm:$0xff]
        %v3058 = vld [vmem:[%s540 + $0x68] sm:$0xff]
        %v3059 = vld [vmem:[%s540 + $0x70] sm:$0xf]
        %v3060 = vld [vmem:[%s540 + $0x78] sm:$0xff]
        %v3061 = vld [vmem:[%s540 + $0x80] sm:$0xff]
        %v3062 = vld [vmem:[%s540 + $0x88] sm:$0xf]
        %v3063 = vld [vmem:[%s540 + $0x90] sm:$0xff]
        %v3064 = vld [vmem:[%s540 + $0x98] sm:$0xff]
        %v3065 = vld [vmem:[%s540 + $0xa0] sm:$0xf]
        %v3066 = vld [vmem:[%s540 + $0xa8] sm:$0xff]
        %v3067 = vld [vmem:[%s540 + $0xb0] sm:$0xff]
        %v3068 = vld [vmem:[%s540 + $0xb8] sm:$0xf]
        %v3069 = vld [vmem:[%s540 + $0xc0] sm:$0xff]
        %v3070 = vld [vmem:[%s540 + $0xc8] sm:$0xff]
        %v3071 = vld [vmem:[%s540 + $0xd0] sm:$0xf]
        %v3072 = vld [vmem:[%s540 + $0xd8] sm:$0xff]
        %v3073 = vld [vmem:[%s540 + $0xe0] sm:$0xff]
        %v3074 = vld [vmem:[%s540 + $0xe8] sm:$0xf]
        %v3075 = vld [vmem:[%s540 + $0xf0] sm:$0xff]
        %v3076 = vld [vmem:[%s540 + $0xf8] sm:$0xff]
        %v3077 = vld [vmem:[%s540 + $0x100] sm:$0xf]
        %v3078 = vld [vmem:[%s540 + $0x108] sm:$0xff]
        %v3079 = vld [vmem:[%s540 + $0x110] sm:$0xff]
        %v3080 = vld [vmem:[%s540 + $0x118] sm:$0xf]
        %v3081 = vld [vmem:[%s540 + $0x120] sm:$0xff]
        %v3082 = vld [vmem:[%s540 + $0x128] sm:$0xff]
        %v3083 = vld [vmem:[%s540 + $0x130] sm:$0xf]
        %v3084 = vld [vmem:[%s540 + $0x138] sm:$0xff]
        %v3085 = vld [vmem:[%s540 + $0x140] sm:$0xff]
        %v3086 = vld [vmem:[%s540 + $0x148] sm:$0xf]
        %v3087 = vld [vmem:[%s540 + $0x150] sm:$0xff]
        %v3088 = vld [vmem:[%s540 + $0x158] sm:$0xff]
        %v3089 = vld [vmem:[%s540 + $0x160] sm:$0xf]
        %v3090 = vld [vmem:[%s540 + $0x168] sm:$0xff]
        %v3091 = vld [vmem:[%s540 + $0x170] sm:$0xff]
        %v3092 = vld [vmem:[%s540 + $0x178] sm:$0xf]
        %v3093 = vmax.f32 %v2997, %v3045
        %v3094 = vmax.f32 %v2998, %v3046
        %v3095 = vmax.f32 %v2999, %v3047
        %v3096 = vmax.f32 %v3000, %v3048
        %v3097 = vmax.f32 %v3001, %v3049
        %v3098 = vmax.f32 %v3002, %v3050
        %v3099 = vmax.f32 %v3003, %v3051
        %v3100 = vmax.f32 %v3004, %v3052
        %v3101 = vmax.f32 %v3005, %v3053
        %v3102 = vmax.f32 %v3006, %v3054
        %v3103 = vmax.f32 %v3007, %v3055
        %v3104 = vmax.f32 %v3008, %v3056
        %v3105 = vmax.f32 %v3009, %v3057
        %v3106 = vmax.f32 %v3010, %v3058
        %v3107 = vmax.f32 %v3011, %v3059
        %v3108 = vmax.f32 %v3012, %v3060
        %v3109 = vmax.f32 %v3013, %v3061
        %v3110 = vmax.f32 %v3014, %v3062
        %v3111 = vmax.f32 %v3015, %v3063
        %v3112 = vmax.f32 %v3016, %v3064
        %v3113 = vmax.f32 %v3017, %v3065
        %v3114 = vmax.f32 %v3018, %v3066
        %v3115 = vmax.f32 %v3019, %v3067
        %v3116 = vmax.f32 %v3020, %v3068
        %v3117 = vmax.f32 %v3021, %v3069
        %v3118 = vmax.f32 %v3022, %v3070
        %v3119 = vmax.f32 %v3023, %v3071
        %v3120 = vmax.f32 %v3024, %v3072
        %v3121 = vmax.f32 %v3025, %v3073
        %v3122 = vmax.f32 %v3026, %v3074
        %v3123 = vmax.f32 %v3027, %v3075
        %v3124 = vmax.f32 %v3028, %v3076
        %v3125 = vmax.f32 %v3029, %v3077
        %v3126 = vmax.f32 %v3030, %v3078
        %v3127 = vmax.f32 %v3031, %v3079
        %v3128 = vmax.f32 %v3032, %v3080
        %v3129 = vmax.f32 %v3033, %v3081
        %v3130 = vmax.f32 %v3034, %v3082
        %v3131 = vmax.f32 %v3035, %v3083
        %v3132 = vmax.f32 %v3036, %v3084
        %v3133 = vmax.f32 %v3037, %v3085
        %v3134 = vmax.f32 %v3038, %v3086
        %v3135 = vmax.f32 %v3039, %v3087
        %v3136 = vmax.f32 %v3040, %v3088
        %v3137 = vmax.f32 %v3041, %v3089
        %v3138 = vmax.f32 %v3042, %v3090
        %v3139 = vmax.f32 %v3043, %v3091
        %v3140 = vmax.f32 %v3044, %v3092
        %v3141 = vld [vmem:[%s637] sm:$0xff]
        %v3142 = vld [vmem:[%s637 + $0x8] sm:$0xff]
        %v3143 = vld [vmem:[%s637 + $0x10] sm:$0xf]
        %v3144 = vld [vmem:[%s637 + $0x18] sm:$0xff]
        %v3145 = vld [vmem:[%s637 + $0x20] sm:$0xff]
        %v3146 = vld [vmem:[%s637 + $0x28] sm:$0xf]
        %v3147 = vld [vmem:[%s637 + $0x30] sm:$0xff]
        %v3148 = vld [vmem:[%s637 + $0x38] sm:$0xff]
        %v3149 = vld [vmem:[%s637 + $0x40] sm:$0xf]
        %v3150 = vld [vmem:[%s637 + $0x48] sm:$0xff]
        %v3151 = vld [vmem:[%s637 + $0x50] sm:$0xff]
        %v3152 = vld [vmem:[%s637 + $0x58] sm:$0xf]
        %v3153 = vld [vmem:[%s637 + $0x60] sm:$0xff]
        %v3154 = vld [vmem:[%s637 + $0x68] sm:$0xff]
        %v3155 = vld [vmem:[%s637 + $0x70] sm:$0xf]
        %v3156 = vld [vmem:[%s637 + $0x78] sm:$0xff]
        %v3157 = vld [vmem:[%s637 + $0x80] sm:$0xff]
        %v3158 = vld [vmem:[%s637 + $0x88] sm:$0xf]
        %v3159 = vld [vmem:[%s637 + $0x90] sm:$0xff]
        %v3160 = vld [vmem:[%s637 + $0x98] sm:$0xff]
        %v3161 = vld [vmem:[%s637 + $0xa0] sm:$0xf]
        %v3162 = vld [vmem:[%s637 + $0xa8] sm:$0xff]
        %v3163 = vld [vmem:[%s637 + $0xb0] sm:$0xff]
        %v3164 = vld [vmem:[%s637 + $0xb8] sm:$0xf]
        %v3165 = vld [vmem:[%s637 + $0xc0] sm:$0xff]
        %v3166 = vld [vmem:[%s637 + $0xc8] sm:$0xff]
        %v3167 = vld [vmem:[%s637 + $0xd0] sm:$0xf]
        %v3168 = vld [vmem:[%s637 + $0xd8] sm:$0xff]
        %v3169 = vld [vmem:[%s637 + $0xe0] sm:$0xff]
        %v3170 = vld [vmem:[%s637 + $0xe8] sm:$0xf]
        %v3171 = vld [vmem:[%s637 + $0xf0] sm:$0xff]
        %v3172 = vld [vmem:[%s637 + $0xf8] sm:$0xff]
        %v3173 = vld [vmem:[%s637 + $0x100] sm:$0xf]
        %v3174 = vld [vmem:[%s637 + $0x108] sm:$0xff]
        %v3175 = vld [vmem:[%s637 + $0x110] sm:$0xff]
        %v3176 = vld [vmem:[%s637 + $0x118] sm:$0xf]
        %v3177 = vld [vmem:[%s637 + $0x120] sm:$0xff]
        %v3178 = vld [vmem:[%s637 + $0x128] sm:$0xff]
        %v3179 = vld [vmem:[%s637 + $0x130] sm:$0xf]
        %v3180 = vld [vmem:[%s637 + $0x138] sm:$0xff]
        %v3181 = vld [vmem:[%s637 + $0x140] sm:$0xff]
        %v3182 = vld [vmem:[%s637 + $0x148] sm:$0xf]
        %v3183 = vld [vmem:[%s637 + $0x150] sm:$0xff]
        %v3184 = vld [vmem:[%s637 + $0x158] sm:$0xff]
        %v3185 = vld [vmem:[%s637 + $0x160] sm:$0xf]
        %v3186 = vld [vmem:[%s637 + $0x168] sm:$0xff]
        %v3187 = vld [vmem:[%s637 + $0x170] sm:$0xff]
        %v3188 = vld [vmem:[%s637 + $0x178] sm:$0xf]
        %v3189 = vmax.f32 %v3093, %v3141
        %v3190 = vmax.f32 %v3094, %v3142
        %v3191 = vmax.f32 %v3095, %v3143
        %v3192 = vmax.f32 %v3096, %v3144
        %v3193 = vmax.f32 %v3097, %v3145
        %v3194 = vmax.f32 %v3098, %v3146
        %v3195 = vmax.f32 %v3099, %v3147
        %v3196 = vmax.f32 %v3100, %v3148
        %v3197 = vmax.f32 %v3101, %v3149
        %v3198 = vmax.f32 %v3102, %v3150
        %v3199 = vmax.f32 %v3103, %v3151
        %v3200 = vmax.f32 %v3104, %v3152
        %v3201 = vmax.f32 %v3105, %v3153
        %v3202 = vmax.f32 %v3106, %v3154
        %v3203 = vmax.f32 %v3107, %v3155
        %v3204 = vmax.f32 %v3108, %v3156
        %v3205 = vmax.f32 %v3109, %v3157
        %v3206 = vmax.f32 %v3110, %v3158
        %v3207 = vmax.f32 %v3111, %v3159
        %v3208 = vmax.f32 %v3112, %v3160
        %v3209 = vmax.f32 %v3113, %v3161
        %v3210 = vmax.f32 %v3114, %v3162
        %v3211 = vmax.f32 %v3115, %v3163
        %v3212 = vmax.f32 %v3116, %v3164
        %v3213 = vmax.f32 %v3117, %v3165
        %v3214 = vmax.f32 %v3118, %v3166
        %v3215 = vmax.f32 %v3119, %v3167
        %v3216 = vmax.f32 %v3120, %v3168
        %v3217 = vmax.f32 %v3121, %v3169
        %v3218 = vmax.f32 %v3122, %v3170
        %v3219 = vmax.f32 %v3123, %v3171
        %v3220 = vmax.f32 %v3124, %v3172
        %v3221 = vmax.f32 %v3125, %v3173
        %v3222 = vmax.f32 %v3126, %v3174
        %v3223 = vmax.f32 %v3127, %v3175
        %v3224 = vmax.f32 %v3128, %v3176
        %v3225 = vmax.f32 %v3129, %v3177
        %v3226 = vmax.f32 %v3130, %v3178
        %v3227 = vmax.f32 %v3131, %v3179
        %v3228 = vmax.f32 %v3132, %v3180
        %v3229 = vmax.f32 %v3133, %v3181
        %v3230 = vmax.f32 %v3134, %v3182
        %v3231 = vmax.f32 %v3135, %v3183
        %v3232 = vmax.f32 %v3136, %v3184
        %v3233 = vmax.f32 %v3137, %v3185
        %v3234 = vmax.f32 %v3138, %v3186
        %v3235 = vmax.f32 %v3139, %v3187
        %v3236 = vmax.f32 %v3140, %v3188
        %v3285 = vrot.slane %v3189, 1
        %v3286 = vrot.slane %v3190, 1
        %v3287 = vsel %vm782, %v3285, %v3286
        %v3288 = vrot.slane %v3191, 1
        %v3289 = vsel %vm782, %v3286, %v3288
        %v3290 = vrot.slane %v3192, 1
        %v3291 = vrot.slane %v3193, 1
        %v3292 = vsel %vm782, %v3290, %v3291
        %v3293 = vrot.slane %v3194, 1
        %v3294 = vsel %vm782, %v3291, %v3293
        %v3295 = vrot.slane %v3195, 1
        %v3296 = vrot.slane %v3196, 1
        %v3297 = vsel %vm782, %v3295, %v3296
        %v3298 = vrot.slane %v3197, 1
        %v3299 = vsel %vm782, %v3296, %v3298
        %v3300 = vrot.slane %v3198, 1
        %v3301 = vrot.slane %v3199, 1
        %v3302 = vsel %vm782, %v3300, %v3301
        %v3303 = vrot.slane %v3200, 1
        %v3304 = vsel %vm782, %v3301, %v3303
        %v3305 = vrot.slane %v3201, 1
        %v3306 = vrot.slane %v3202, 1
        %v3307 = vsel %vm782, %v3305, %v3306
        %v3308 = vrot.slane %v3203, 1
        %v3309 = vsel %vm782, %v3306, %v3308
        %v3310 = vrot.slane %v3204, 1
        %v3311 = vrot.slane %v3205, 1
        %v3312 = vsel %vm782, %v3310, %v3311
        %v3313 = vrot.slane %v3206, 1
        %v3314 = vsel %vm782, %v3311, %v3313
        %v3315 = vrot.slane %v3207, 1
        %v3316 = vrot.slane %v3208, 1
        %v3317 = vsel %vm782, %v3315, %v3316
        %v3318 = vrot.slane %v3209, 1
        %v3319 = vsel %vm782, %v3316, %v3318
        %v3320 = vrot.slane %v3210, 1
        %v3321 = vrot.slane %v3211, 1
        %v3322 = vsel %vm782, %v3320, %v3321
        %v3323 = vrot.slane %v3212, 1
        %v3324 = vsel %vm782, %v3321, %v3323
        %v3325 = vrot.slane %v3213, 1
        %v3326 = vrot.slane %v3214, 1
        %v3327 = vsel %vm782, %v3325, %v3326
        %v3328 = vrot.slane %v3215, 1
        %v3329 = vsel %vm782, %v3326, %v3328
        %v3330 = vrot.slane %v3216, 1
        %v3331 = vrot.slane %v3217, 1
        %v3332 = vsel %vm782, %v3330, %v3331
        %v3333 = vrot.slane %v3218, 1
        %v3334 = vsel %vm782, %v3331, %v3333
        %v3335 = vrot.slane %v3219, 1
        %v3336 = vrot.slane %v3220, 1
        %v3337 = vsel %vm782, %v3335, %v3336
        %v3338 = vrot.slane %v3221, 1
        %v3339 = vsel %vm782, %v3336, %v3338
        %v3340 = vrot.slane %v3222, 1
        %v3341 = vrot.slane %v3223, 1
        %v3342 = vsel %vm782, %v3340, %v3341
        %v3343 = vrot.slane %v3224, 1
        %v3344 = vsel %vm782, %v3341, %v3343
        %v3345 = vrot.slane %v3225, 1
        %v3346 = vrot.slane %v3226, 1
        %v3347 = vsel %vm782, %v3345, %v3346
        %v3348 = vrot.slane %v3227, 1
        %v3349 = vsel %vm782, %v3346, %v3348
        %v3350 = vrot.slane %v3228, 1
        %v3351 = vrot.slane %v3229, 1
        %v3352 = vsel %vm782, %v3350, %v3351
        %v3353 = vrot.slane %v3230, 1
        %v3354 = vsel %vm782, %v3351, %v3353
        %v3355 = vrot.slane %v3231, 1
        %v3356 = vrot.slane %v3232, 1
        %v3357 = vsel %vm782, %v3355, %v3356
        %v3358 = vrot.slane %v3233, 1
        %v3359 = vsel %vm782, %v3356, %v3358
        %v3360 = vrot.slane %v3234, 1
        %v3361 = vrot.slane %v3235, 1
        %v3362 = vsel %vm782, %v3360, %v3361
        %v3363 = vrot.slane %v3236, 1
        %v3364 = vsel %vm782, %v3361, %v3363
        %v3397 = vmax.f32 %v3189, %v3287
        %v3398 = vmax.f32 %v3190, %v3289
        %v3399 = vmax.f32 %v3192, %v3292
        %v3400 = vmax.f32 %v3193, %v3294
        %v3401 = vmax.f32 %v3195, %v3297
        %v3402 = vmax.f32 %v3196, %v3299
        %v3403 = vmax.f32 %v3198, %v3302
        %v3404 = vmax.f32 %v3199, %v3304
        %v3405 = vmax.f32 %v3201, %v3307
        %v3406 = vmax.f32 %v3202, %v3309
        %v3407 = vmax.f32 %v3204, %v3312
        %v3408 = vmax.f32 %v3205, %v3314
        %v3409 = vmax.f32 %v3207, %v3317
        %v3410 = vmax.f32 %v3208, %v3319
        %v3411 = vmax.f32 %v3210, %v3322
        %v3412 = vmax.f32 %v3211, %v3324
        %v3413 = vmax.f32 %v3213, %v3327
        %v3414 = vmax.f32 %v3214, %v3329
        %v3415 = vmax.f32 %v3216, %v3332
        %v3416 = vmax.f32 %v3217, %v3334
        %v3417 = vmax.f32 %v3219, %v3337
        %v3418 = vmax.f32 %v3220, %v3339
        %v3419 = vmax.f32 %v3222, %v3342
        %v3420 = vmax.f32 %v3223, %v3344
        %v3421 = vmax.f32 %v3225, %v3347
        %v3422 = vmax.f32 %v3226, %v3349
        %v3423 = vmax.f32 %v3228, %v3352
        %v3424 = vmax.f32 %v3229, %v3354
        %v3425 = vmax.f32 %v3231, %v3357
        %v3426 = vmax.f32 %v3232, %v3359
        %v3427 = vmax.f32 %v3234, %v3362
        %v3428 = vmax.f32 %v3235, %v3364
        %v3429 = vrot.slane %v3189, 2
        %v3430 = vrot.slane %v3190, 2
        %v3431 = vsel %vm927, %v3429, %v3430
        %v3432 = vrot.slane %v3191, 2
        %v3433 = vsel %vm927, %v3430, %v3432
        %v3434 = vrot.slane %v3192, 2
        %v3435 = vrot.slane %v3193, 2
        %v3436 = vsel %vm927, %v3434, %v3435
        %v3437 = vrot.slane %v3194, 2
        %v3438 = vsel %vm927, %v3435, %v3437
        %v3439 = vrot.slane %v3195, 2
        %v3440 = vrot.slane %v3196, 2
        %v3441 = vsel %vm927, %v3439, %v3440
        %v3442 = vrot.slane %v3197, 2
        %v3443 = vsel %vm927, %v3440, %v3442
        %v3444 = vrot.slane %v3198, 2
        %v3445 = vrot.slane %v3199, 2
        %v3446 = vsel %vm927, %v3444, %v3445
        %v3447 = vrot.slane %v3200, 2
        %v3448 = vsel %vm927, %v3445, %v3447
        %v3449 = vrot.slane %v3201, 2
        %v3450 = vrot.slane %v3202, 2
        %v3451 = vsel %vm927, %v3449, %v3450
        %v3452 = vrot.slane %v3203, 2
        %v3453 = vsel %vm927, %v3450, %v3452
        %v3454 = vrot.slane %v3204, 2
        %v3455 = vrot.slane %v3205, 2
        %v3456 = vsel %vm927, %v3454, %v3455
        %v3457 = vrot.slane %v3206, 2
        %v3458 = vsel %vm927, %v3455, %v3457
        %v3459 = vrot.slane %v3207, 2
        %v3460 = vrot.slane %v3208, 2
        %v3461 = vsel %vm927, %v3459, %v3460
        %v3462 = vrot.slane %v3209, 2
        %v3463 = vsel %vm927, %v3460, %v3462
        %v3464 = vrot.slane %v3210, 2
        %v3465 = vrot.slane %v3211, 2
        %v3466 = vsel %vm927, %v3464, %v3465
        %v3467 = vrot.slane %v3212, 2
        %v3468 = vsel %vm927, %v3465, %v3467
        %v3469 = vrot.slane %v3213, 2
        %v3470 = vrot.slane %v3214, 2
        %v3471 = vsel %vm927, %v3469, %v3470
        %v3472 = vrot.slane %v3215, 2
        %v3473 = vsel %vm927, %v3470, %v3472
        %v3474 = vrot.slane %v3216, 2
        %v3475 = vrot.slane %v3217, 2
        %v3476 = vsel %vm927, %v3474, %v3475
        %v3477 = vrot.slane %v3218, 2
        %v3478 = vsel %vm927, %v3475, %v3477
        %v3479 = vrot.slane %v3219, 2
        %v3480 = vrot.slane %v3220, 2
        %v3481 = vsel %vm927, %v3479, %v3480
        %v3482 = vrot.slane %v3221, 2
        %v3483 = vsel %vm927, %v3480, %v3482
        %v3484 = vrot.slane %v3222, 2
        %v3485 = vrot.slane %v3223, 2
        %v3486 = vsel %vm927, %v3484, %v3485
        %v3487 = vrot.slane %v3224, 2
        %v3488 = vsel %vm927, %v3485, %v3487
        %v3489 = vrot.slane %v3225, 2
        %v3490 = vrot.slane %v3226, 2
        %v3491 = vsel %vm927, %v3489, %v3490
        %v3492 = vrot.slane %v3227, 2
        %v3493 = vsel %vm927, %v3490, %v3492
        %v3494 = vrot.slane %v3228, 2
        %v3495 = vrot.slane %v3229, 2
        %v3496 = vsel %vm927, %v3494, %v3495
        %v3497 = vrot.slane %v3230, 2
        %v3498 = vsel %vm927, %v3495, %v3497
        %v3499 = vrot.slane %v3231, 2
        %v3500 = vrot.slane %v3232, 2
        %v3501 = vsel %vm927, %v3499, %v3500
        %v3502 = vrot.slane %v3233, 2
        %v3503 = vsel %vm927, %v3500, %v3502
        %v3504 = vrot.slane %v3234, 2
        %v3505 = vrot.slane %v3235, 2
        %v3506 = vsel %vm927, %v3504, %v3505
        %v3507 = vrot.slane %v3236, 2
        %v3508 = vsel %vm927, %v3505, %v3507
        %v3541 = vmax.f32 %v3397, %v3431
        %v3542 = vmax.f32 %v3398, %v3433
        %v3543 = vmax.f32 %v3399, %v3436
        %v3544 = vmax.f32 %v3400, %v3438
        %v3545 = vmax.f32 %v3401, %v3441
        %v3546 = vmax.f32 %v3402, %v3443
        %v3547 = vmax.f32 %v3403, %v3446
        %v3548 = vmax.f32 %v3404, %v3448
        %v3549 = vmax.f32 %v3405, %v3451
        %v3550 = vmax.f32 %v3406, %v3453
        %v3551 = vmax.f32 %v3407, %v3456
        %v3552 = vmax.f32 %v3408, %v3458
        %v3553 = vmax.f32 %v3409, %v3461
        %v3554 = vmax.f32 %v3410, %v3463
        %v3555 = vmax.f32 %v3411, %v3466
        %v3556 = vmax.f32 %v3412, %v3468
        %v3557 = vmax.f32 %v3413, %v3471
        %v3558 = vmax.f32 %v3414, %v3473
        %v3559 = vmax.f32 %v3415, %v3476
        %v3560 = vmax.f32 %v3416, %v3478
        %v3561 = vmax.f32 %v3417, %v3481
        %v3562 = vmax.f32 %v3418, %v3483
        %v3563 = vmax.f32 %v3419, %v3486
        %v3564 = vmax.f32 %v3420, %v3488
        %v3565 = vmax.f32 %v3421, %v3491
        %v3566 = vmax.f32 %v3422, %v3493
        %v3567 = vmax.f32 %v3423, %v3496
        %v3568 = vmax.f32 %v3424, %v3498
        %v3569 = vmax.f32 %v3425, %v3501
        %v3570 = vmax.f32 %v3426, %v3503
        %v3571 = vmax.f32 %v3427, %v3506
        %v3572 = vmax.f32 %v3428, %v3508
        %v3573 = vrot.slane %v3189, 3
        %v3574 = vrot.slane %v3190, 3
        %v3575 = vsel %vm1072, %v3573, %v3574
        %v3576 = vrot.slane %v3191, 3
        %v3577 = vsel %vm1072, %v3574, %v3576
        %v3578 = vrot.slane %v3192, 3
        %v3579 = vrot.slane %v3193, 3
        %v3580 = vsel %vm1072, %v3578, %v3579
        %v3581 = vrot.slane %v3194, 3
        %v3582 = vsel %vm1072, %v3579, %v3581
        %v3583 = vrot.slane %v3195, 3
        %v3584 = vrot.slane %v3196, 3
        %v3585 = vsel %vm1072, %v3583, %v3584
        %v3586 = vrot.slane %v3197, 3
        %v3587 = vsel %vm1072, %v3584, %v3586
        %v3588 = vrot.slane %v3198, 3
        %v3589 = vrot.slane %v3199, 3
        %v3590 = vsel %vm1072, %v3588, %v3589
        %v3591 = vrot.slane %v3200, 3
        %v3592 = vsel %vm1072, %v3589, %v3591
        %v3593 = vrot.slane %v3201, 3
        %v3594 = vrot.slane %v3202, 3
        %v3595 = vsel %vm1072, %v3593, %v3594
        %v3596 = vrot.slane %v3203, 3
        %v3597 = vsel %vm1072, %v3594, %v3596
        %v3598 = vrot.slane %v3204, 3
        %v3599 = vrot.slane %v3205, 3
        %v3600 = vsel %vm1072, %v3598, %v3599
        %v3601 = vrot.slane %v3206, 3
        %v3602 = vsel %vm1072, %v3599, %v3601
        %v3603 = vrot.slane %v3207, 3
        %v3604 = vrot.slane %v3208, 3
        %v3605 = vsel %vm1072, %v3603, %v3604
        %v3606 = vrot.slane %v3209, 3
        %v3607 = vsel %vm1072, %v3604, %v3606
        %v3608 = vrot.slane %v3210, 3
        %v3609 = vrot.slane %v3211, 3
        %v3610 = vsel %vm1072, %v3608, %v3609
        %v3611 = vrot.slane %v3212, 3
        %v3612 = vsel %vm1072, %v3609, %v3611
        %v3613 = vrot.slane %v3213, 3
        %v3614 = vrot.slane %v3214, 3
        %v3615 = vsel %vm1072, %v3613, %v3614
        %v3616 = vrot.slane %v3215, 3
        %v3617 = vsel %vm1072, %v3614, %v3616
        %v3618 = vrot.slane %v3216, 3
        %v3619 = vrot.slane %v3217, 3
        %v3620 = vsel %vm1072, %v3618, %v3619
        %v3621 = vrot.slane %v3218, 3
        %v3622 = vsel %vm1072, %v3619, %v3621
        %v3623 = vrot.slane %v3219, 3
        %v3624 = vrot.slane %v3220, 3
        %v3625 = vsel %vm1072, %v3623, %v3624
        %v3626 = vrot.slane %v3221, 3
        %v3627 = vsel %vm1072, %v3624, %v3626
        %v3628 = vrot.slane %v3222, 3
        %v3629 = vrot.slane %v3223, 3
        %v3630 = vsel %vm1072, %v3628, %v3629
        %v3631 = vrot.slane %v3224, 3
        %v3632 = vsel %vm1072, %v3629, %v3631
        %v3633 = vrot.slane %v3225, 3
        %v3634 = vrot.slane %v3226, 3
        %v3635 = vsel %vm1072, %v3633, %v3634
        %v3636 = vrot.slane %v3227, 3
        %v3637 = vsel %vm1072, %v3634, %v3636
        %v3638 = vrot.slane %v3228, 3
        %v3639 = vrot.slane %v3229, 3
        %v3640 = vsel %vm1072, %v3638, %v3639
        %v3641 = vrot.slane %v3230, 3
        %v3642 = vsel %vm1072, %v3639, %v3641
        %v3643 = vrot.slane %v3231, 3
        %v3644 = vrot.slane %v3232, 3
        %v3645 = vsel %vm1072, %v3643, %v3644
        %v3646 = vrot.slane %v3233, 3
        %v3647 = vsel %vm1072, %v3644, %v3646
        %v3648 = vrot.slane %v3234, 3
        %v3649 = vrot.slane %v3235, 3
        %v3650 = vsel %vm1072, %v3648, %v3649
        %v3651 = vrot.slane %v3236, 3
        %v3652 = vsel %vm1072, %v3649, %v3651
        %v3685 = vmax.f32 %v3541, %v3575
        %v3686 = vmax.f32 %v3542, %v3577
        %v3687 = vmax.f32 %v3543, %v3580
        %v3688 = vmax.f32 %v3544, %v3582
        %v3689 = vmax.f32 %v3545, %v3585
        %v3690 = vmax.f32 %v3546, %v3587
        %v3691 = vmax.f32 %v3547, %v3590
        %v3692 = vmax.f32 %v3548, %v3592
        %v3693 = vmax.f32 %v3549, %v3595
        %v3694 = vmax.f32 %v3550, %v3597
        %v3695 = vmax.f32 %v3551, %v3600
        %v3696 = vmax.f32 %v3552, %v3602
        %v3697 = vmax.f32 %v3553, %v3605
        %v3698 = vmax.f32 %v3554, %v3607
        %v3699 = vmax.f32 %v3555, %v3610
        %v3700 = vmax.f32 %v3556, %v3612
        %v3701 = vmax.f32 %v3557, %v3615
        %v3702 = vmax.f32 %v3558, %v3617
        %v3703 = vmax.f32 %v3559, %v3620
        %v3704 = vmax.f32 %v3560, %v3622
        %v3705 = vmax.f32 %v3561, %v3625
        %v3706 = vmax.f32 %v3562, %v3627
        %v3707 = vmax.f32 %v3563, %v3630
        %v3708 = vmax.f32 %v3564, %v3632
        %v3709 = vmax.f32 %v3565, %v3635
        %v3710 = vmax.f32 %v3566, %v3637
        %v3711 = vmax.f32 %v3567, %v3640
        %v3712 = vmax.f32 %v3568, %v3642
        %v3713 = vmax.f32 %v3569, %v3645
        %v3714 = vmax.f32 %v3570, %v3647
        %v3715 = vmax.f32 %v3571, %v3650
        %v3716 = vmax.f32 %v3572, %v3652
        %v3717 = vrot.slane %v3189, 4
        %v3718 = vrot.slane %v3190, 4
        %v3719 = vsel %vm1217, %v3717, %v3718
        %v3720 = vrot.slane %v3191, 4
        %v3721 = vsel %vm1217, %v3718, %v3720
        %v3722 = vrot.slane %v3192, 4
        %v3723 = vrot.slane %v3193, 4
        %v3724 = vsel %vm1217, %v3722, %v3723
        %v3725 = vrot.slane %v3194, 4
        %v3726 = vsel %vm1217, %v3723, %v3725
        %v3727 = vrot.slane %v3195, 4
        %v3728 = vrot.slane %v3196, 4
        %v3729 = vsel %vm1217, %v3727, %v3728
        %v3730 = vrot.slane %v3197, 4
        %v3731 = vsel %vm1217, %v3728, %v3730
        %v3732 = vrot.slane %v3198, 4
        %v3733 = vrot.slane %v3199, 4
        %v3734 = vsel %vm1217, %v3732, %v3733
        %v3735 = vrot.slane %v3200, 4
        %v3736 = vsel %vm1217, %v3733, %v3735
        %v3737 = vrot.slane %v3201, 4
        %v3738 = vrot.slane %v3202, 4
        %v3739 = vsel %vm1217, %v3737, %v3738
        %v3740 = vrot.slane %v3203, 4
        %v3741 = vsel %vm1217, %v3738, %v3740
        %v3742 = vrot.slane %v3204, 4
        %v3743 = vrot.slane %v3205, 4
        %v3744 = vsel %vm1217, %v3742, %v3743
        %v3745 = vrot.slane %v3206, 4
        %v3746 = vsel %vm1217, %v3743, %v3745
        %v3747 = vrot.slane %v3207, 4
        %v3748 = vrot.slane %v3208, 4
        %v3749 = vsel %vm1217, %v3747, %v3748
        %v3750 = vrot.slane %v3209, 4
        %v3751 = vsel %vm1217, %v3748, %v3750
        %v3752 = vrot.slane %v3210, 4
        %v3753 = vrot.slane %v3211, 4
        %v3754 = vsel %vm1217, %v3752, %v3753
        %v3755 = vrot.slane %v3212, 4
        %v3756 = vsel %vm1217, %v3753, %v3755
        %v3757 = vrot.slane %v3213, 4
        %v3758 = vrot.slane %v3214, 4
        %v3759 = vsel %vm1217, %v3757, %v3758
        %v3760 = vrot.slane %v3215, 4
        %v3761 = vsel %vm1217, %v3758, %v3760
        %v3762 = vrot.slane %v3216, 4
        %v3763 = vrot.slane %v3217, 4
        %v3764 = vsel %vm1217, %v3762, %v3763
        %v3765 = vrot.slane %v3218, 4
        %v3766 = vsel %vm1217, %v3763, %v3765
        %v3767 = vrot.slane %v3219, 4
        %v3768 = vrot.slane %v3220, 4
        %v3769 = vsel %vm1217, %v3767, %v3768
        %v3770 = vrot.slane %v3221, 4
        %v3771 = vsel %vm1217, %v3768, %v3770
        %v3772 = vrot.slane %v3222, 4
        %v3773 = vrot.slane %v3223, 4
        %v3774 = vsel %vm1217, %v3772, %v3773
        %v3775 = vrot.slane %v3224, 4
        %v3776 = vsel %vm1217, %v3773, %v3775
        %v3777 = vrot.slane %v3225, 4
        %v3778 = vrot.slane %v3226, 4
        %v3779 = vsel %vm1217, %v3777, %v3778
        %v3780 = vrot.slane %v3227, 4
        %v3781 = vsel %vm1217, %v3778, %v3780
        %v3782 = vrot.slane %v3228, 4
        %v3783 = vrot.slane %v3229, 4
        %v3784 = vsel %vm1217, %v3782, %v3783
        %v3785 = vrot.slane %v3230, 4
        %v3786 = vsel %vm1217, %v3783, %v3785
        %v3787 = vrot.slane %v3231, 4
        %v3788 = vrot.slane %v3232, 4
        %v3789 = vsel %vm1217, %v3787, %v3788
        %v3790 = vrot.slane %v3233, 4
        %v3791 = vsel %vm1217, %v3788, %v3790
        %v3792 = vrot.slane %v3234, 4
        %v3793 = vrot.slane %v3235, 4
        %v3794 = vsel %vm1217, %v3792, %v3793
        %v3795 = vrot.slane %v3236, 4
        %v3796 = vsel %vm1217, %v3793, %v3795
        %v3829 = vmax.f32 %v3685, %v3719
        %v3830 = vmax.f32 %v3686, %v3721
        %v3831 = vmax.f32 %v3687, %v3724
        %v3832 = vmax.f32 %v3688, %v3726
        %v3833 = vmax.f32 %v3689, %v3729
        %v3834 = vmax.f32 %v3690, %v3731
        %v3835 = vmax.f32 %v3691, %v3734
        %v3836 = vmax.f32 %v3692, %v3736
        %v3837 = vmax.f32 %v3693, %v3739
        %v3838 = vmax.f32 %v3694, %v3741
        %v3839 = vmax.f32 %v3695, %v3744
        %v3840 = vmax.f32 %v3696, %v3746
        %v3841 = vmax.f32 %v3697, %v3749
        %v3842 = vmax.f32 %v3698, %v3751
        %v3843 = vmax.f32 %v3699, %v3754
        %v3844 = vmax.f32 %v3700, %v3756
        %v3845 = vmax.f32 %v3701, %v3759
        %v3846 = vmax.f32 %v3702, %v3761
        %v3847 = vmax.f32 %v3703, %v3764
        %v3848 = vmax.f32 %v3704, %v3766
        %v3849 = vmax.f32 %v3705, %v3769
        %v3850 = vmax.f32 %v3706, %v3771
        %v3851 = vmax.f32 %v3707, %v3774
        %v3852 = vmax.f32 %v3708, %v3776
        %v3853 = vmax.f32 %v3709, %v3779
        %v3854 = vmax.f32 %v3710, %v3781
        %v3855 = vmax.f32 %v3711, %v3784
        %v3856 = vmax.f32 %v3712, %v3786
        %v3857 = vmax.f32 %v3713, %v3789
        %v3858 = vmax.f32 %v3714, %v3791
        %v3859 = vmax.f32 %v3715, %v3794
        %v3860 = vmax.f32 %v3716, %v3796
        %s3861 = scalar_lea.vmem [#allocation6], 256
        %v3862 = vld [vmem:[%s3861] sm:$0xff]
        %v3863 = vld [vmem:[%s3861 + $0x8] sm:$0xff]
        %v3864 = vld [vmem:[%s3861 + $0x10] sm:$0xff]
        %v3865 = vld [vmem:[%s3861 + $0x18] sm:$0xff]
        %v3866 = vld [vmem:[%s3861 + $0x20] sm:$0xff]
        %v3867 = vld [vmem:[%s3861 + $0x28] sm:$0xff]
        %v3868 = vld [vmem:[%s3861 + $0x30] sm:$0xff]
        %v3869 = vld [vmem:[%s3861 + $0x38] sm:$0xff]
        %v3870 = vld [vmem:[%s3861 + $0x40] sm:$0xff]
        %v3871 = vld [vmem:[%s3861 + $0x48] sm:$0xff]
        %v3872 = vld [vmem:[%s3861 + $0x50] sm:$0xff]
        %v3873 = vld [vmem:[%s3861 + $0x58] sm:$0xff]
        %v3874 = vld [vmem:[%s3861 + $0x60] sm:$0xff]
        %v3875 = vld [vmem:[%s3861 + $0x68] sm:$0xff]
        %v3876 = vld [vmem:[%s3861 + $0x70] sm:$0xff]
        %v3877 = vld [vmem:[%s3861 + $0x78] sm:$0xff]
        %3878 = vmatpush.msra.mxu0 %v3877
        %3879 = vmatpush.msra.mxu0 %v3876
        %3880 = vmatpush.msra.mxu0 %v3875
        %3881 = vmatpush.msra.mxu0 %v3874
        %3882 = vmatpush.msra.mxu0 %v3873
        %3883 = vmatpush.msra.mxu0 %v3872
        %3884 = vmatpush.msra.mxu0 %v3871
        %3885 = vmatpush.msra.mxu0 %v3870
        %3886 = vmatpush.msra.mxu0 %v3869
        %3887 = vmatpush.msra.mxu0 %v3868
        %3888 = vmatpush.msra.mxu0 %v3867
        %3889 = vmatpush.msra.mxu0 %v3866
        %3890 = vmatpush.msra.mxu0 %v3865
        %3891 = vmatpush.msra.mxu0 %v3864
        %3892 = vmatpush.msra.mxu0 %v3863
        %3893 = vmatpush.msra.mxu0 %v3862
        %3894 = vmatmul.f32.gmra.mxu0 %v3829
        %v3895 = vpop.f32.mrf.mxu0
        %v3896 = vadd.f32 0.0, %v3895
        %3897 = vmatmul.f32.gmra.mxu0 %v3830
        %v3898 = vpop.f32.mrf.mxu0
        %v3899 = vadd.f32 0.0, %v3898
        %3900 = vmatmul.f32.gmra.mxu0 %v3831
        %v3901 = vpop.f32.mrf.mxu0
        %v3902 = vadd.f32 0.0, %v3901
        %3903 = vmatmul.f32.gmra.mxu0 %v3832
        %v3904 = vpop.f32.mrf.mxu0
        %v3905 = vadd.f32 0.0, %v3904
        %3906 = vmatmul.f32.gmra.mxu0 %v3833
        %v3907 = vpop.f32.mrf.mxu0
        %v3908 = vadd.f32 0.0, %v3907
        %3909 = vmatmul.f32.gmra.mxu0 %v3834
        %v3910 = vpop.f32.mrf.mxu0
        %v3911 = vadd.f32 0.0, %v3910
        %3912 = vmatmul.f32.gmra.mxu0 %v3835
        %v3913 = vpop.f32.mrf.mxu0
        %v3914 = vadd.f32 0.0, %v3913
        %3915 = vmatmul.f32.gmra.mxu0 %v3836
        %v3916 = vpop.f32.mrf.mxu0
        %v3917 = vadd.f32 0.0, %v3916
        %3918 = vmatmul.f32.gmra.mxu0 %v3837
        %v3919 = vpop.f32.mrf.mxu0
        %v3920 = vadd.f32 0.0, %v3919
        %3921 = vmatmul.f32.gmra.mxu0 %v3838
        %v3922 = vpop.f32.mrf.mxu0
        %v3923 = vadd.f32 0.0, %v3922
        %3924 = vmatmul.f32.gmra.mxu0 %v3839
        %v3925 = vpop.f32.mrf.mxu0
        %v3926 = vadd.f32 0.0, %v3925
        %3927 = vmatmul.f32.gmra.mxu0 %v3840
        %v3928 = vpop.f32.mrf.mxu0
        %v3929 = vadd.f32 0.0, %v3928
        %3930 = vmatmul.f32.gmra.mxu0 %v3841
        %v3931 = vpop.f32.mrf.mxu0
        %v3932 = vadd.f32 0.0, %v3931
        %3933 = vmatmul.f32.gmra.mxu0 %v3842
        %v3934 = vpop.f32.mrf.mxu0
        %v3935 = vadd.f32 0.0, %v3934
        %3936 = vmatmul.f32.gmra.mxu0 %v3843
        %v3937 = vpop.f32.mrf.mxu0
        %v3938 = vadd.f32 0.0, %v3937
        %3939 = vmatmul.f32.gmra.mxu0 %v3844
        %v3940 = vpop.f32.mrf.mxu0
        %v3941 = vadd.f32 0.0, %v3940
        %3942 = vmatmul.f32.gmra.mxu0 %v3845
        %v3943 = vpop.f32.mrf.mxu0
        %v3944 = vadd.f32 0.0, %v3943
        %3945 = vmatmul.f32.gmra.mxu0 %v3846
        %v3946 = vpop.f32.mrf.mxu0
        %v3947 = vadd.f32 0.0, %v3946
        %3948 = vmatmul.f32.gmra.mxu0 %v3847
        %v3949 = vpop.f32.mrf.mxu0
        %v3950 = vadd.f32 0.0, %v3949
        %3951 = vmatmul.f32.gmra.mxu0 %v3848
        %v3952 = vpop.f32.mrf.mxu0
        %v3953 = vadd.f32 0.0, %v3952
        %3954 = vmatmul.f32.gmra.mxu0 %v3849
        %v3955 = vpop.f32.mrf.mxu0
        %v3956 = vadd.f32 0.0, %v3955
        %3957 = vmatmul.f32.gmra.mxu0 %v3850
        %v3958 = vpop.f32.mrf.mxu0
        %v3959 = vadd.f32 0.0, %v3958
        %3960 = vmatmul.f32.gmra.mxu0 %v3851
        %v3961 = vpop.f32.mrf.mxu0
        %v3962 = vadd.f32 0.0, %v3961
        %3963 = vmatmul.f32.gmra.mxu0 %v3852
        %v3964 = vpop.f32.mrf.mxu0
        %v3965 = vadd.f32 0.0, %v3964
        %3966 = vmatmul.f32.gmra.mxu0 %v3853
        %v3967 = vpop.f32.mrf.mxu0
        %v3968 = vadd.f32 0.0, %v3967
        %3969 = vmatmul.f32.gmra.mxu0 %v3854
        %v3970 = vpop.f32.mrf.mxu0
        %v3971 = vadd.f32 0.0, %v3970
        %3972 = vmatmul.f32.gmra.mxu0 %v3855
        %v3973 = vpop.f32.mrf.mxu0
        %v3974 = vadd.f32 0.0, %v3973
        %3975 = vmatmul.f32.gmra.mxu0 %v3856
        %v3976 = vpop.f32.mrf.mxu0
        %v3977 = vadd.f32 0.0, %v3976
        %3978 = vmatmul.f32.gmra.mxu0 %v3857
        %v3979 = vpop.f32.mrf.mxu0
        %v3980 = vadd.f32 0.0, %v3979
        %3981 = vmatmul.f32.gmra.mxu0 %v3858
        %v3982 = vpop.f32.mrf.mxu0
        %v3983 = vadd.f32 0.0, %v3982
        %3984 = vmatmul.f32.gmra.mxu0 %v3859
        %v3985 = vpop.f32.mrf.mxu0
        %v3986 = vadd.f32 0.0, %v3985
        %3987 = vmatmul.f32.gmra.mxu0 %v3860
        %v3988 = vpop.f32.mrf.mxu0
        %v3989 = vadd.f32 0.0, %v3988
        %3990 = vdwg.mxu0
        %v3991 = vadd.f32 %v2741, %v3896
        %v3992 = vadd.f32 %v2742, %v3899
        %v3993 = vadd.f32 %v2743, %v3902
        %v3994 = vadd.f32 %v2744, %v3905
        %v3995 = vadd.f32 %v2745, %v3908
        %v3996 = vadd.f32 %v2746, %v3911
        %v3997 = vadd.f32 %v2747, %v3914
        %v3998 = vadd.f32 %v2748, %v3917
        %v3999 = vadd.f32 %v2749, %v3920
        %v4000 = vadd.f32 %v2750, %v3923
        %v4001 = vadd.f32 %v2751, %v3926
        %v4002 = vadd.f32 %v2752, %v3929
        %v4003 = vadd.f32 %v2753, %v3932
        %v4004 = vadd.f32 %v2754, %v3935
        %v4005 = vadd.f32 %v2755, %v3938
        %v4006 = vadd.f32 %v2756, %v3941
        %v4007 = vadd.f32 %v2757, %v3944
        %v4008 = vadd.f32 %v2758, %v3947
        %v4009 = vadd.f32 %v2759, %v3950
        %v4010 = vadd.f32 %v2760, %v3953
        %v4011 = vadd.f32 %v2761, %v3956
        %v4012 = vadd.f32 %v2762, %v3959
        %v4013 = vadd.f32 %v2763, %v3962
        %v4014 = vadd.f32 %v2764, %v3965
        %v4015 = vadd.f32 %v2765, %v3968
        %v4016 = vadd.f32 %v2766, %v3971
        %v4017 = vadd.f32 %v2767, %v3974
        %v4018 = vadd.f32 %v2768, %v3977
        %v4019 = vadd.f32 %v2769, %v3980
        %v4020 = vadd.f32 %v2770, %v3983
        %v4021 = vadd.f32 %v2771, %v3986
        %v4022 = vadd.f32 %v2772, %v3989
        %4023 = vst [vmem:[%s266 + $0x2] sm:$0xff] %v3896
        %4024 = vst [vmem:[%s266 + $0xa] sm:$0xff] %v3899
        %4025 = vst [vmem:[%s266 + $0x1a] sm:$0xff] %v3902
        %4026 = vst [vmem:[%s266 + $0x22] sm:$0xff] %v3905
        %4027 = vst [vmem:[%s266 + $0x32] sm:$0xff] %v3908
        %4028 = vst [vmem:[%s266 + $0x3a] sm:$0xff] %v3911
        %4029 = vst [vmem:[%s266 + $0x4a] sm:$0xff] %v3914
        %4030 = vst [vmem:[%s266 + $0x52] sm:$0xff] %v3917
        %4031 = vst [vmem:[%s266 + $0x62] sm:$0xff] %v3920
        %4032 = vst [vmem:[%s266 + $0x6a] sm:$0xff] %v3923
        %4033 = vst [vmem:[%s266 + $0x7a] sm:$0xff] %v3926
        %4034 = vst [vmem:[%s266 + $0x82] sm:$0xff] %v3929
        %4035 = vst [vmem:[%s266 + $0x92] sm:$0xff] %v3932
        %4036 = vst [vmem:[%s266 + $0x9a] sm:$0xff] %v3935
        %4037 = vst [vmem:[%s266 + $0xaa] sm:$0xff] %v3938
        %4038 = vst [vmem:[%s266 + $0xb2] sm:$0xff] %v3941
        %4039 = vst [vmem:[%s266 + $0xc2] sm:$0xff] %v3944
        %4040 = vst [vmem:[%s266 + $0xca] sm:$0xff] %v3947
        %4041 = vst [vmem:[%s266 + $0xda] sm:$0xff] %v3950
        %4042 = vst [vmem:[%s266 + $0xe2] sm:$0xff] %v3953
        %4043 = vst [vmem:[%s266 + $0xf2] sm:$0xff] %v3956
        %4044 = vst [vmem:[%s266 + $0xfa] sm:$0xff] %v3959
        %4045 = vst [vmem:[%s266 + $0x10a] sm:$0xff] %v3962
        %4046 = vst [vmem:[%s266 + $0x112] sm:$0xff] %v3965
        %4047 = vst [vmem:[%s266 + $0x122] sm:$0xff] %v3968
        %4048 = vst [vmem:[%s266 + $0x12a] sm:$0xff] %v3971
        %4049 = vst [vmem:[%s266 + $0x13a] sm:$0xff] %v3974
        %4050 = vst [vmem:[%s266 + $0x142] sm:$0xff] %v3977
        %4051 = vst [vmem:[%s266 + $0x152] sm:$0xff] %v3980
        %4052 = vst [vmem:[%s266 + $0x15a] sm:$0xff] %v3983
        %4053 = vst [vmem:[%s266 + $0x16a] sm:$0xff] %v3986
        %4054 = vst [vmem:[%s266 + $0x172] sm:$0xff] %v3989
        %v4055 = vld [vmem:[#allocation2] sm:$0xff]
        %v4056 = vld [vmem:[#allocation2 + $0x8] sm:$0xff]
        %v4057 = vld [vmem:[#allocation2 + $0x10] sm:$0xf]
        %v4058 = vld [vmem:[#allocation2 + $0x18] sm:$0xff]
        %v4059 = vld [vmem:[#allocation2 + $0x20] sm:$0xff]
        %v4060 = vld [vmem:[#allocation2 + $0x28] sm:$0xf]
        %v4061 = vld [vmem:[#allocation2 + $0x30] sm:$0xff]
        %v4062 = vld [vmem:[#allocation2 + $0x38] sm:$0xff]
        %v4063 = vld [vmem:[#allocation2 + $0x40] sm:$0xf]
        %v4064 = vld [vmem:[#allocation2 + $0x48] sm:$0xff]
        %v4065 = vld [vmem:[#allocation2 + $0x50] sm:$0xff]
        %v4066 = vld [vmem:[#allocation2 + $0x58] sm:$0xf]
        %v4067 = vld [vmem:[#allocation2 + $0x60] sm:$0xff]
        %v4068 = vld [vmem:[#allocation2 + $0x68] sm:$0xff]
        %v4069 = vld [vmem:[#allocation2 + $0x70] sm:$0xf]
        %v4070 = vld [vmem:[#allocation2 + $0x78] sm:$0xff]
        %v4071 = vld [vmem:[#allocation2 + $0x80] sm:$0xff]
        %v4072 = vld [vmem:[#allocation2 + $0x88] sm:$0xf]
        %v4073 = vld [vmem:[#allocation2 + $0x90] sm:$0xff]
        %v4074 = vld [vmem:[#allocation2 + $0x98] sm:$0xff]
        %v4075 = vld [vmem:[#allocation2 + $0xa0] sm:$0xf]
        %v4076 = vld [vmem:[#allocation2 + $0xa8] sm:$0xff]
        %v4077 = vld [vmem:[#allocation2 + $0xb0] sm:$0xff]
        %v4078 = vld [vmem:[#allocation2 + $0xb8] sm:$0xf]
        %v4079 = vld [vmem:[#allocation2 + $0xc0] sm:$0xff]
        %v4080 = vld [vmem:[#allocation2 + $0xc8] sm:$0xff]
        %v4081 = vld [vmem:[#allocation2 + $0xd0] sm:$0xf]
        %v4082 = vld [vmem:[#allocation2 + $0xd8] sm:$0xff]
        %v4083 = vld [vmem:[#allocation2 + $0xe0] sm:$0xff]
        %v4084 = vld [vmem:[#allocation2 + $0xe8] sm:$0xf]
        %v4085 = vld [vmem:[#allocation2 + $0xf0] sm:$0xff]
        %v4086 = vld [vmem:[#allocation2 + $0xf8] sm:$0xff]
        %v4087 = vld [vmem:[#allocation2 + $0x100] sm:$0xf]
        %v4088 = vld [vmem:[#allocation2 + $0x108] sm:$0xff]
        %v4089 = vld [vmem:[#allocation2 + $0x110] sm:$0xff]
        %v4090 = vld [vmem:[#allocation2 + $0x118] sm:$0xf]
        %v4091 = vld [vmem:[#allocation2 + $0x120] sm:$0xff]
        %v4092 = vld [vmem:[#allocation2 + $0x128] sm:$0xff]
        %v4093 = vld [vmem:[#allocation2 + $0x130] sm:$0xf]
        %v4094 = vld [vmem:[#allocation2 + $0x138] sm:$0xff]
        %v4095 = vld [vmem:[#allocation2 + $0x140] sm:$0xff]
        %v4096 = vld [vmem:[#allocation2 + $0x148] sm:$0xf]
        %v4097 = vld [vmem:[#allocation2 + $0x150] sm:$0xff]
        %v4098 = vld [vmem:[#allocation2 + $0x158] sm:$0xff]
        %v4099 = vld [vmem:[#allocation2 + $0x160] sm:$0xf]
        %v4100 = vld [vmem:[#allocation2 + $0x168] sm:$0xff]
        %v4101 = vld [vmem:[#allocation2 + $0x170] sm:$0xff]
        %v4102 = vld [vmem:[#allocation2 + $0x178] sm:$0xf]
        %v4103 = vld [vmem:[%s347] sm:$0xff]
        %v4104 = vld [vmem:[%s347 + $0x8] sm:$0xff]
        %v4105 = vld [vmem:[%s347 + $0x10] sm:$0xf]
        %v4106 = vld [vmem:[%s347 + $0x18] sm:$0xff]
        %v4107 = vld [vmem:[%s347 + $0x20] sm:$0xff]
        %v4108 = vld [vmem:[%s347 + $0x28] sm:$0xf]
        %v4109 = vld [vmem:[%s347 + $0x30] sm:$0xff]
        %v4110 = vld [vmem:[%s347 + $0x38] sm:$0xff]
        %v4111 = vld [vmem:[%s347 + $0x40] sm:$0xf]
        %v4112 = vld [vmem:[%s347 + $0x48] sm:$0xff]
        %v4113 = vld [vmem:[%s347 + $0x50] sm:$0xff]
        %v4114 = vld [vmem:[%s347 + $0x58] sm:$0xf]
        %v4115 = vld [vmem:[%s347 + $0x60] sm:$0xff]
        %v4116 = vld [vmem:[%s347 + $0x68] sm:$0xff]
        %v4117 = vld [vmem:[%s347 + $0x70] sm:$0xf]
        %v4118 = vld [vmem:[%s347 + $0x78] sm:$0xff]
        %v4119 = vld [vmem:[%s347 + $0x80] sm:$0xff]
        %v4120 = vld [vmem:[%s347 + $0x88] sm:$0xf]
        %v4121 = vld [vmem:[%s347 + $0x90] sm:$0xff]
        %v4122 = vld [vmem:[%s347 + $0x98] sm:$0xff]
        %v4123 = vld [vmem:[%s347 + $0xa0] sm:$0xf]
        %v4124 = vld [vmem:[%s347 + $0xa8] sm:$0xff]
        %v4125 = vld [vmem:[%s347 + $0xb0] sm:$0xff]
        %v4126 = vld [vmem:[%s347 + $0xb8] sm:$0xf]
        %v4127 = vld [vmem:[%s347 + $0xc0] sm:$0xff]
        %v4128 = vld [vmem:[%s347 + $0xc8] sm:$0xff]
        %v4129 = vld [vmem:[%s347 + $0xd0] sm:$0xf]
        %v4130 = vld [vmem:[%s347 + $0xd8] sm:$0xff]
        %v4131 = vld [vmem:[%s347 + $0xe0] sm:$0xff]
        %v4132 = vld [vmem:[%s347 + $0xe8] sm:$0xf]
        %v4133 = vld [vmem:[%s347 + $0xf0] sm:$0xff]
        %v4134 = vld [vmem:[%s347 + $0xf8] sm:$0xff]
        %v4135 = vld [vmem:[%s347 + $0x100] sm:$0xf]
        %v4136 = vld [vmem:[%s347 + $0x108] sm:$0xff]
        %v4137 = vld [vmem:[%s347 + $0x110] sm:$0xff]
        %v4138 = vld [vmem:[%s347 + $0x118] sm:$0xf]
        %v4139 = vld [vmem:[%s347 + $0x120] sm:$0xff]
        %v4140 = vld [vmem:[%s347 + $0x128] sm:$0xff]
        %v4141 = vld [vmem:[%s347 + $0x130] sm:$0xf]
        %v4142 = vld [vmem:[%s347 + $0x138] sm:$0xff]
        %v4143 = vld [vmem:[%s347 + $0x140] sm:$0xff]
        %v4144 = vld [vmem:[%s347 + $0x148] sm:$0xf]
        %v4145 = vld [vmem:[%s347 + $0x150] sm:$0xff]
        %v4146 = vld [vmem:[%s347 + $0x158] sm:$0xff]
        %v4147 = vld [vmem:[%s347 + $0x160] sm:$0xf]
        %v4148 = vld [vmem:[%s347 + $0x168] sm:$0xff]
        %v4149 = vld [vmem:[%s347 + $0x170] sm:$0xff]
        %v4150 = vld [vmem:[%s347 + $0x178] sm:$0xf]
        %v4151 = vmax.f32 %v4055, %v4103
        %v4152 = vmax.f32 %v4056, %v4104
        %v4153 = vmax.f32 %v4057, %v4105
        %v4154 = vmax.f32 %v4058, %v4106
        %v4155 = vmax.f32 %v4059, %v4107
        %v4156 = vmax.f32 %v4060, %v4108
        %v4157 = vmax.f32 %v4061, %v4109
        %v4158 = vmax.f32 %v4062, %v4110
        %v4159 = vmax.f32 %v4063, %v4111
        %v4160 = vmax.f32 %v4064, %v4112
        %v4161 = vmax.f32 %v4065, %v4113
        %v4162 = vmax.f32 %v4066, %v4114
        %v4163 = vmax.f32 %v4067, %v4115
        %v4164 = vmax.f32 %v4068, %v4116
        %v4165 = vmax.f32 %v4069, %v4117
        %v4166 = vmax.f32 %v4070, %v4118
        %v4167 = vmax.f32 %v4071, %v4119
        %v4168 = vmax.f32 %v4072, %v4120
        %v4169 = vmax.f32 %v4073, %v4121
        %v4170 = vmax.f32 %v4074, %v4122
        %v4171 = vmax.f32 %v4075, %v4123
        %v4172 = vmax.f32 %v4076, %v4124
        %v4173 = vmax.f32 %v4077, %v4125
        %v4174 = vmax.f32 %v4078, %v4126
        %v4175 = vmax.f32 %v4079, %v4127
        %v4176 = vmax.f32 %v4080, %v4128
        %v4177 = vmax.f32 %v4081, %v4129
        %v4178 = vmax.f32 %v4082, %v4130
        %v4179 = vmax.f32 %v4083, %v4131
        %v4180 = vmax.f32 %v4084, %v4132
        %v4181 = vmax.f32 %v4085, %v4133
        %v4182 = vmax.f32 %v4086, %v4134
        %v4183 = vmax.f32 %v4087, %v4135
        %v4184 = vmax.f32 %v4088, %v4136
        %v4185 = vmax.f32 %v4089, %v4137
        %v4186 = vmax.f32 %v4090, %v4138
        %v4187 = vmax.f32 %v4091, %v4139
        %v4188 = vmax.f32 %v4092, %v4140
        %v4189 = vmax.f32 %v4093, %v4141
        %v4190 = vmax.f32 %v4094, %v4142
        %v4191 = vmax.f32 %v4095, %v4143
        %v4192 = vmax.f32 %v4096, %v4144
        %v4193 = vmax.f32 %v4097, %v4145
        %v4194 = vmax.f32 %v4098, %v4146
        %v4195 = vmax.f32 %v4099, %v4147
        %v4196 = vmax.f32 %v4100, %v4148
        %v4197 = vmax.f32 %v4101, %v4149
        %v4198 = vmax.f32 %v4102, %v4150
        %v4199 = vld [vmem:[%s266] sm:$0xff]
        %v4200 = vld [vmem:[%s266 + $0x8] sm:$0xff]
        %v4201 = vld [vmem:[%s266 + $0x10] sm:$0xf]
        %v4202 = vld [vmem:[%s266 + $0x18] sm:$0xff]
        %v4203 = vld [vmem:[%s266 + $0x20] sm:$0xff]
        %v4204 = vld [vmem:[%s266 + $0x28] sm:$0xf]
        %v4205 = vld [vmem:[%s266 + $0x30] sm:$0xff]
        %v4206 = vld [vmem:[%s266 + $0x38] sm:$0xff]
        %v4207 = vld [vmem:[%s266 + $0x40] sm:$0xf]
        %v4208 = vld [vmem:[%s266 + $0x48] sm:$0xff]
        %v4209 = vld [vmem:[%s266 + $0x50] sm:$0xff]
        %v4210 = vld [vmem:[%s266 + $0x58] sm:$0xf]
        %v4211 = vld [vmem:[%s266 + $0x60] sm:$0xff]
        %v4212 = vld [vmem:[%s266 + $0x68] sm:$0xff]
        %v4213 = vld [vmem:[%s266 + $0x70] sm:$0xf]
        %v4214 = vld [vmem:[%s266 + $0x78] sm:$0xff]
        %v4215 = vld [vmem:[%s266 + $0x80] sm:$0xff]
        %v4216 = vld [vmem:[%s266 + $0x88] sm:$0xf]
        %v4217 = vld [vmem:[%s266 + $0x90] sm:$0xff]
        %v4218 = vld [vmem:[%s266 + $0x98] sm:$0xff]
        %v4219 = vld [vmem:[%s266 + $0xa0] sm:$0xf]
        %v4220 = vld [vmem:[%s266 + $0xa8] sm:$0xff]
        %v4221 = vld [vmem:[%s266 + $0xb0] sm:$0xff]
        %v4222 = vld [vmem:[%s266 + $0xb8] sm:$0xf]
        %v4223 = vld [vmem:[%s266 + $0xc0] sm:$0xff]
        %v4224 = vld [vmem:[%s266 + $0xc8] sm:$0xff]
        %v4225 = vld [vmem:[%s266 + $0xd0] sm:$0xf]
        %v4226 = vld [vmem:[%s266 + $0xd8] sm:$0xff]
        %v4227 = vld [vmem:[%s266 + $0xe0] sm:$0xff]
        %v4228 = vld [vmem:[%s266 + $0xe8] sm:$0xf]
        %v4229 = vld [vmem:[%s266 + $0xf0] sm:$0xff]
        %v4230 = vld [vmem:[%s266 + $0xf8] sm:$0xff]
        %v4231 = vld [vmem:[%s266 + $0x100] sm:$0xf]
        %v4232 = vld [vmem:[%s266 + $0x108] sm:$0xff]
        %v4233 = vld [vmem:[%s266 + $0x110] sm:$0xff]
        %v4234 = vld [vmem:[%s266 + $0x118] sm:$0xf]
        %v4235 = vld [vmem:[%s266 + $0x120] sm:$0xff]
        %v4236 = vld [vmem:[%s266 + $0x128] sm:$0xff]
        %v4237 = vld [vmem:[%s266 + $0x130] sm:$0xf]
        %v4238 = vld [vmem:[%s266 + $0x138] sm:$0xff]
        %v4239 = vld [vmem:[%s266 + $0x140] sm:$0xff]
        %v4240 = vld [vmem:[%s266 + $0x148] sm:$0xf]
        %v4241 = vld [vmem:[%s266 + $0x150] sm:$0xff]
        %v4242 = vld [vmem:[%s266 + $0x158] sm:$0xff]
        %v4243 = vld [vmem:[%s266 + $0x160] sm:$0xf]
        %v4244 = vld [vmem:[%s266 + $0x168] sm:$0xff]
        %v4245 = vld [vmem:[%s266 + $0x170] sm:$0xff]
        %v4246 = vld [vmem:[%s266 + $0x178] sm:$0xf]
        %v4247 = vmax.f32 %v4151, %v4199
        %v4248 = vmax.f32 %v4152, %v4200
        %v4249 = vmax.f32 %v4153, %v4201
        %v4250 = vmax.f32 %v4154, %v4202
        %v4251 = vmax.f32 %v4155, %v4203
        %v4252 = vmax.f32 %v4156, %v4204
        %v4253 = vmax.f32 %v4157, %v4205
        %v4254 = vmax.f32 %v4158, %v4206
        %v4255 = vmax.f32 %v4159, %v4207
        %v4256 = vmax.f32 %v4160, %v4208
        %v4257 = vmax.f32 %v4161, %v4209
        %v4258 = vmax.f32 %v4162, %v4210
        %v4259 = vmax.f32 %v4163, %v4211
        %v4260 = vmax.f32 %v4164, %v4212
        %v4261 = vmax.f32 %v4165, %v4213
        %v4262 = vmax.f32 %v4166, %v4214
        %v4263 = vmax.f32 %v4167, %v4215
        %v4264 = vmax.f32 %v4168, %v4216
        %v4265 = vmax.f32 %v4169, %v4217
        %v4266 = vmax.f32 %v4170, %v4218
        %v4267 = vmax.f32 %v4171, %v4219
        %v4268 = vmax.f32 %v4172, %v4220
        %v4269 = vmax.f32 %v4173, %v4221
        %v4270 = vmax.f32 %v4174, %v4222
        %v4271 = vmax.f32 %v4175, %v4223
        %v4272 = vmax.f32 %v4176, %v4224
        %v4273 = vmax.f32 %v4177, %v4225
        %v4274 = vmax.f32 %v4178, %v4226
        %v4275 = vmax.f32 %v4179, %v4227
        %v4276 = vmax.f32 %v4180, %v4228
        %v4277 = vmax.f32 %v4181, %v4229
        %v4278 = vmax.f32 %v4182, %v4230
        %v4279 = vmax.f32 %v4183, %v4231
        %v4280 = vmax.f32 %v4184, %v4232
        %v4281 = vmax.f32 %v4185, %v4233
        %v4282 = vmax.f32 %v4186, %v4234
        %v4283 = vmax.f32 %v4187, %v4235
        %v4284 = vmax.f32 %v4188, %v4236
        %v4285 = vmax.f32 %v4189, %v4237
        %v4286 = vmax.f32 %v4190, %v4238
        %v4287 = vmax.f32 %v4191, %v4239
        %v4288 = vmax.f32 %v4192, %v4240
        %v4289 = vmax.f32 %v4193, %v4241
        %v4290 = vmax.f32 %v4194, %v4242
        %v4291 = vmax.f32 %v4195, %v4243
        %v4292 = vmax.f32 %v4196, %v4244
        %v4293 = vmax.f32 %v4197, %v4245
        %v4294 = vmax.f32 %v4198, %v4246
        %v4295 = vld [vmem:[%s540] sm:$0xff]
        %v4296 = vld [vmem:[%s540 + $0x8] sm:$0xff]
        %v4297 = vld [vmem:[%s540 + $0x10] sm:$0xf]
        %v4298 = vld [vmem:[%s540 + $0x18] sm:$0xff]
        %v4299 = vld [vmem:[%s540 + $0x20] sm:$0xff]
        %v4300 = vld [vmem:[%s540 + $0x28] sm:$0xf]
        %v4301 = vld [vmem:[%s540 + $0x30] sm:$0xff]
        %v4302 = vld [vmem:[%s540 + $0x38] sm:$0xff]
        %v4303 = vld [vmem:[%s540 + $0x40] sm:$0xf]
        %v4304 = vld [vmem:[%s540 + $0x48] sm:$0xff]
        %v4305 = vld [vmem:[%s540 + $0x50] sm:$0xff]
        %v4306 = vld [vmem:[%s540 + $0x58] sm:$0xf]
        %v4307 = vld [vmem:[%s540 + $0x60] sm:$0xff]
        %v4308 = vld [vmem:[%s540 + $0x68] sm:$0xff]
        %v4309 = vld [vmem:[%s540 + $0x70] sm:$0xf]
        %v4310 = vld [vmem:[%s540 + $0x78] sm:$0xff]
        %v4311 = vld [vmem:[%s540 + $0x80] sm:$0xff]
        %v4312 = vld [vmem:[%s540 + $0x88] sm:$0xf]
        %v4313 = vld [vmem:[%s540 + $0x90] sm:$0xff]
        %v4314 = vld [vmem:[%s540 + $0x98] sm:$0xff]
        %v4315 = vld [vmem:[%s540 + $0xa0] sm:$0xf]
        %v4316 = vld [vmem:[%s540 + $0xa8] sm:$0xff]
        %v4317 = vld [vmem:[%s540 + $0xb0] sm:$0xff]
        %v4318 = vld [vmem:[%s540 + $0xb8] sm:$0xf]
        %v4319 = vld [vmem:[%s540 + $0xc0] sm:$0xff]
        %v4320 = vld [vmem:[%s540 + $0xc8] sm:$0xff]
        %v4321 = vld [vmem:[%s540 + $0xd0] sm:$0xf]
        %v4322 = vld [vmem:[%s540 + $0xd8] sm:$0xff]
        %v4323 = vld [vmem:[%s540 + $0xe0] sm:$0xff]
        %v4324 = vld [vmem:[%s540 + $0xe8] sm:$0xf]
        %v4325 = vld [vmem:[%s540 + $0xf0] sm:$0xff]
        %v4326 = vld [vmem:[%s540 + $0xf8] sm:$0xff]
        %v4327 = vld [vmem:[%s540 + $0x100] sm:$0xf]
        %v4328 = vld [vmem:[%s540 + $0x108] sm:$0xff]
        %v4329 = vld [vmem:[%s540 + $0x110] sm:$0xff]
        %v4330 = vld [vmem:[%s540 + $0x118] sm:$0xf]
        %v4331 = vld [vmem:[%s540 + $0x120] sm:$0xff]
        %v4332 = vld [vmem:[%s540 + $0x128] sm:$0xff]
        %v4333 = vld [vmem:[%s540 + $0x130] sm:$0xf]
        %v4334 = vld [vmem:[%s540 + $0x138] sm:$0xff]
        %v4335 = vld [vmem:[%s540 + $0x140] sm:$0xff]
        %v4336 = vld [vmem:[%s540 + $0x148] sm:$0xf]
        %v4337 = vld [vmem:[%s540 + $0x150] sm:$0xff]
        %v4338 = vld [vmem:[%s540 + $0x158] sm:$0xff]
        %v4339 = vld [vmem:[%s540 + $0x160] sm:$0xf]
        %v4340 = vld [vmem:[%s540 + $0x168] sm:$0xff]
        %v4341 = vld [vmem:[%s540 + $0x170] sm:$0xff]
        %v4342 = vld [vmem:[%s540 + $0x178] sm:$0xf]
        %v4343 = vmax.f32 %v4247, %v4295
        %v4344 = vmax.f32 %v4248, %v4296
        %v4345 = vmax.f32 %v4249, %v4297
        %v4346 = vmax.f32 %v4250, %v4298
        %v4347 = vmax.f32 %v4251, %v4299
        %v4348 = vmax.f32 %v4252, %v4300
        %v4349 = vmax.f32 %v4253, %v4301
        %v4350 = vmax.f32 %v4254, %v4302
        %v4351 = vmax.f32 %v4255, %v4303
        %v4352 = vmax.f32 %v4256, %v4304
        %v4353 = vmax.f32 %v4257, %v4305
        %v4354 = vmax.f32 %v4258, %v4306
        %v4355 = vmax.f32 %v4259, %v4307
        %v4356 = vmax.f32 %v4260, %v4308
        %v4357 = vmax.f32 %v4261, %v4309
        %v4358 = vmax.f32 %v4262, %v4310
        %v4359 = vmax.f32 %v4263, %v4311
        %v4360 = vmax.f32 %v4264, %v4312
        %v4361 = vmax.f32 %v4265, %v4313
        %v4362 = vmax.f32 %v4266, %v4314
        %v4363 = vmax.f32 %v4267, %v4315
        %v4364 = vmax.f32 %v4268, %v4316
        %v4365 = vmax.f32 %v4269, %v4317
        %v4366 = vmax.f32 %v4270, %v4318
        %v4367 = vmax.f32 %v4271, %v4319
        %v4368 = vmax.f32 %v4272, %v4320
        %v4369 = vmax.f32 %v4273, %v4321
        %v4370 = vmax.f32 %v4274, %v4322
        %v4371 = vmax.f32 %v4275, %v4323
        %v4372 = vmax.f32 %v4276, %v4324
        %v4373 = vmax.f32 %v4277, %v4325
        %v4374 = vmax.f32 %v4278, %v4326
        %v4375 = vmax.f32 %v4279, %v4327
        %v4376 = vmax.f32 %v4280, %v4328
        %v4377 = vmax.f32 %v4281, %v4329
        %v4378 = vmax.f32 %v4282, %v4330
        %v4379 = vmax.f32 %v4283, %v4331
        %v4380 = vmax.f32 %v4284, %v4332
        %v4381 = vmax.f32 %v4285, %v4333
        %v4382 = vmax.f32 %v4286, %v4334
        %v4383 = vmax.f32 %v4287, %v4335
        %v4384 = vmax.f32 %v4288, %v4336
        %v4385 = vmax.f32 %v4289, %v4337
        %v4386 = vmax.f32 %v4290, %v4338
        %v4387 = vmax.f32 %v4291, %v4339
        %v4388 = vmax.f32 %v4292, %v4340
        %v4389 = vmax.f32 %v4293, %v4341
        %v4390 = vmax.f32 %v4294, %v4342
        %v4391 = vld [vmem:[%s637] sm:$0xff]
        %v4392 = vld [vmem:[%s637 + $0x8] sm:$0xff]
        %v4393 = vld [vmem:[%s637 + $0x10] sm:$0xf]
        %v4394 = vld [vmem:[%s637 + $0x18] sm:$0xff]
        %v4395 = vld [vmem:[%s637 + $0x20] sm:$0xff]
        %v4396 = vld [vmem:[%s637 + $0x28] sm:$0xf]
        %v4397 = vld [vmem:[%s637 + $0x30] sm:$0xff]
        %v4398 = vld [vmem:[%s637 + $0x38] sm:$0xff]
        %v4399 = vld [vmem:[%s637 + $0x40] sm:$0xf]
        %v4400 = vld [vmem:[%s637 + $0x48] sm:$0xff]
        %v4401 = vld [vmem:[%s637 + $0x50] sm:$0xff]
        %v4402 = vld [vmem:[%s637 + $0x58] sm:$0xf]
        %v4403 = vld [vmem:[%s637 + $0x60] sm:$0xff]
        %v4404 = vld [vmem:[%s637 + $0x68] sm:$0xff]
        %v4405 = vld [vmem:[%s637 + $0x70] sm:$0xf]
        %v4406 = vld [vmem:[%s637 + $0x78] sm:$0xff]
        %v4407 = vld [vmem:[%s637 + $0x80] sm:$0xff]
        %v4408 = vld [vmem:[%s637 + $0x88] sm:$0xf]
        %v4409 = vld [vmem:[%s637 + $0x90] sm:$0xff]
        %v4410 = vld [vmem:[%s637 + $0x98] sm:$0xff]
        %v4411 = vld [vmem:[%s637 + $0xa0] sm:$0xf]
        %v4412 = vld [vmem:[%s637 + $0xa8] sm:$0xff]
        %v4413 = vld [vmem:[%s637 + $0xb0] sm:$0xff]
        %v4414 = vld [vmem:[%s637 + $0xb8] sm:$0xf]
        %v4415 = vld [vmem:[%s637 + $0xc0] sm:$0xff]
        %v4416 = vld [vmem:[%s637 + $0xc8] sm:$0xff]
        %v4417 = vld [vmem:[%s637 + $0xd0] sm:$0xf]
        %v4418 = vld [vmem:[%s637 + $0xd8] sm:$0xff]
        %v4419 = vld [vmem:[%s637 + $0xe0] sm:$0xff]
        %v4420 = vld [vmem:[%s637 + $0xe8] sm:$0xf]
        %v4421 = vld [vmem:[%s637 + $0xf0] sm:$0xff]
        %v4422 = vld [vmem:[%s637 + $0xf8] sm:$0xff]
        %v4423 = vld [vmem:[%s637 + $0x100] sm:$0xf]
        %v4424 = vld [vmem:[%s637 + $0x108] sm:$0xff]
        %v4425 = vld [vmem:[%s637 + $0x110] sm:$0xff]
        %v4426 = vld [vmem:[%s637 + $0x118] sm:$0xf]
        %v4427 = vld [vmem:[%s637 + $0x120] sm:$0xff]
        %v4428 = vld [vmem:[%s637 + $0x128] sm:$0xff]
        %v4429 = vld [vmem:[%s637 + $0x130] sm:$0xf]
        %v4430 = vld [vmem:[%s637 + $0x138] sm:$0xff]
        %v4431 = vld [vmem:[%s637 + $0x140] sm:$0xff]
        %v4432 = vld [vmem:[%s637 + $0x148] sm:$0xf]
        %v4433 = vld [vmem:[%s637 + $0x150] sm:$0xff]
        %v4434 = vld [vmem:[%s637 + $0x158] sm:$0xff]
        %v4435 = vld [vmem:[%s637 + $0x160] sm:$0xf]
        %v4436 = vld [vmem:[%s637 + $0x168] sm:$0xff]
        %v4437 = vld [vmem:[%s637 + $0x170] sm:$0xff]
        %v4438 = vld [vmem:[%s637 + $0x178] sm:$0xf]
        %v4439 = vmax.f32 %v4343, %v4391
        %v4440 = vmax.f32 %v4344, %v4392
        %v4441 = vmax.f32 %v4345, %v4393
        %v4442 = vmax.f32 %v4346, %v4394
        %v4443 = vmax.f32 %v4347, %v4395
        %v4444 = vmax.f32 %v4348, %v4396
        %v4445 = vmax.f32 %v4349, %v4397
        %v4446 = vmax.f32 %v4350, %v4398
        %v4447 = vmax.f32 %v4351, %v4399
        %v4448 = vmax.f32 %v4352, %v4400
        %v4449 = vmax.f32 %v4353, %v4401
        %v4450 = vmax.f32 %v4354, %v4402
        %v4451 = vmax.f32 %v4355, %v4403
        %v4452 = vmax.f32 %v4356, %v4404
        %v4453 = vmax.f32 %v4357, %v4405
        %v4454 = vmax.f32 %v4358, %v4406
        %v4455 = vmax.f32 %v4359, %v4407
        %v4456 = vmax.f32 %v4360, %v4408
        %v4457 = vmax.f32 %v4361, %v4409
        %v4458 = vmax.f32 %v4362, %v4410
        %v4459 = vmax.f32 %v4363, %v4411
        %v4460 = vmax.f32 %v4364, %v4412
        %v4461 = vmax.f32 %v4365, %v4413
        %v4462 = vmax.f32 %v4366, %v4414
        %v4463 = vmax.f32 %v4367, %v4415
        %v4464 = vmax.f32 %v4368, %v4416
        %v4465 = vmax.f32 %v4369, %v4417
        %v4466 = vmax.f32 %v4370, %v4418
        %v4467 = vmax.f32 %v4371, %v4419
        %v4468 = vmax.f32 %v4372, %v4420
        %v4469 = vmax.f32 %v4373, %v4421
        %v4470 = vmax.f32 %v4374, %v4422
        %v4471 = vmax.f32 %v4375, %v4423
        %v4472 = vmax.f32 %v4376, %v4424
        %v4473 = vmax.f32 %v4377, %v4425
        %v4474 = vmax.f32 %v4378, %v4426
        %v4475 = vmax.f32 %v4379, %v4427
        %v4476 = vmax.f32 %v4380, %v4428
        %v4477 = vmax.f32 %v4381, %v4429
        %v4478 = vmax.f32 %v4382, %v4430
        %v4479 = vmax.f32 %v4383, %v4431
        %v4480 = vmax.f32 %v4384, %v4432
        %v4481 = vmax.f32 %v4385, %v4433
        %v4482 = vmax.f32 %v4386, %v4434
        %v4483 = vmax.f32 %v4387, %v4435
        %v4484 = vmax.f32 %v4388, %v4436
        %v4485 = vmax.f32 %v4389, %v4437
        %v4486 = vmax.f32 %v4390, %v4438
        %v4535 = vrot.slane %v4439, 1
        %v4536 = vrot.slane %v4440, 1
        %v4537 = vsel %vm782, %v4535, %v4536
        %v4538 = vrot.slane %v4441, 1
        %v4539 = vsel %vm782, %v4536, %v4538
        %v4540 = vrot.slane %v4442, 1
        %v4541 = vrot.slane %v4443, 1
        %v4542 = vsel %vm782, %v4540, %v4541
        %v4543 = vrot.slane %v4444, 1
        %v4544 = vsel %vm782, %v4541, %v4543
        %v4545 = vrot.slane %v4445, 1
        %v4546 = vrot.slane %v4446, 1
        %v4547 = vsel %vm782, %v4545, %v4546
        %v4548 = vrot.slane %v4447, 1
        %v4549 = vsel %vm782, %v4546, %v4548
        %v4550 = vrot.slane %v4448, 1
        %v4551 = vrot.slane %v4449, 1
        %v4552 = vsel %vm782, %v4550, %v4551
        %v4553 = vrot.slane %v4450, 1
        %v4554 = vsel %vm782, %v4551, %v4553
        %v4555 = vrot.slane %v4451, 1
        %v4556 = vrot.slane %v4452, 1
        %v4557 = vsel %vm782, %v4555, %v4556
        %v4558 = vrot.slane %v4453, 1
        %v4559 = vsel %vm782, %v4556, %v4558
        %v4560 = vrot.slane %v4454, 1
        %v4561 = vrot.slane %v4455, 1
        %v4562 = vsel %vm782, %v4560, %v4561
        %v4563 = vrot.slane %v4456, 1
        %v4564 = vsel %vm782, %v4561, %v4563
        %v4565 = vrot.slane %v4457, 1
        %v4566 = vrot.slane %v4458, 1
        %v4567 = vsel %vm782, %v4565, %v4566
        %v4568 = vrot.slane %v4459, 1
        %v4569 = vsel %vm782, %v4566, %v4568
        %v4570 = vrot.slane %v4460, 1
        %v4571 = vrot.slane %v4461, 1
        %v4572 = vsel %vm782, %v4570, %v4571
        %v4573 = vrot.slane %v4462, 1
        %v4574 = vsel %vm782, %v4571, %v4573
        %v4575 = vrot.slane %v4463, 1
        %v4576 = vrot.slane %v4464, 1
        %v4577 = vsel %vm782, %v4575, %v4576
        %v4578 = vrot.slane %v4465, 1
        %v4579 = vsel %vm782, %v4576, %v4578
        %v4580 = vrot.slane %v4466, 1
        %v4581 = vrot.slane %v4467, 1
        %v4582 = vsel %vm782, %v4580, %v4581
        %v4583 = vrot.slane %v4468, 1
        %v4584 = vsel %vm782, %v4581, %v4583
        %v4585 = vrot.slane %v4469, 1
        %v4586 = vrot.slane %v4470, 1
        %v4587 = vsel %vm782, %v4585, %v4586
        %v4588 = vrot.slane %v4471, 1
        %v4589 = vsel %vm782, %v4586, %v4588
        %v4590 = vrot.slane %v4472, 1
        %v4591 = vrot.slane %v4473, 1
        %v4592 = vsel %vm782, %v4590, %v4591
        %v4593 = vrot.slane %v4474, 1
        %v4594 = vsel %vm782, %v4591, %v4593
        %v4595 = vrot.slane %v4475, 1
        %v4596 = vrot.slane %v4476, 1
        %v4597 = vsel %vm782, %v4595, %v4596
        %v4598 = vrot.slane %v4477, 1
        %v4599 = vsel %vm782, %v4596, %v4598
        %v4600 = vrot.slane %v4478, 1
        %v4601 = vrot.slane %v4479, 1
        %v4602 = vsel %vm782, %v4600, %v4601
        %v4603 = vrot.slane %v4480, 1
        %v4604 = vsel %vm782, %v4601, %v4603
        %v4605 = vrot.slane %v4481, 1
        %v4606 = vrot.slane %v4482, 1
        %v4607 = vsel %vm782, %v4605, %v4606
        %v4608 = vrot.slane %v4483, 1
        %v4609 = vsel %vm782, %v4606, %v4608
        %v4610 = vrot.slane %v4484, 1
        %v4611 = vrot.slane %v4485, 1
        %v4612 = vsel %vm782, %v4610, %v4611
        %v4613 = vrot.slane %v4486, 1
        %v4614 = vsel %vm782, %v4611, %v4613
        %v4647 = vmax.f32 %v4439, %v4537
        %v4648 = vmax.f32 %v4440, %v4539
        %v4649 = vmax.f32 %v4442, %v4542
        %v4650 = vmax.f32 %v4443, %v4544
        %v4651 = vmax.f32 %v4445, %v4547
        %v4652 = vmax.f32 %v4446, %v4549
        %v4653 = vmax.f32 %v4448, %v4552
        %v4654 = vmax.f32 %v4449, %v4554
        %v4655 = vmax.f32 %v4451, %v4557
        %v4656 = vmax.f32 %v4452, %v4559
        %v4657 = vmax.f32 %v4454, %v4562
        %v4658 = vmax.f32 %v4455, %v4564
        %v4659 = vmax.f32 %v4457, %v4567
        %v4660 = vmax.f32 %v4458, %v4569
        %v4661 = vmax.f32 %v4460, %v4572
        %v4662 = vmax.f32 %v4461, %v4574
        %v4663 = vmax.f32 %v4463, %v4577
        %v4664 = vmax.f32 %v4464, %v4579
        %v4665 = vmax.f32 %v4466, %v4582
        %v4666 = vmax.f32 %v4467, %v4584
        %v4667 = vmax.f32 %v4469, %v4587
        %v4668 = vmax.f32 %v4470, %v4589
        %v4669 = vmax.f32 %v4472, %v4592
        %v4670 = vmax.f32 %v4473, %v4594
        %v4671 = vmax.f32 %v4475, %v4597
        %v4672 = vmax.f32 %v4476, %v4599
        %v4673 = vmax.f32 %v4478, %v4602
        %v4674 = vmax.f32 %v4479, %v4604
        %v4675 = vmax.f32 %v4481, %v4607
        %v4676 = vmax.f32 %v4482, %v4609
        %v4677 = vmax.f32 %v4484, %v4612
        %v4678 = vmax.f32 %v4485, %v4614
        %v4679 = vrot.slane %v4439, 2
        %v4680 = vrot.slane %v4440, 2
        %v4681 = vsel %vm927, %v4679, %v4680
        %v4682 = vrot.slane %v4441, 2
        %v4683 = vsel %vm927, %v4680, %v4682
        %v4684 = vrot.slane %v4442, 2
        %v4685 = vrot.slane %v4443, 2
        %v4686 = vsel %vm927, %v4684, %v4685
        %v4687 = vrot.slane %v4444, 2
        %v4688 = vsel %vm927, %v4685, %v4687
        %v4689 = vrot.slane %v4445, 2
        %v4690 = vrot.slane %v4446, 2
        %v4691 = vsel %vm927, %v4689, %v4690
        %v4692 = vrot.slane %v4447, 2
        %v4693 = vsel %vm927, %v4690, %v4692
        %v4694 = vrot.slane %v4448, 2
        %v4695 = vrot.slane %v4449, 2
        %v4696 = vsel %vm927, %v4694, %v4695
        %v4697 = vrot.slane %v4450, 2
        %v4698 = vsel %vm927, %v4695, %v4697
        %v4699 = vrot.slane %v4451, 2
        %v4700 = vrot.slane %v4452, 2
        %v4701 = vsel %vm927, %v4699, %v4700
        %v4702 = vrot.slane %v4453, 2
        %v4703 = vsel %vm927, %v4700, %v4702
        %v4704 = vrot.slane %v4454, 2
        %v4705 = vrot.slane %v4455, 2
        %v4706 = vsel %vm927, %v4704, %v4705
        %v4707 = vrot.slane %v4456, 2
        %v4708 = vsel %vm927, %v4705, %v4707
        %v4709 = vrot.slane %v4457, 2
        %v4710 = vrot.slane %v4458, 2
        %v4711 = vsel %vm927, %v4709, %v4710
        %v4712 = vrot.slane %v4459, 2
        %v4713 = vsel %vm927, %v4710, %v4712
        %v4714 = vrot.slane %v4460, 2
        %v4715 = vrot.slane %v4461, 2
        %v4716 = vsel %vm927, %v4714, %v4715
        %v4717 = vrot.slane %v4462, 2
        %v4718 = vsel %vm927, %v4715, %v4717
        %v4719 = vrot.slane %v4463, 2
        %v4720 = vrot.slane %v4464, 2
        %v4721 = vsel %vm927, %v4719, %v4720
        %v4722 = vrot.slane %v4465, 2
        %v4723 = vsel %vm927, %v4720, %v4722
        %v4724 = vrot.slane %v4466, 2
        %v4725 = vrot.slane %v4467, 2
        %v4726 = vsel %vm927, %v4724, %v4725
        %v4727 = vrot.slane %v4468, 2
        %v4728 = vsel %vm927, %v4725, %v4727
        %v4729 = vrot.slane %v4469, 2
        %v4730 = vrot.slane %v4470, 2
        %v4731 = vsel %vm927, %v4729, %v4730
        %v4732 = vrot.slane %v4471, 2
        %v4733 = vsel %vm927, %v4730, %v4732
        %v4734 = vrot.slane %v4472, 2
        %v4735 = vrot.slane %v4473, 2
        %v4736 = vsel %vm927, %v4734, %v4735
        %v4737 = vrot.slane %v4474, 2
        %v4738 = vsel %vm927, %v4735, %v4737
        %v4739 = vrot.slane %v4475, 2
        %v4740 = vrot.slane %v4476, 2
        %v4741 = vsel %vm927, %v4739, %v4740
        %v4742 = vrot.slane %v4477, 2
        %v4743 = vsel %vm927, %v4740, %v4742
        %v4744 = vrot.slane %v4478, 2
        %v4745 = vrot.slane %v4479, 2
        %v4746 = vsel %vm927, %v4744, %v4745
        %v4747 = vrot.slane %v4480, 2
        %v4748 = vsel %vm927, %v4745, %v4747
        %v4749 = vrot.slane %v4481, 2
        %v4750 = vrot.slane %v4482, 2
        %v4751 = vsel %vm927, %v4749, %v4750
        %v4752 = vrot.slane %v4483, 2
        %v4753 = vsel %vm927, %v4750, %v4752
        %v4754 = vrot.slane %v4484, 2
        %v4755 = vrot.slane %v4485, 2
        %v4756 = vsel %vm927, %v4754, %v4755
        %v4757 = vrot.slane %v4486, 2
        %v4758 = vsel %vm927, %v4755, %v4757
        %v4791 = vmax.f32 %v4647, %v4681
        %v4792 = vmax.f32 %v4648, %v4683
        %v4793 = vmax.f32 %v4649, %v4686
        %v4794 = vmax.f32 %v4650, %v4688
        %v4795 = vmax.f32 %v4651, %v4691
        %v4796 = vmax.f32 %v4652, %v4693
        %v4797 = vmax.f32 %v4653, %v4696
        %v4798 = vmax.f32 %v4654, %v4698
        %v4799 = vmax.f32 %v4655, %v4701
        %v4800 = vmax.f32 %v4656, %v4703
        %v4801 = vmax.f32 %v4657, %v4706
        %v4802 = vmax.f32 %v4658, %v4708
        %v4803 = vmax.f32 %v4659, %v4711
        %v4804 = vmax.f32 %v4660, %v4713
        %v4805 = vmax.f32 %v4661, %v4716
        %v4806 = vmax.f32 %v4662, %v4718
        %v4807 = vmax.f32 %v4663, %v4721
        %v4808 = vmax.f32 %v4664, %v4723
        %v4809 = vmax.f32 %v4665, %v4726
        %v4810 = vmax.f32 %v4666, %v4728
        %v4811 = vmax.f32 %v4667, %v4731
        %v4812 = vmax.f32 %v4668, %v4733
        %v4813 = vmax.f32 %v4669, %v4736
        %v4814 = vmax.f32 %v4670, %v4738
        %v4815 = vmax.f32 %v4671, %v4741
        %v4816 = vmax.f32 %v4672, %v4743
        %v4817 = vmax.f32 %v4673, %v4746
        %v4818 = vmax.f32 %v4674, %v4748
        %v4819 = vmax.f32 %v4675, %v4751
        %v4820 = vmax.f32 %v4676, %v4753
        %v4821 = vmax.f32 %v4677, %v4756
        %v4822 = vmax.f32 %v4678, %v4758
        %v4823 = vrot.slane %v4439, 3
        %v4824 = vrot.slane %v4440, 3
        %v4825 = vsel %vm1072, %v4823, %v4824
        %v4826 = vrot.slane %v4441, 3
        %v4827 = vsel %vm1072, %v4824, %v4826
        %v4828 = vrot.slane %v4442, 3
        %v4829 = vrot.slane %v4443, 3
        %v4830 = vsel %vm1072, %v4828, %v4829
        %v4831 = vrot.slane %v4444, 3
        %v4832 = vsel %vm1072, %v4829, %v4831
        %v4833 = vrot.slane %v4445, 3
        %v4834 = vrot.slane %v4446, 3
        %v4835 = vsel %vm1072, %v4833, %v4834
        %v4836 = vrot.slane %v4447, 3
        %v4837 = vsel %vm1072, %v4834, %v4836
        %v4838 = vrot.slane %v4448, 3
        %v4839 = vrot.slane %v4449, 3
        %v4840 = vsel %vm1072, %v4838, %v4839
        %v4841 = vrot.slane %v4450, 3
        %v4842 = vsel %vm1072, %v4839, %v4841
        %v4843 = vrot.slane %v4451, 3
        %v4844 = vrot.slane %v4452, 3
        %v4845 = vsel %vm1072, %v4843, %v4844
        %v4846 = vrot.slane %v4453, 3
        %v4847 = vsel %vm1072, %v4844, %v4846
        %v4848 = vrot.slane %v4454, 3
        %v4849 = vrot.slane %v4455, 3
        %v4850 = vsel %vm1072, %v4848, %v4849
        %v4851 = vrot.slane %v4456, 3
        %v4852 = vsel %vm1072, %v4849, %v4851
        %v4853 = vrot.slane %v4457, 3
        %v4854 = vrot.slane %v4458, 3
        %v4855 = vsel %vm1072, %v4853, %v4854
        %v4856 = vrot.slane %v4459, 3
        %v4857 = vsel %vm1072, %v4854, %v4856
        %v4858 = vrot.slane %v4460, 3
        %v4859 = vrot.slane %v4461, 3
        %v4860 = vsel %vm1072, %v4858, %v4859
        %v4861 = vrot.slane %v4462, 3
        %v4862 = vsel %vm1072, %v4859, %v4861
        %v4863 = vrot.slane %v4463, 3
        %v4864 = vrot.slane %v4464, 3
        %v4865 = vsel %vm1072, %v4863, %v4864
        %v4866 = vrot.slane %v4465, 3
        %v4867 = vsel %vm1072, %v4864, %v4866
        %v4868 = vrot.slane %v4466, 3
        %v4869 = vrot.slane %v4467, 3
        %v4870 = vsel %vm1072, %v4868, %v4869
        %v4871 = vrot.slane %v4468, 3
        %v4872 = vsel %vm1072, %v4869, %v4871
        %v4873 = vrot.slane %v4469, 3
        %v4874 = vrot.slane %v4470, 3
        %v4875 = vsel %vm1072, %v4873, %v4874
        %v4876 = vrot.slane %v4471, 3
        %v4877 = vsel %vm1072, %v4874, %v4876
        %v4878 = vrot.slane %v4472, 3
        %v4879 = vrot.slane %v4473, 3
        %v4880 = vsel %vm1072, %v4878, %v4879
        %v4881 = vrot.slane %v4474, 3
        %v4882 = vsel %vm1072, %v4879, %v4881
        %v4883 = vrot.slane %v4475, 3
        %v4884 = vrot.slane %v4476, 3
        %v4885 = vsel %vm1072, %v4883, %v4884
        %v4886 = vrot.slane %v4477, 3
        %v4887 = vsel %vm1072, %v4884, %v4886
        %v4888 = vrot.slane %v4478, 3
        %v4889 = vrot.slane %v4479, 3
        %v4890 = vsel %vm1072, %v4888, %v4889
        %v4891 = vrot.slane %v4480, 3
        %v4892 = vsel %vm1072, %v4889, %v4891
        %v4893 = vrot.slane %v4481, 3
        %v4894 = vrot.slane %v4482, 3
        %v4895 = vsel %vm1072, %v4893, %v4894
        %v4896 = vrot.slane %v4483, 3
        %v4897 = vsel %vm1072, %v4894, %v4896
        %v4898 = vrot.slane %v4484, 3
        %v4899 = vrot.slane %v4485, 3
        %v4900 = vsel %vm1072, %v4898, %v4899
        %v4901 = vrot.slane %v4486, 3
        %v4902 = vsel %vm1072, %v4899, %v4901
        %v4935 = vmax.f32 %v4791, %v4825
        %v4936 = vmax.f32 %v4792, %v4827
        %v4937 = vmax.f32 %v4793, %v4830
        %v4938 = vmax.f32 %v4794, %v4832
        %v4939 = vmax.f32 %v4795, %v4835
        %v4940 = vmax.f32 %v4796, %v4837
        %v4941 = vmax.f32 %v4797, %v4840
        %v4942 = vmax.f32 %v4798, %v4842
        %v4943 = vmax.f32 %v4799, %v4845
        %v4944 = vmax.f32 %v4800, %v4847
        %v4945 = vmax.f32 %v4801, %v4850
        %v4946 = vmax.f32 %v4802, %v4852
        %v4947 = vmax.f32 %v4803, %v4855
        %v4948 = vmax.f32 %v4804, %v4857
        %v4949 = vmax.f32 %v4805, %v4860
        %v4950 = vmax.f32 %v4806, %v4862
        %v4951 = vmax.f32 %v4807, %v4865
        %v4952 = vmax.f32 %v4808, %v4867
        %v4953 = vmax.f32 %v4809, %v4870
        %v4954 = vmax.f32 %v4810, %v4872
        %v4955 = vmax.f32 %v4811, %v4875
        %v4956 = vmax.f32 %v4812, %v4877
        %v4957 = vmax.f32 %v4813, %v4880
        %v4958 = vmax.f32 %v4814, %v4882
        %v4959 = vmax.f32 %v4815, %v4885
        %v4960 = vmax.f32 %v4816, %v4887
        %v4961 = vmax.f32 %v4817, %v4890
        %v4962 = vmax.f32 %v4818, %v4892
        %v4963 = vmax.f32 %v4819, %v4895
        %v4964 = vmax.f32 %v4820, %v4897
        %v4965 = vmax.f32 %v4821, %v4900
        %v4966 = vmax.f32 %v4822, %v4902
        %v4967 = vrot.slane %v4439, 4
        %v4968 = vrot.slane %v4440, 4
        %v4969 = vsel %vm1217, %v4967, %v4968
        %v4970 = vrot.slane %v4441, 4
        %v4971 = vsel %vm1217, %v4968, %v4970
        %v4972 = vrot.slane %v4442, 4
        %v4973 = vrot.slane %v4443, 4
        %v4974 = vsel %vm1217, %v4972, %v4973
        %v4975 = vrot.slane %v4444, 4
        %v4976 = vsel %vm1217, %v4973, %v4975
        %v4977 = vrot.slane %v4445, 4
        %v4978 = vrot.slane %v4446, 4
        %v4979 = vsel %vm1217, %v4977, %v4978
        %v4980 = vrot.slane %v4447, 4
        %v4981 = vsel %vm1217, %v4978, %v4980
        %v4982 = vrot.slane %v4448, 4
        %v4983 = vrot.slane %v4449, 4
        %v4984 = vsel %vm1217, %v4982, %v4983
        %v4985 = vrot.slane %v4450, 4
        %v4986 = vsel %vm1217, %v4983, %v4985
        %v4987 = vrot.slane %v4451, 4
        %v4988 = vrot.slane %v4452, 4
        %v4989 = vsel %vm1217, %v4987, %v4988
        %v4990 = vrot.slane %v4453, 4
        %v4991 = vsel %vm1217, %v4988, %v4990
        %v4992 = vrot.slane %v4454, 4
        %v4993 = vrot.slane %v4455, 4
        %v4994 = vsel %vm1217, %v4992, %v4993
        %v4995 = vrot.slane %v4456, 4
        %v4996 = vsel %vm1217, %v4993, %v4995
        %v4997 = vrot.slane %v4457, 4
        %v4998 = vrot.slane %v4458, 4
        %v4999 = vsel %vm1217, %v4997, %v4998
        %v5000 = vrot.slane %v4459, 4
        %v5001 = vsel %vm1217, %v4998, %v5000
        %v5002 = vrot.slane %v4460, 4
        %v5003 = vrot.slane %v4461, 4
        %v5004 = vsel %vm1217, %v5002, %v5003
        %v5005 = vrot.slane %v4462, 4
        %v5006 = vsel %vm1217, %v5003, %v5005
        %v5007 = vrot.slane %v4463, 4
        %v5008 = vrot.slane %v4464, 4
        %v5009 = vsel %vm1217, %v5007, %v5008
        %v5010 = vrot.slane %v4465, 4
        %v5011 = vsel %vm1217, %v5008, %v5010
        %v5012 = vrot.slane %v4466, 4
        %v5013 = vrot.slane %v4467, 4
        %v5014 = vsel %vm1217, %v5012, %v5013
        %v5015 = vrot.slane %v4468, 4
        %v5016 = vsel %vm1217, %v5013, %v5015
        %v5017 = vrot.slane %v4469, 4
        %v5018 = vrot.slane %v4470, 4
        %v5019 = vsel %vm1217, %v5017, %v5018
        %v5020 = vrot.slane %v4471, 4
        %v5021 = vsel %vm1217, %v5018, %v5020
        %v5022 = vrot.slane %v4472, 4
        %v5023 = vrot.slane %v4473, 4
        %v5024 = vsel %vm1217, %v5022, %v5023
        %v5025 = vrot.slane %v4474, 4
        %v5026 = vsel %vm1217, %v5023, %v5025
        %v5027 = vrot.slane %v4475, 4
        %v5028 = vrot.slane %v4476, 4
        %v5029 = vsel %vm1217, %v5027, %v5028
        %v5030 = vrot.slane %v4477, 4
        %v5031 = vsel %vm1217, %v5028, %v5030
        %v5032 = vrot.slane %v4478, 4
        %v5033 = vrot.slane %v4479, 4
        %v5034 = vsel %vm1217, %v5032, %v5033
        %v5035 = vrot.slane %v4480, 4
        %v5036 = vsel %vm1217, %v5033, %v5035
        %v5037 = vrot.slane %v4481, 4
        %v5038 = vrot.slane %v4482, 4
        %v5039 = vsel %vm1217, %v5037, %v5038
        %v5040 = vrot.slane %v4483, 4
        %v5041 = vsel %vm1217, %v5038, %v5040
        %v5042 = vrot.slane %v4484, 4
        %v5043 = vrot.slane %v4485, 4
        %v5044 = vsel %vm1217, %v5042, %v5043
        %v5045 = vrot.slane %v4486, 4
        %v5046 = vsel %vm1217, %v5043, %v5045
        %v5079 = vmax.f32 %v4935, %v4969
        %v5080 = vmax.f32 %v4936, %v4971
        %v5081 = vmax.f32 %v4937, %v4974
        %v5082 = vmax.f32 %v4938, %v4976
        %v5083 = vmax.f32 %v4939, %v4979
        %v5084 = vmax.f32 %v4940, %v4981
        %v5085 = vmax.f32 %v4941, %v4984
        %v5086 = vmax.f32 %v4942, %v4986
        %v5087 = vmax.f32 %v4943, %v4989
        %v5088 = vmax.f32 %v4944, %v4991
        %v5089 = vmax.f32 %v4945, %v4994
        %v5090 = vmax.f32 %v4946, %v4996
        %v5091 = vmax.f32 %v4947, %v4999
        %v5092 = vmax.f32 %v4948, %v5001
        %v5093 = vmax.f32 %v4949, %v5004
        %v5094 = vmax.f32 %v4950, %v5006
        %v5095 = vmax.f32 %v4951, %v5009
        %v5096 = vmax.f32 %v4952, %v5011
        %v5097 = vmax.f32 %v4953, %v5014
        %v5098 = vmax.f32 %v4954, %v5016
        %v5099 = vmax.f32 %v4955, %v5019
        %v5100 = vmax.f32 %v4956, %v5021
        %v5101 = vmax.f32 %v4957, %v5024
        %v5102 = vmax.f32 %v4958, %v5026
        %v5103 = vmax.f32 %v4959, %v5029
        %v5104 = vmax.f32 %v4960, %v5031
        %v5105 = vmax.f32 %v4961, %v5034
        %v5106 = vmax.f32 %v4962, %v5036
        %v5107 = vmax.f32 %v4963, %v5039
        %v5108 = vmax.f32 %v4964, %v5041
        %v5109 = vmax.f32 %v4965, %v5044
        %v5110 = vmax.f32 %v4966, %v5046
        %s5111 = scalar_lea.vmem [#allocation6], 384
        %v5112 = vld [vmem:[%s5111] sm:$0xff]
        %v5113 = vld [vmem:[%s5111 + $0x8] sm:$0xff]
        %v5114 = vld [vmem:[%s5111 + $0x10] sm:$0xff]
        %v5115 = vld [vmem:[%s5111 + $0x18] sm:$0xff]
        %v5116 = vld [vmem:[%s5111 + $0x20] sm:$0xff]
        %v5117 = vld [vmem:[%s5111 + $0x28] sm:$0xff]
        %v5118 = vld [vmem:[%s5111 + $0x30] sm:$0xff]
        %v5119 = vld [vmem:[%s5111 + $0x38] sm:$0xff]
        %v5120 = vld [vmem:[%s5111 + $0x40] sm:$0xff]
        %v5121 = vld [vmem:[%s5111 + $0x48] sm:$0xff]
        %v5122 = vld [vmem:[%s5111 + $0x50] sm:$0xff]
        %v5123 = vld [vmem:[%s5111 + $0x58] sm:$0xff]
        %v5124 = vld [vmem:[%s5111 + $0x60] sm:$0xff]
        %v5125 = vld [vmem:[%s5111 + $0x68] sm:$0xff]
        %v5126 = vld [vmem:[%s5111 + $0x70] sm:$0xff]
        %v5127 = vld [vmem:[%s5111 + $0x78] sm:$0xff]
        %5128 = vmatpush.msra.mxu0 %v5127
        %5129 = vmatpush.msra.mxu0 %v5126
        %5130 = vmatpush.msra.mxu0 %v5125
        %5131 = vmatpush.msra.mxu0 %v5124
        %5132 = vmatpush.msra.mxu0 %v5123
        %5133 = vmatpush.msra.mxu0 %v5122
        %5134 = vmatpush.msra.mxu0 %v5121
        %5135 = vmatpush.msra.mxu0 %v5120
        %5136 = vmatpush.msra.mxu0 %v5119
        %5137 = vmatpush.msra.mxu0 %v5118
        %5138 = vmatpush.msra.mxu0 %v5117
        %5139 = vmatpush.msra.mxu0 %v5116
        %5140 = vmatpush.msra.mxu0 %v5115
        %5141 = vmatpush.msra.mxu0 %v5114
        %5142 = vmatpush.msra.mxu0 %v5113
        %5143 = vmatpush.msra.mxu0 %v5112
        %5144 = vmatmul.f32.gmra.mxu0 %v5079
        %v5145 = vpop.f32.mrf.mxu0
        %v5146 = vadd.f32 0.0, %v5145
        %5147 = vmatmul.f32.gmra.mxu0 %v5080
        %v5148 = vpop.f32.mrf.mxu0
        %v5149 = vadd.f32 0.0, %v5148
        %5150 = vmatmul.f32.gmra.mxu0 %v5081
        %v5151 = vpop.f32.mrf.mxu0
        %v5152 = vadd.f32 0.0, %v5151
        %5153 = vmatmul.f32.gmra.mxu0 %v5082
        %v5154 = vpop.f32.mrf.mxu0
        %v5155 = vadd.f32 0.0, %v5154
        %5156 = vmatmul.f32.gmra.mxu0 %v5083
        %v5157 = vpop.f32.mrf.mxu0
        %v5158 = vadd.f32 0.0, %v5157
        %5159 = vmatmul.f32.gmra.mxu0 %v5084
        %v5160 = vpop.f32.mrf.mxu0
        %v5161 = vadd.f32 0.0, %v5160
        %5162 = vmatmul.f32.gmra.mxu0 %v5085
        %v5163 = vpop.f32.mrf.mxu0
        %v5164 = vadd.f32 0.0, %v5163
        %5165 = vmatmul.f32.gmra.mxu0 %v5086
        %v5166 = vpop.f32.mrf.mxu0
        %v5167 = vadd.f32 0.0, %v5166
        %5168 = vmatmul.f32.gmra.mxu0 %v5087
        %v5169 = vpop.f32.mrf.mxu0
        %v5170 = vadd.f32 0.0, %v5169
        %5171 = vmatmul.f32.gmra.mxu0 %v5088
        %v5172 = vpop.f32.mrf.mxu0
        %v5173 = vadd.f32 0.0, %v5172
        %5174 = vmatmul.f32.gmra.mxu0 %v5089
        %v5175 = vpop.f32.mrf.mxu0
        %v5176 = vadd.f32 0.0, %v5175
        %5177 = vmatmul.f32.gmra.mxu0 %v5090
        %v5178 = vpop.f32.mrf.mxu0
        %v5179 = vadd.f32 0.0, %v5178
        %5180 = vmatmul.f32.gmra.mxu0 %v5091
        %v5181 = vpop.f32.mrf.mxu0
        %v5182 = vadd.f32 0.0, %v5181
        %5183 = vmatmul.f32.gmra.mxu0 %v5092
        %v5184 = vpop.f32.mrf.mxu0
        %v5185 = vadd.f32 0.0, %v5184
        %5186 = vmatmul.f32.gmra.mxu0 %v5093
        %v5187 = vpop.f32.mrf.mxu0
        %v5188 = vadd.f32 0.0, %v5187
        %5189 = vmatmul.f32.gmra.mxu0 %v5094
        %v5190 = vpop.f32.mrf.mxu0
        %v5191 = vadd.f32 0.0, %v5190
        %5192 = vmatmul.f32.gmra.mxu0 %v5095
        %v5193 = vpop.f32.mrf.mxu0
        %v5194 = vadd.f32 0.0, %v5193
        %5195 = vmatmul.f32.gmra.mxu0 %v5096
        %v5196 = vpop.f32.mrf.mxu0
        %v5197 = vadd.f32 0.0, %v5196
        %5198 = vmatmul.f32.gmra.mxu0 %v5097
        %v5199 = vpop.f32.mrf.mxu0
        %v5200 = vadd.f32 0.0, %v5199
        %5201 = vmatmul.f32.gmra.mxu0 %v5098
        %v5202 = vpop.f32.mrf.mxu0
        %v5203 = vadd.f32 0.0, %v5202
        %5204 = vmatmul.f32.gmra.mxu0 %v5099
        %v5205 = vpop.f32.mrf.mxu0
        %v5206 = vadd.f32 0.0, %v5205
        %5207 = vmatmul.f32.gmra.mxu0 %v5100
        %v5208 = vpop.f32.mrf.mxu0
        %v5209 = vadd.f32 0.0, %v5208
        %5210 = vmatmul.f32.gmra.mxu0 %v5101
        %v5211 = vpop.f32.mrf.mxu0
        %v5212 = vadd.f32 0.0, %v5211
        %5213 = vmatmul.f32.gmra.mxu0 %v5102
        %v5214 = vpop.f32.mrf.mxu0
        %v5215 = vadd.f32 0.0, %v5214
        %5216 = vmatmul.f32.gmra.mxu0 %v5103
        %v5217 = vpop.f32.mrf.mxu0
        %v5218 = vadd.f32 0.0, %v5217
        %5219 = vmatmul.f32.gmra.mxu0 %v5104
        %v5220 = vpop.f32.mrf.mxu0
        %v5221 = vadd.f32 0.0, %v5220
        %5222 = vmatmul.f32.gmra.mxu0 %v5105
        %v5223 = vpop.f32.mrf.mxu0
        %v5224 = vadd.f32 0.0, %v5223
        %5225 = vmatmul.f32.gmra.mxu0 %v5106
        %v5226 = vpop.f32.mrf.mxu0
        %v5227 = vadd.f32 0.0, %v5226
        %5228 = vmatmul.f32.gmra.mxu0 %v5107
        %v5229 = vpop.f32.mrf.mxu0
        %v5230 = vadd.f32 0.0, %v5229
        %5231 = vmatmul.f32.gmra.mxu0 %v5108
        %v5232 = vpop.f32.mrf.mxu0
        %v5233 = vadd.f32 0.0, %v5232
        %5234 = vmatmul.f32.gmra.mxu0 %v5109
        %v5235 = vpop.f32.mrf.mxu0
        %v5236 = vadd.f32 0.0, %v5235
        %5237 = vmatmul.f32.gmra.mxu0 %v5110
        %v5238 = vpop.f32.mrf.mxu0
        %v5239 = vadd.f32 0.0, %v5238
        %5240 = vdwg.mxu0
        %v5241 = vadd.f32 %v3991, %v5146
        %v5242 = vadd.f32 %v3992, %v5149
        %v5243 = vadd.f32 %v3993, %v5152
        %v5244 = vadd.f32 %v3994, %v5155
        %v5245 = vadd.f32 %v3995, %v5158
        %v5246 = vadd.f32 %v3996, %v5161
        %v5247 = vadd.f32 %v3997, %v5164
        %v5248 = vadd.f32 %v3998, %v5167
        %v5249 = vadd.f32 %v3999, %v5170
        %v5250 = vadd.f32 %v4000, %v5173
        %v5251 = vadd.f32 %v4001, %v5176
        %v5252 = vadd.f32 %v4002, %v5179
        %v5253 = vadd.f32 %v4003, %v5182
        %v5254 = vadd.f32 %v4004, %v5185
        %v5255 = vadd.f32 %v4005, %v5188
        %v5256 = vadd.f32 %v4006, %v5191
        %v5257 = vadd.f32 %v4007, %v5194
        %v5258 = vadd.f32 %v4008, %v5197
        %v5259 = vadd.f32 %v4009, %v5200
        %v5260 = vadd.f32 %v4010, %v5203
        %v5261 = vadd.f32 %v4011, %v5206
        %v5262 = vadd.f32 %v4012, %v5209
        %v5263 = vadd.f32 %v4013, %v5212
        %v5264 = vadd.f32 %v4014, %v5215
        %v5265 = vadd.f32 %v4015, %v5218
        %v5266 = vadd.f32 %v4016, %v5221
        %v5267 = vadd.f32 %v4017, %v5224
        %v5268 = vadd.f32 %v4018, %v5227
        %v5269 = vadd.f32 %v4019, %v5230
        %v5270 = vadd.f32 %v4020, %v5233
        %v5271 = vadd.f32 %v4021, %v5236
        %v5272 = vadd.f32 %v4022, %v5239
        %5273 = vst [vmem:[%s180] sm:$0xff] %v5241
        %5274 = vst [vmem:[%s180 + $0x8] sm:$0xff] %v5242
        %5275 = vst [vmem:[%s180 + $0x10] sm:$0xff] %v5243
        %5276 = vst [vmem:[%s180 + $0x18] sm:$0xff] %v5244
        %5277 = vst [vmem:[%s180 + $0x20] sm:$0xff] %v5245
        %5278 = vst [vmem:[%s180 + $0x28] sm:$0xff] %v5246
        %5279 = vst [vmem:[%s180 + $0x30] sm:$0xff] %v5247
        %5280 = vst [vmem:[%s180 + $0x38] sm:$0xff] %v5248
        %5281 = vst [vmem:[%s180 + $0x40] sm:$0xff] %v5249
        %5282 = vst [vmem:[%s180 + $0x48] sm:$0xff] %v5250
        %5283 = vst [vmem:[%s180 + $0x50] sm:$0xff] %v5251
        %5284 = vst [vmem:[%s180 + $0x58] sm:$0xff] %v5252
        %5285 = vst [vmem:[%s180 + $0x60] sm:$0xff] %v5253
        %5286 = vst [vmem:[%s180 + $0x68] sm:$0xff] %v5254
        %5287 = vst [vmem:[%s180 + $0x70] sm:$0xff] %v5255
        %5288 = vst [vmem:[%s180 + $0x78] sm:$0xff] %v5256
        %5289 = vst [vmem:[%s180 + $0x80] sm:$0xff] %v5257
        %5290 = vst [vmem:[%s180 + $0x88] sm:$0xff] %v5258
        %5291 = vst [vmem:[%s180 + $0x90] sm:$0xff] %v5259
        %5292 = vst [vmem:[%s180 + $0x98] sm:$0xff] %v5260
        %5293 = vst [vmem:[%s180 + $0xa0] sm:$0xff] %v5261
        %5294 = vst [vmem:[%s180 + $0xa8] sm:$0xff] %v5262
        %5295 = vst [vmem:[%s180 + $0xb0] sm:$0xff] %v5263
        %5296 = vst [vmem:[%s180 + $0xb8] sm:$0xff] %v5264
        %5297 = vst [vmem:[%s180 + $0xc0] sm:$0xff] %v5265
        %5298 = vst [vmem:[%s180 + $0xc8] sm:$0xff] %v5266
        %5299 = vst [vmem:[%s180 + $0xd0] sm:$0xff] %v5267
        %5300 = vst [vmem:[%s180 + $0xd8] sm:$0xff] %v5268
        %5301 = vst [vmem:[%s180 + $0xe0] sm:$0xff] %v5269
        %5302 = vst [vmem:[%s180 + $0xe8] sm:$0xff] %v5270
        %5303 = vst [vmem:[%s180 + $0xf0] sm:$0xff] %v5271
        %5304 = vst [vmem:[%s180 + $0xf8] sm:$0xff] %v5272
        %s5305 = sand.u32 %s75, 1
        %s5306 = scalar_lea.sflag [#allocation5], %s5305
        %s5307 = sand.u32 %s75, 1
        %s5308 = smul.addr %s5307, 256
        %s5309 = scalar_lea.vmem [#allocation8], %s5308
        // Predicated region
        $region37: #{tpu_custom_call.1} parent=27 // pred_check
          %p5310 = pneg %p85
        $region38: #{tpu_custom_call.1} parent=27 // pred_check_branch
          %5312 = sbr.rel (%p5310) target = $region40
        $region39: #{tpu_custom_call.1} parent=27 // pred_region
          %5314 = vsyncadd %s5306, 0
          %s5315 = smul.addr %s20, 32
          %s5316 = smul.addr %s5315, 8
          %s5317 = scalar_lea.hbm %s2, %s5316
          %s5318 = sshll.u32 %s5309, 4
          %s5319 = int_to_ptr.vmem [resolvable:$true] %s5318
          %s5320 = sshll.u32 %s5317, 4
          %s5321 = int_to_ptr.hbm [resolvable:$true] %s5320
          %5326 = dma.vmem_to_hbm [thread:$0]  %s5319, 4096, %s5321, %s5306, 128, 128, 8
        $region40: #{tpu_custom_call.1} parent=27 // pred_fallthru
          _
      $region28: #{tpu_custom_call.1} parent=5 // pred_fallthru
        _
      %p5327 = scmp.le.s32.totalorder 2, %s15
      // Predicated region
      $region41: #{tpu_custom_call.1} parent=5 // pred_check
        %p5328 = pneg %p5327
      $region42: #{tpu_custom_call.1} parent=5 // pred_check_branch
        %5330 = sbr.rel (%p5328) target = $region44
      $region43: #{tpu_custom_call.1} parent=5 // pred_region
        %s5331 = ssub.s32 %s15, 2
        // Predicated region
        $region45: #{tpu_custom_call.1} parent=43 // pred_check
          %p5332 = pneg %p91
        $region46: #{tpu_custom_call.1} parent=43 // pred_check_branch
          %5334 = sbr.rel (%p5332) target = $region48
        $region47: #{tpu_custom_call.1} parent=43 // pred_region
          %s5335 = sand.u32 %s76, 1
          %s5336 = scalar_lea.sflag [#allocation5], %s5335
          %s5337 = sand.u32 %s76, 1
          %s5338 = smul.addr %s5337, 256
          %s5339 = scalar_lea.vmem [#allocation8], %s5338
          %5341 = dma.done %s5336, 4096
        $region48: #{tpu_custom_call.1} parent=43 // pred_fallthru
          _
      $region44: #{tpu_custom_call.1} parent=5 // pred_fallthru
        _
    $region6: #{tpu_custom_call.1} parent=1 // loop_footer
      %s19 = sadd.s32 1, %s15
    $region7: #{tpu_custom_call.1} parent=1 // loop_footer_branch
      %14 = sbr.rel target = $region3
    $region8: #{tpu_custom_call.1} parent=1 // loop_exit
      _
    %5342 = vsyncpa [#allocation4], 1
    %s5343 = scalar_lea.sflag [#allocation4], 1
    %5344 = vsyncpa %s5343, 1
    %5345 = vsyncpa [#allocation7], 1
    %5346 = vsyncpa [#allocation5], 1
    %s5347 = scalar_lea.sflag [#allocation5], 1
    %5348 = vsyncpa %s5347, 1

</llo_original>
